<compile_context>
chip_gen: v7x
topology: tpu7x:2x2x1
jax: 0.10.0
libtpu: 0.0.40
codegen_flags: <defaults>
</compile_context>

<pallas_src>
from functools import partial

import jax
import jax.numpy as jnp
from jax.experimental import pallas as pl
from jax.experimental.pallas import tpu as pltpu

NEG_SLOPE = 0.2

_TAPS2 = tuple((i, j) for i in range(2) for j in range(2))   # 2x2 (blocked 4x4/s2)
_TAPS3 = tuple((i, j) for i in range(3) for j in range(3))   # 3x3 stride-1


# ---------------------------------------------------------------------------
# In-kernel helpers (traced inside the Pallas body).
# ---------------------------------------------------------------------------
def _lrelu(x):
    return jnp.where(x >= 0, x, NEG_SLOPE * x)


def _accum_conv(x, w_ref, bias, taps, ho, wo):
    """sum_t x[tap_t slice] @ w[t] + bias, accumulated in f32.

    x:    (H', W', Ck) VMEM-resident value (bf16)
    w_ref:(T, Ck, Cout) VMEM ref (bf16)
    bias: (1, Cout) f32 value
    """
    cdst = w_ref.shape[-1]
    acc = jnp.zeros((ho * wo, cdst), jnp.float32) + bias
    for t, (di, dj) in enumerate(taps):
        xt = x[di:di + ho, dj:dj + wo, :].reshape(ho * wo, -1)
        acc = acc + jnp.dot(xt, w_ref[t], preferred_element_type=jnp.float32)
    return acc


def _make_stage_kernel(ho, wo, ch, res):
    """One downsample stage: blocked 4x4/s2 conv (+ 3x3 residual conv), fused
    bias + LeakyReLU.  Whole stage runs out of VMEM for one batch image."""
    if res:
        def kernel(xs_ref, w1_ref, b1_ref, w2_ref, b2_ref, o_ref, hpad_ref):
            xs = xs_ref[0]                                    # (ho+1, wo+1, 4*cin)
            h = _lrelu(_accum_conv(xs, w1_ref, b1_ref[...], _TAPS2, ho, wo))
            # Zero-padded intermediate for the 3x3 conv lives in VMEM scratch.
            hpad_ref[...] = jnp.zeros_like(hpad_ref)
            hpad_ref[1:1 + ho, 1:1 + wo, :] = (
                h.reshape(ho, wo, ch).astype(hpad_ref.dtype))
            hp = hpad_ref[...]                                # (ho+2, wo+2, ch)
            acc = _accum_conv(hp, w2_ref, b2_ref[...], _TAPS3, ho, wo) + h
            o_ref[...] = _lrelu(acc).reshape(1, ho, wo, ch).astype(o_ref.dtype)
        return kernel

    def kernel(xs_ref, w1_ref, b1_ref, o_ref):
        xs = xs_ref[0]
        h = _lrelu(_accum_conv(xs, w1_ref, b1_ref[...], _TAPS2, ho, wo))
        o_ref[...] = h.reshape(1, ho, wo, ch).astype(o_ref.dtype)
    return kernel


# ---------------------------------------------------------------------------
# pallas_call wrapper for one stage.
# ---------------------------------------------------------------------------
def _stage_pallas(xs2d, w1, b1, w2=None, b2=None, out_dtype=jnp.float32):
    """xs2d: (N, Ho+1, Wo+1, 4*Cin) bf16 space-to-depth'd padded input.
    w1: (4, 4*Cin, Ch) bf16; optional residual conv w2: (9, Ch, Ch) bf16."""
    n, hb, wb, kc = xs2d.shape
    ho, wo = hb - 1, wb - 1
    ch = int(w1.shape[-1])
    res = w2 is not None
    kernel = _make_stage_kernel(ho, wo, ch, res)

    in_specs = [
        pl.BlockSpec((1, hb, wb, kc), lambda i: (i, 0, 0, 0)),
        pl.BlockSpec(tuple(w1.shape), lambda i: (0, 0, 0)),   # resident weights
        pl.BlockSpec((1, ch), lambda i: (0, 0)),
    ]
    args = [xs2d, w1, b1.reshape(1, ch).astype(jnp.float32)]
    scratch = []

    m = n * ho * wo
    flops = 2 * m * (len(_TAPS2) * kc) * ch
    bytes_accessed = (xs2d.size * 2 + int(w1.size) * 2 + ch * 4
                      + m * ch * jnp.dtype(out_dtype).itemsize)
    if res:
        in_specs += [
            pl.BlockSpec(tuple(w2.shape), lambda i: (0, 0, 0)),
            pl.BlockSpec((1, ch), lambda i: (0, 0)),
        ]
        args += [w2, b2.reshape(1, ch).astype(jnp.float32)]
        scratch = [pltpu.VMEM((ho + 2, wo + 2, ch), jnp.bfloat16)]
        flops += 2 * m * (9 * ch) * ch
        bytes_accessed += int(w2.size) * 2 + ch * 4

    return pl.pallas_call(
        kernel,
        out_shape=jax.ShapeDtypeStruct((n, ho, wo, ch), out_dtype),
        grid=(n,),
        in_specs=in_specs,
        out_specs=pl.BlockSpec((1, ho, wo, ch), lambda i: (i, 0, 0, 0)),
        scratch_shapes=scratch,
        compiler_params=pltpu.CompilerParams(
            dimension_semantics=("parallel",),
            vmem_limit_bytes=32 * 1024 * 1024,
        ),
        cost_estimate=pl.CostEstimate(
            flops=int(flops), transcendentals=0,
            bytes_accessed=int(bytes_accessed)),
    )(*args)


# ---------------------------------------------------------------------------
# Plain-JAX glue: pad + space-to-depth, weight normalization / repacking.
# ---------------------------------------------------------------------------
def _pad_space_to_depth(x):
    """(N, H, W, C) -> (N, (H+2)//2, (W+2)//2, 4*C), pad=1 then 2x2 blocks.
    Depth order is (row-parity, col-parity, channel) to match _prep_w_down."""
    n, h, w, c = x.shape
    assert h % 2 == 0 and w % 2 == 0, "spatial dims must be even"
    xp = jnp.pad(x, ((0, 0), (1, 1), (1, 1), (0, 0)))
    hb, wb = (h + 2) // 2, (w + 2) // 2
    xs = xp.reshape(n, hb, 2, wb, 2, c)
    xs = jnp.transpose(xs, (0, 1, 3, 2, 4, 5))
    return xs.reshape(n, hb, wb, 4 * c)


def _wn_weight(weight, g):
    # NOTE: matches the PyTorch Conv2dWN exactly (single GLOBAL weight norm).
    wnorm = jnp.sqrt(jnp.sum(weight.astype(jnp.float32) ** 2))
    return weight * (g[:, None, None, None] / wnorm)


def _prep_w_down(weight, g):
    """(Cout, Cin, 4, 4) 4x4/s2 conv -> (4 taps, 4*Cin, Cout) bf16 matrices."""
    cout, cin, _, _ = weight.shape
    w = _wn_weight(weight, g)
    w = jnp.transpose(w, (2, 3, 1, 0))            # (ki, kj, cin, cout)
    w = w.reshape(2, 2, 2, 2, cin, cout)          # (bi, pi, bj, pj, cin, cout)
    w = jnp.transpose(w, (0, 2, 1, 3, 4, 5))      # (bi, bj, pi, pj, cin, cout)
    return w.reshape(4, 4 * cin, cout).astype(jnp.bfloat16)


def _prep_w_res(weight, g):
    """(Cout, Cin, 3, 3) 3x3/s1 conv -> (9 taps, Cin, Cout) bf16 matrices."""
    cout, cin, kh, kw = weight.shape
    w = _wn_weight(weight, g)
    w = jnp.transpose(w, (2, 3, 1, 0)).reshape(kh * kw, cin, cout)
    return w.astype(jnp.bfloat16)


# ---------------------------------------------------------------------------
# Parameter init + forward pass.
# ---------------------------------------------------------------------------
def init_conv_params(key, cout, cin, k, scale=0.05):
    k_w, k_b = jax.random.split(key)
    return {
        "weight": scale * jax.random.normal(k_w, (cout, cin, k, k), jnp.float32),
        "g": jnp.ones((cout,), jnp.float32),
        "bias": scale * jax.random.normal(k_b, (cout,), jnp.float32),
    }


def init_conv_downsample(key, cin, chidden, cout, res=False):
    ks = jax.random.split(key, 4)
    params = {
        "conv1": init_conv_params(ks[0], chidden, cin, 4),
        "conv2": init_conv_params(ks[1], cout, chidden, 4),
    }
    if res:
        params["res1"] = init_conv_params(ks[2], chidden, chidden, 3)
        params["res2"] = init_conv_params(ks[3], cout, cout, 3)
    return params


@partial(jax.jit, static_argnames=("res",))
def conv_downsample_forward(params, x_nhwc, res=False):
    c1, c2 = params["conv1"], params["conv2"]
    xs1 = _pad_space_to_depth(x_nhwc).astype(jnp.bfloat16)
    if res:
        r1 = params["res1"]
        h = _stage_pallas(xs1, _prep_w_down(c1["weight"], c1["g"]), c1["bias"],
                          _prep_w_res(r1["weight"], r1["g"]), r1["bias"],
                          out_dtype=jnp.bfloat16)
    else:
        h = _stage_pallas(xs1, _prep_w_down(c1["weight"], c1["g"]), c1["bias"],
                          out_dtype=jnp.bfloat16)
    xs2 = _pad_space_to_depth(h)                  # stays bf16
    if res:
        r2 = params["res2"]
        out = _stage_pallas(xs2, _prep_w_down(c2["weight"], c2["g"]), c2["bias"],
                            _prep_w_res(r2["weight"], r2["g"]), r2["bias"],
                            out_dtype=jnp.float32)
    else:
        out = _stage_pallas(xs2, _prep_w_down(c2["weight"], c2["g"]), c2["bias"],
                            out_dtype=jnp.float32)
    return out


# ---------------------------------------------------------------------------
# Pure-JAX reference (lax.conv, f32) for a correctness check.
# ---------------------------------------------------------------------------
def _conv2d_wn_ref(x, p, stride, pad):
    w, g, b = p["weight"], p["g"], p["bias"]
    wnorm = jnp.sqrt(jnp.sum(w ** 2))
    w_hwio = jnp.transpose(w * (g[:, None, None, None] / wnorm), (2, 3, 1, 0))
    y = jax.lax.conv_general_dilated(
        x, w_hwio, (stride, stride), ((pad, pad), (pad, pad)),
        dimension_numbers=("NHWC", "HWIO", "NHWC"))
    return y + b[None, None, None, :]


def conv_downsample_ref(params, x, res=False):
    h = _lrelu(_conv2d_wn_ref(x, params["conv1"], 2, 1))
    if res:
        h = _lrelu(_conv2d_wn_ref(h, params["res1"], 1, 1) + h)
    h = _lrelu(_conv2d_wn_ref(h, params["conv2"], 2, 1))
    if res:
        h = _lrelu(_conv2d_wn_ref(h, params["res2"], 1, 1) + h)
    return h


if __name__ == "__main__":
    key = jax.random.PRNGKey(0)
    kx, kp = jax.random.split(key)

    N, Cin, H, W = 2, 4, 16, 16
    chidden, cout = 8, 8

    x_nchw = jax.random.normal(kx, (N, Cin, H, W), jnp.float32)  # PyTorch NCHW
    x_nhwc = jnp.transpose(x_nchw, (0, 2, 3, 1))                 # kernel layout

    params = init_conv_downsample(kp, Cin, chidden, cout, res=True)

    # res=True path (conv + residual-conv fused stages)
    out_res = jax.block_until_ready(
        conv_downsample_forward(params, x_nhwc, res=True))
    assert out_res.shape == (N, H // 4, W // 4, cout), out_res.shape
    ref_res = conv_downsample_ref(params, x_nhwc, res=True)
    if not bool(jnp.allclose(out_res, ref_res, rtol=5e-2, atol=5e-2)):
        raise AssertionError("Pallas ConvDownsample(res=True) mismatch")

    # res=False path (plain downsample stages)
    out_plain = jax.block_until_ready(
        conv_downsample_forward(params, x_nhwc, res=False))
    ref_plain = conv_downsample_ref(params, x_nhwc, res=False)
    if not bool(jnp.allclose(out_plain, ref_plain, rtol=5e-2, atol=5e-2)):
        raise AssertionError("Pallas ConvDownsample(res=False) mismatch")

    print("KERNEL_OK")
</pallas_src>

<mosaic_0001>
module attributes {stable_mosaic.version = 11 : i64} {
  func.func @kernel(%arg0: i32, %arg1: memref<1x9x9x16xbf16, #tpu.memory_space<vmem>>, %arg2: memref<4x16x8xbf16, #tpu.memory_space<vmem>>, %arg3: memref<1x8xf32, #tpu.memory_space<vmem>>, %arg4: memref<9x8x8xbf16, #tpu.memory_space<vmem>>, %arg5: memref<1x8xf32, #tpu.memory_space<vmem>>, %arg6: memref<1x8x8x8xbf16, #tpu.memory_space<vmem>>, %arg7: memref<10x10x8xbf16, #tpu.memory_space<vmem>>) attributes {dimension_semantics = [#tpu.dimension_semantics<parallel>], iteration_bounds = array<i64: 2>, scalar_prefetch = 0 : i64, scratch_operands = 1 : i64, tpu.core_type = #tpu.core_type<tc>, window_params = [{transform_indices = @transform_0, window_bounds = array<i64: 1, 9, 9, 16>}, {pipeline_mode = #tpu.pipeline_mode<synchronous>, transform_indices = @transform_1, window_bounds = array<i64: 4, 16, 8>}, {pipeline_mode = #tpu.pipeline_mode<synchronous>, transform_indices = @transform_2, window_bounds = array<i64: 1, 8>}, {pipeline_mode = #tpu.pipeline_mode<synchronous>, transform_indices = @transform_3, window_bounds = array<i64: 9, 8, 8>}, {pipeline_mode = #tpu.pipeline_mode<synchronous>, transform_indices = @transform_4, window_bounds = array<i64: 1, 8>}, {transform_indices = @transform_5, window_bounds = array<i64: 1, 8, 8, 8>}]} {
    %c0 = arith.constant 0 : index
    %c0_0 = arith.constant 0 : index
    %c0_1 = arith.constant 0 : index
    %c0_2 = arith.constant 0 : index
    %0 = vector.load %arg1[%c0, %c0_0, %c0_1, %c0_2] : memref<1x9x9x16xbf16, #tpu.memory_space<vmem>>, vector<1x9x9x16xbf16>
    %1 = vector.shape_cast %0 : vector<1x9x9x16xbf16> to vector<9x9x16xbf16>
    %c0_3 = arith.constant 0 : index
    %c0_4 = arith.constant 0 : index
    %2 = vector.load %arg3[%c0_3, %c0_4] : memref<1x8xf32, #tpu.memory_space<vmem>>, vector<1x8xf32>
    %cst = arith.constant 0.000000e+00 : f32
    %3 = vector.broadcast %cst : f32 to vector<64x8xf32>
    %4 = vector.broadcast %2 : vector<1x8xf32> to vector<64x8xf32>
    %5 = arith.addf %3, %4 : vector<64x8xf32>
    %6 = vector.extract_strided_slice %1 {offsets = [0, 0, 0], sizes = [8, 8, 16], strides = [1, 1, 1]} : vector<9x9x16xbf16> to vector<8x8x16xbf16>
    %7 = vector.shape_cast %6 : vector<8x8x16xbf16> to vector<64x16xbf16>
    %c0_5 = arith.constant 0 : index
    %c0_6 = arith.constant 0 : index
    %c0_7 = arith.constant 0 : index
    %8 = vector.load %arg2[%c0_5, %c0_6, %c0_7] : memref<4x16x8xbf16, #tpu.memory_space<vmem>>, vector<1x16x8xbf16>
    %9 = vector.shape_cast %8 : vector<1x16x8xbf16> to vector<16x8xbf16>
    %cst_8 = arith.constant dense<0.000000e+00> : vector<64x8xf32>
    %10 = tpu.matmul %7, %9, %cst_8 {dimension_numbers = #tpu.dot_dimension_numbers<[1], [0], [0], [1], [0, 0, 1, 1], [], []>} : vector<64x16xbf16>, vector<16x8xbf16>, vector<64x8xf32> -> vector<64x8xf32>
    %11 = arith.addf %5, %10 : vector<64x8xf32>
    %12 = vector.extract_strided_slice %1 {offsets = [0, 1, 0], sizes = [8, 8, 16], strides = [1, 1, 1]} : vector<9x9x16xbf16> to vector<8x8x16xbf16>
    %13 = vector.shape_cast %12 : vector<8x8x16xbf16> to vector<64x16xbf16>
    %c1 = arith.constant 1 : index
    %c0_9 = arith.constant 0 : index
    %c0_10 = arith.constant 0 : index
    %14 = vector.load %arg2[%c1, %c0_9, %c0_10] : memref<4x16x8xbf16, #tpu.memory_space<vmem>>, vector<1x16x8xbf16>
    %15 = vector.shape_cast %14 : vector<1x16x8xbf16> to vector<16x8xbf16>
    %cst_11 = arith.constant dense<0.000000e+00> : vector<64x8xf32>
    %16 = tpu.matmul %13, %15, %cst_11 {dimension_numbers = #tpu.dot_dimension_numbers<[1], [0], [0], [1], [0, 0, 1, 1], [], []>} : vector<64x16xbf16>, vector<16x8xbf16>, vector<64x8xf32> -> vector<64x8xf32>
    %17 = arith.addf %11, %16 : vector<64x8xf32>
    %18 = vector.extract_strided_slice %1 {offsets = [1, 0, 0], sizes = [8, 8, 16], strides = [1, 1, 1]} : vector<9x9x16xbf16> to vector<8x8x16xbf16>
    %19 = vector.shape_cast %18 : vector<8x8x16xbf16> to vector<64x16xbf16>
    %c2 = arith.constant 2 : index
    %c0_12 = arith.constant 0 : index
    %c0_13 = arith.constant 0 : index
    %20 = vector.load %arg2[%c2, %c0_12, %c0_13] : memref<4x16x8xbf16, #tpu.memory_space<vmem>>, vector<1x16x8xbf16>
    %21 = vector.shape_cast %20 : vector<1x16x8xbf16> to vector<16x8xbf16>
    %cst_14 = arith.constant dense<0.000000e+00> : vector<64x8xf32>
    %22 = tpu.matmul %19, %21, %cst_14 {dimension_numbers = #tpu.dot_dimension_numbers<[1], [0], [0], [1], [0, 0, 1, 1], [], []>} : vector<64x16xbf16>, vector<16x8xbf16>, vector<64x8xf32> -> vector<64x8xf32>
    %23 = arith.addf %17, %22 : vector<64x8xf32>
    %24 = vector.extract_strided_slice %1 {offsets = [1, 1, 0], sizes = [8, 8, 16], strides = [1, 1, 1]} : vector<9x9x16xbf16> to vector<8x8x16xbf16>
    %25 = vector.shape_cast %24 : vector<8x8x16xbf16> to vector<64x16xbf16>
    %c3 = arith.constant 3 : index
    %c0_15 = arith.constant 0 : index
    %c0_16 = arith.constant 0 : index
    %26 = vector.load %arg2[%c3, %c0_15, %c0_16] : memref<4x16x8xbf16, #tpu.memory_space<vmem>>, vector<1x16x8xbf16>
    %27 = vector.shape_cast %26 : vector<1x16x8xbf16> to vector<16x8xbf16>
    %cst_17 = arith.constant dense<0.000000e+00> : vector<64x8xf32>
    %28 = tpu.matmul %25, %27, %cst_17 {dimension_numbers = #tpu.dot_dimension_numbers<[1], [0], [0], [1], [0, 0, 1, 1], [], []>} : vector<64x16xbf16>, vector<16x8xbf16>, vector<64x8xf32> -> vector<64x8xf32>
    %29 = arith.addf %23, %28 : vector<64x8xf32>
    %cst_18 = arith.constant 0.000000e+00 : f32
    %30 = vector.broadcast %cst_18 : f32 to vector<64x8xf32>
    %31 = arith.cmpf oge, %29, %30 : vector<64x8xf32>
    %cst_19 = arith.constant 2.000000e-01 : f32
    %32 = vector.broadcast %cst_19 : f32 to vector<64x8xf32>
    %33 = arith.mulf %32, %29 : vector<64x8xf32>
    %34 = arith.select %31, %29, %33 : vector<64x8xi1>, vector<64x8xf32>
    %cst_20 = arith.constant 0.000000e+00 : bf16
    %35 = vector.broadcast %cst_20 : bf16 to vector<10x10x8xbf16>
    %c0_21 = arith.constant 0 : index
    %c0_22 = arith.constant 0 : index
    %c0_23 = arith.constant 0 : index
    %36 = vector.load %arg7[%c0_21, %c0_22, %c0_23] : memref<10x10x8xbf16, #tpu.memory_space<vmem>>, vector<10x10x8xbf16>
    tpu.vector_store %arg7[%c0_21, %c0_22, %c0_23], %35 {strides = array<i32>} : memref<10x10x8xbf16, #tpu.memory_space<vmem>>, vector<10x10x8xbf16>,
    %37 = vector.shape_cast %34 : vector<64x8xf32> to vector<8x8x8xf32>
    %38 = arith.truncf %37 : vector<8x8x8xf32> to vector<8x8x8xbf16>
    %c1_24 = arith.constant 1 : index
    %c1_25 = arith.constant 1 : index
    %c0_26 = arith.constant 0 : index
    %39 = vector.load %arg7[%c1_24, %c1_25, %c0_26] : memref<10x10x8xbf16, #tpu.memory_space<vmem>>, vector<8x8x8xbf16>
    tpu.vector_store %arg7[%c1_24, %c1_25, %c0_26], %38 {strides = array<i32>} : memref<10x10x8xbf16, #tpu.memory_space<vmem>>, vector<8x8x8xbf16>,
    %c0_27 = arith.constant 0 : index
    %c0_28 = arith.constant 0 : index
    %c0_29 = arith.constant 0 : index
    %40 = vector.load %arg7[%c0_27, %c0_28, %c0_29] : memref<10x10x8xbf16, #tpu.memory_space<vmem>>, vector<10x10x8xbf16>
    %c0_30 = arith.constant 0 : index
    %c0_31 = arith.constant 0 : index
    %41 = vector.load %arg5[%c0_30, %c0_31] : memref<1x8xf32, #tpu.memory_space<vmem>>, vector<1x8xf32>
    %cst_32 = arith.constant 0.000000e+00 : f32
    %42 = vector.broadcast %cst_32 : f32 to vector<64x8xf32>
    %43 = vector.broadcast %41 : vector<1x8xf32> to vector<64x8xf32>
    %44 = arith.addf %42, %43 : vector<64x8xf32>
    %45 = vector.extract_strided_slice %40 {offsets = [0, 0, 0], sizes = [8, 8, 8], strides = [1, 1, 1]} : vector<10x10x8xbf16> to vector<8x8x8xbf16>
    %46 = vector.shape_cast %45 : vector<8x8x8xbf16> to vector<64x8xbf16>
    %c0_33 = arith.constant 0 : index
    %c0_34 = arith.constant 0 : index
    %c0_35 = arith.constant 0 : index
    %47 = vector.load %arg4[%c0_33, %c0_34, %c0_35] : memref<9x8x8xbf16, #tpu.memory_space<vmem>>, vector<1x8x8xbf16>
    %48 = vector.shape_cast %47 : vector<1x8x8xbf16> to vector<8x8xbf16>
    %cst_36 = arith.constant dense<0.000000e+00> : vector<64x8xf32>
    %49 = tpu.matmul %46, %48, %cst_36 {dimension_numbers = #tpu.dot_dimension_numbers<[1], [0], [0], [1], [0, 0, 1, 1], [], []>} : vector<64x8xbf16>, vector<8x8xbf16>, vector<64x8xf32> -> vector<64x8xf32>
    %50 = arith.addf %44, %49 : vector<64x8xf32>
    %51 = vector.extract_strided_slice %40 {offsets = [0, 1, 0], sizes = [8, 8, 8], strides = [1, 1, 1]} : vector<10x10x8xbf16> to vector<8x8x8xbf16>
    %52 = vector.shape_cast %51 : vector<8x8x8xbf16> to vector<64x8xbf16>
    %c1_37 = arith.constant 1 : index
    %c0_38 = arith.constant 0 : index
    %c0_39 = arith.constant 0 : index
    %53 = vector.load %arg4[%c1_37, %c0_38, %c0_39] : memref<9x8x8xbf16, #tpu.memory_space<vmem>>, vector<1x8x8xbf16>
    %54 = vector.shape_cast %53 : vector<1x8x8xbf16> to vector<8x8xbf16>
    %cst_40 = arith.constant dense<0.000000e+00> : vector<64x8xf32>
    %55 = tpu.matmul %52, %54, %cst_40 {dimension_numbers = #tpu.dot_dimension_numbers<[1], [0], [0], [1], [0, 0, 1, 1], [], []>} : vector<64x8xbf16>, vector<8x8xbf16>, vector<64x8xf32> -> vector<64x8xf32>
    %56 = arith.addf %50, %55 : vector<64x8xf32>
    %57 = vector.extract_strided_slice %40 {offsets = [0, 2, 0], sizes = [8, 8, 8], strides = [1, 1, 1]} : vector<10x10x8xbf16> to vector<8x8x8xbf16>
    %58 = vector.shape_cast %57 : vector<8x8x8xbf16> to vector<64x8xbf16>
    %c2_41 = arith.constant 2 : index
    %c0_42 = arith.constant 0 : index
    %c0_43 = arith.constant 0 : index
    %59 = vector.load %arg4[%c2_41, %c0_42, %c0_43] : memref<9x8x8xbf16, #tpu.memory_space<vmem>>, vector<1x8x8xbf16>
    %60 = vector.shape_cast %59 : vector<1x8x8xbf16> to vector<8x8xbf16>
    %cst_44 = arith.constant dense<0.000000e+00> : vector<64x8xf32>
    %61 = tpu.matmul %58, %60, %cst_44 {dimension_numbers = #tpu.dot_dimension_numbers<[1], [0], [0], [1], [0, 0, 1, 1], [], []>} : vector<64x8xbf16>, vector<8x8xbf16>, vector<64x8xf32> -> vector<64x8xf32>
    %62 = arith.addf %56, %61 : vector<64x8xf32>
    %63 = vector.extract_strided_slice %40 {offsets = [1, 0, 0], sizes = [8, 8, 8], strides = [1, 1, 1]} : vector<10x10x8xbf16> to vector<8x8x8xbf16>
    %64 = vector.shape_cast %63 : vector<8x8x8xbf16> to vector<64x8xbf16>
    %c3_45 = arith.constant 3 : index
    %c0_46 = arith.constant 0 : index
    %c0_47 = arith.constant 0 : index
    %65 = vector.load %arg4[%c3_45, %c0_46, %c0_47] : memref<9x8x8xbf16, #tpu.memory_space<vmem>>, vector<1x8x8xbf16>
    %66 = vector.shape_cast %65 : vector<1x8x8xbf16> to vector<8x8xbf16>
    %cst_48 = arith.constant dense<0.000000e+00> : vector<64x8xf32>
    %67 = tpu.matmul %64, %66, %cst_48 {dimension_numbers = #tpu.dot_dimension_numbers<[1], [0], [0], [1], [0, 0, 1, 1], [], []>} : vector<64x8xbf16>, vector<8x8xbf16>, vector<64x8xf32> -> vector<64x8xf32>
    %68 = arith.addf %62, %67 : vector<64x8xf32>
    %69 = vector.extract_strided_slice %40 {offsets = [1, 1, 0], sizes = [8, 8, 8], strides = [1, 1, 1]} : vector<10x10x8xbf16> to vector<8x8x8xbf16>
    %70 = vector.shape_cast %69 : vector<8x8x8xbf16> to vector<64x8xbf16>
    %c4 = arith.constant 4 : index
    %c0_49 = arith.constant 0 : index
    %c0_50 = arith.constant 0 : index
    %71 = vector.load %arg4[%c4, %c0_49, %c0_50] : memref<9x8x8xbf16, #tpu.memory_space<vmem>>, vector<1x8x8xbf16>
    %72 = vector.shape_cast %71 : vector<1x8x8xbf16> to vector<8x8xbf16>
    %cst_51 = arith.constant dense<0.000000e+00> : vector<64x8xf32>
    %73 = tpu.matmul %70, %72, %cst_51 {dimension_numbers = #tpu.dot_dimension_numbers<[1], [0], [0], [1], [0, 0, 1, 1], [], []>} : vector<64x8xbf16>, vector<8x8xbf16>, vector<64x8xf32> -> vector<64x8xf32>
    %74 = arith.addf %68, %73 : vector<64x8xf32>
    %75 = vector.extract_strided_slice %40 {offsets = [1, 2, 0], sizes = [8, 8, 8], strides = [1, 1, 1]} : vector<10x10x8xbf16> to vector<8x8x8xbf16>
    %76 = vector.shape_cast %75 : vector<8x8x8xbf16> to vector<64x8xbf16>
    %c5 = arith.constant 5 : index
    %c0_52 = arith.constant 0 : index
    %c0_53 = arith.constant 0 : index
    %77 = vector.load %arg4[%c5, %c0_52, %c0_53] : memref<9x8x8xbf16, #tpu.memory_space<vmem>>, vector<1x8x8xbf16>
    %78 = vector.shape_cast %77 : vector<1x8x8xbf16> to vector<8x8xbf16>
    %cst_54 = arith.constant dense<0.000000e+00> : vector<64x8xf32>
    %79 = tpu.matmul %76, %78, %cst_54 {dimension_numbers = #tpu.dot_dimension_numbers<[1], [0], [0], [1], [0, 0, 1, 1], [], []>} : vector<64x8xbf16>, vector<8x8xbf16>, vector<64x8xf32> -> vector<64x8xf32>
    %80 = arith.addf %74, %79 : vector<64x8xf32>
    %81 = vector.extract_strided_slice %40 {offsets = [2, 0, 0], sizes = [8, 8, 8], strides = [1, 1, 1]} : vector<10x10x8xbf16> to vector<8x8x8xbf16>
    %82 = vector.shape_cast %81 : vector<8x8x8xbf16> to vector<64x8xbf16>
    %c6 = arith.constant 6 : index
    %c0_55 = arith.constant 0 : index
    %c0_56 = arith.constant 0 : index
    %83 = vector.load %arg4[%c6, %c0_55, %c0_56] : memref<9x8x8xbf16, #tpu.memory_space<vmem>>, vector<1x8x8xbf16>
    %84 = vector.shape_cast %83 : vector<1x8x8xbf16> to vector<8x8xbf16>
    %cst_57 = arith.constant dense<0.000000e+00> : vector<64x8xf32>
    %85 = tpu.matmul %82, %84, %cst_57 {dimension_numbers = #tpu.dot_dimension_numbers<[1], [0], [0], [1], [0, 0, 1, 1], [], []>} : vector<64x8xbf16>, vector<8x8xbf16>, vector<64x8xf32> -> vector<64x8xf32>
    %86 = arith.addf %80, %85 : vector<64x8xf32>
    %87 = vector.extract_strided_slice %40 {offsets = [2, 1, 0], sizes = [8, 8, 8], strides = [1, 1, 1]} : vector<10x10x8xbf16> to vector<8x8x8xbf16>
    %88 = vector.shape_cast %87 : vector<8x8x8xbf16> to vector<64x8xbf16>
    %c7 = arith.constant 7 : index
    %c0_58 = arith.constant 0 : index
    %c0_59 = arith.constant 0 : index
    %89 = vector.load %arg4[%c7, %c0_58, %c0_59] : memref<9x8x8xbf16, #tpu.memory_space<vmem>>, vector<1x8x8xbf16>
    %90 = vector.shape_cast %89 : vector<1x8x8xbf16> to vector<8x8xbf16>
    %cst_60 = arith.constant dense<0.000000e+00> : vector<64x8xf32>
    %91 = tpu.matmul %88, %90, %cst_60 {dimension_numbers = #tpu.dot_dimension_numbers<[1], [0], [0], [1], [0, 0, 1, 1], [], []>} : vector<64x8xbf16>, vector<8x8xbf16>, vector<64x8xf32> -> vector<64x8xf32>
    %92 = arith.addf %86, %91 : vector<64x8xf32>
    %93 = vector.extract_strided_slice %40 {offsets = [2, 2, 0], sizes = [8, 8, 8], strides = [1, 1, 1]} : vector<10x10x8xbf16> to vector<8x8x8xbf16>
    %94 = vector.shape_cast %93 : vector<8x8x8xbf16> to vector<64x8xbf16>
    %c8 = arith.constant 8 : index
    %c0_61 = arith.constant 0 : index
    %c0_62 = arith.constant 0 : index
    %95 = vector.load %arg4[%c8, %c0_61, %c0_62] : memref<9x8x8xbf16, #tpu.memory_space<vmem>>, vector<1x8x8xbf16>
    %96 = vector.shape_cast %95 : vector<1x8x8xbf16> to vector<8x8xbf16>
    %cst_63 = arith.constant dense<0.000000e+00> : vector<64x8xf32>
    %97 = tpu.matmul %94, %96, %cst_63 {dimension_numbers = #tpu.dot_dimension_numbers<[1], [0], [0], [1], [0, 0, 1, 1], [], []>} : vector<64x8xbf16>, vector<8x8xbf16>, vector<64x8xf32> -> vector<64x8xf32>
    %98 = arith.addf %92, %97 : vector<64x8xf32>
    %99 = arith.addf %98, %34 : vector<64x8xf32>
    %cst_64 = arith.constant 0.000000e+00 : f32
    %100 = vector.broadcast %cst_64 : f32 to vector<64x8xf32>
    %101 = arith.cmpf oge, %99, %100 : vector<64x8xf32>
    %cst_65 = arith.constant 2.000000e-01 : f32
    %102 = vector.broadcast %cst_65 : f32 to vector<64x8xf32>
    %103 = arith.mulf %102, %99 : vector<64x8xf32>
    %104 = arith.select %101, %99, %103 : vector<64x8xi1>, vector<64x8xf32>
    %105 = vector.shape_cast %104 : vector<64x8xf32> to vector<1x8x8x8xf32>
    %106 = arith.truncf %105 : vector<1x8x8x8xf32> to vector<1x8x8x8xbf16>
    %c0_66 = arith.constant 0 : index
    %c0_67 = arith.constant 0 : index
    %c0_68 = arith.constant 0 : index
    %c0_69 = arith.constant 0 : index
    %107 = vector.load %arg6[%c0_66, %c0_67, %c0_68, %c0_69] : memref<1x8x8x8xbf16, #tpu.memory_space<vmem>>, vector<1x8x8x8xbf16>
    tpu.vector_store %arg6[%c0_66, %c0_67, %c0_68, %c0_69], %106 {strides = array<i32>} : memref<1x8x8x8xbf16, #tpu.memory_space<vmem>>, vector<1x8x8x8xbf16>,
    return
  }
  func.func @transform_0(%arg0: i32) -> (i32, i32, i32, i32) {
    %c0_i32 = arith.constant 0 : i32
    %c0_i32_0 = arith.constant 0 : i32
    %c0_i32_1 = arith.constant 0 : i32
    %c0_i32_2 = arith.constant 0 : i32
    return %arg0, %c0_i32, %c0_i32_0, %c0_i32_1 : i32, i32, i32, i32
  }
  func.func @transform_1(%arg0: i32) -> (i32, i32, i32) {
    %c0_i32 = arith.constant 0 : i32
    %c0_i32_0 = arith.constant 0 : i32
    %c0_i32_1 = arith.constant 0 : i32
    %c0_i32_2 = arith.constant 0 : i32
    return %c0_i32, %c0_i32_0, %c0_i32_1 : i32, i32, i32
  }
  func.func @transform_2(%arg0: i32) -> (i32, i32) {
    %c0_i32 = arith.constant 0 : i32
    %c0_i32_0 = arith.constant 0 : i32
    %c0_i32_1 = arith.constant 0 : i32
    return %c0_i32, %c0_i32_0 : i32, i32
  }
  func.func @transform_3(%arg0: i32) -> (i32, i32, i32) {
    %c0_i32 = arith.constant 0 : i32
    %c0_i32_0 = arith.constant 0 : i32
    %c0_i32_1 = arith.constant 0 : i32
    %c0_i32_2 = arith.constant 0 : i32
    return %c0_i32, %c0_i32_0, %c0_i32_1 : i32, i32, i32
  }
  func.func @transform_4(%arg0: i32) -> (i32, i32) {
    %c0_i32 = arith.constant 0 : i32
    %c0_i32_0 = arith.constant 0 : i32
    %c0_i32_1 = arith.constant 0 : i32
    return %c0_i32, %c0_i32_0 : i32, i32
  }
  func.func @transform_5(%arg0: i32) -> (i32, i32, i32, i32) {
    %c0_i32 = arith.constant 0 : i32
    %c0_i32_0 = arith.constant 0 : i32
    %c0_i32_1 = arith.constant 0 : i32
    %c0_i32_2 = arith.constant 0 : i32
    return %arg0, %c0_i32, %c0_i32_0, %c0_i32_1 : i32, i32, i32, i32
  }
}

module attributes {stable_mosaic.version = 11 : i64} {
  func.func @kernel(%arg0: i32, %arg1: memref<1x5x5x32xbf16, #tpu.memory_space<vmem>>, %arg2: memref<4x32x8xbf16, #tpu.memory_space<vmem>>, %arg3: memref<1x8xf32, #tpu.memory_space<vmem>>, %arg4: memref<9x8x8xbf16, #tpu.memory_space<vmem>>, %arg5: memref<1x8xf32, #tpu.memory_space<vmem>>, %arg6: memref<1x4x4x8xf32, #tpu.memory_space<vmem>>, %arg7: memref<6x6x8xbf16, #tpu.memory_space<vmem>>) attributes {dimension_semantics = [#tpu.dimension_semantics<parallel>], iteration_bounds = array<i64: 2>, scalar_prefetch = 0 : i64, scratch_operands = 1 : i64, tpu.core_type = #tpu.core_type<tc>, window_params = [{transform_indices = @transform_0, window_bounds = array<i64: 1, 5, 5, 32>}, {pipeline_mode = #tpu.pipeline_mode<synchronous>, transform_indices = @transform_1, window_bounds = array<i64: 4, 32, 8>}, {pipeline_mode = #tpu.pipeline_mode<synchronous>, transform_indices = @transform_2, window_bounds = array<i64: 1, 8>}, {pipeline_mode = #tpu.pipeline_mode<synchronous>, transform_indices = @transform_3, window_bounds = array<i64: 9, 8, 8>}, {pipeline_mode = #tpu.pipeline_mode<synchronous>, transform_indices = @transform_4, window_bounds = array<i64: 1, 8>}, {transform_indices = @transform_5, window_bounds = array<i64: 1, 4, 4, 8>}]} {
    %c0 = arith.constant 0 : index
    %c0_0 = arith.constant 0 : index
    %c0_1 = arith.constant 0 : index
    %c0_2 = arith.constant 0 : index
    %0 = vector.load %arg1[%c0, %c0_0, %c0_1, %c0_2] : memref<1x5x5x32xbf16, #tpu.memory_space<vmem>>, vector<1x5x5x32xbf16>
    %1 = vector.shape_cast %0 : vector<1x5x5x32xbf16> to vector<5x5x32xbf16>
    %c0_3 = arith.constant 0 : index
    %c0_4 = arith.constant 0 : index
    %2 = vector.load %arg3[%c0_3, %c0_4] : memref<1x8xf32, #tpu.memory_space<vmem>>, vector<1x8xf32>
    %cst = arith.constant 0.000000e+00 : f32
    %3 = vector.broadcast %cst : f32 to vector<16x8xf32>
    %4 = vector.broadcast %2 : vector<1x8xf32> to vector<16x8xf32>
    %5 = arith.addf %3, %4 : vector<16x8xf32>
    %6 = vector.extract_strided_slice %1 {offsets = [0, 0, 0], sizes = [4, 4, 32], strides = [1, 1, 1]} : vector<5x5x32xbf16> to vector<4x4x32xbf16>
    %7 = vector.shape_cast %6 : vector<4x4x32xbf16> to vector<16x32xbf16>
    %c0_5 = arith.constant 0 : index
    %c0_6 = arith.constant 0 : index
    %c0_7 = arith.constant 0 : index
    %8 = vector.load %arg2[%c0_5, %c0_6, %c0_7] : memref<4x32x8xbf16, #tpu.memory_space<vmem>>, vector<1x32x8xbf16>
    %9 = vector.shape_cast %8 : vector<1x32x8xbf16> to vector<32x8xbf16>
    %cst_8 = arith.constant dense<0.000000e+00> : vector<16x8xf32>
    %10 = tpu.matmul %7, %9, %cst_8 {dimension_numbers = #tpu.dot_dimension_numbers<[1], [0], [0], [1], [0, 0, 1, 1], [], []>} : vector<16x32xbf16>, vector<32x8xbf16>, vector<16x8xf32> -> vector<16x8xf32>
    %11 = arith.addf %5, %10 : vector<16x8xf32>
    %12 = vector.extract_strided_slice %1 {offsets = [0, 1, 0], sizes = [4, 4, 32], strides = [1, 1, 1]} : vector<5x5x32xbf16> to vector<4x4x32xbf16>
    %13 = vector.shape_cast %12 : vector<4x4x32xbf16> to vector<16x32xbf16>
    %c1 = arith.constant 1 : index
    %c0_9 = arith.constant 0 : index
    %c0_10 = arith.constant 0 : index
    %14 = vector.load %arg2[%c1, %c0_9, %c0_10] : memref<4x32x8xbf16, #tpu.memory_space<vmem>>, vector<1x32x8xbf16>
    %15 = vector.shape_cast %14 : vector<1x32x8xbf16> to vector<32x8xbf16>
    %cst_11 = arith.constant dense<0.000000e+00> : vector<16x8xf32>
    %16 = tpu.matmul %13, %15, %cst_11 {dimension_numbers = #tpu.dot_dimension_numbers<[1], [0], [0], [1], [0, 0, 1, 1], [], []>} : vector<16x32xbf16>, vector<32x8xbf16>, vector<16x8xf32> -> vector<16x8xf32>
    %17 = arith.addf %11, %16 : vector<16x8xf32>
    %18 = vector.extract_strided_slice %1 {offsets = [1, 0, 0], sizes = [4, 4, 32], strides = [1, 1, 1]} : vector<5x5x32xbf16> to vector<4x4x32xbf16>
    %19 = vector.shape_cast %18 : vector<4x4x32xbf16> to vector<16x32xbf16>
    %c2 = arith.constant 2 : index
    %c0_12 = arith.constant 0 : index
    %c0_13 = arith.constant 0 : index
    %20 = vector.load %arg2[%c2, %c0_12, %c0_13] : memref<4x32x8xbf16, #tpu.memory_space<vmem>>, vector<1x32x8xbf16>
    %21 = vector.shape_cast %20 : vector<1x32x8xbf16> to vector<32x8xbf16>
    %cst_14 = arith.constant dense<0.000000e+00> : vector<16x8xf32>
    %22 = tpu.matmul %19, %21, %cst_14 {dimension_numbers = #tpu.dot_dimension_numbers<[1], [0], [0], [1], [0, 0, 1, 1], [], []>} : vector<16x32xbf16>, vector<32x8xbf16>, vector<16x8xf32> -> vector<16x8xf32>
    %23 = arith.addf %17, %22 : vector<16x8xf32>
    %24 = vector.extract_strided_slice %1 {offsets = [1, 1, 0], sizes = [4, 4, 32], strides = [1, 1, 1]} : vector<5x5x32xbf16> to vector<4x4x32xbf16>
    %25 = vector.shape_cast %24 : vector<4x4x32xbf16> to vector<16x32xbf16>
    %c3 = arith.constant 3 : index
    %c0_15 = arith.constant 0 : index
    %c0_16 = arith.constant 0 : index
    %26 = vector.load %arg2[%c3, %c0_15, %c0_16] : memref<4x32x8xbf16, #tpu.memory_space<vmem>>, vector<1x32x8xbf16>
    %27 = vector.shape_cast %26 : vector<1x32x8xbf16> to vector<32x8xbf16>
    %cst_17 = arith.constant dense<0.000000e+00> : vector<16x8xf32>
    %28 = tpu.matmul %25, %27, %cst_17 {dimension_numbers = #tpu.dot_dimension_numbers<[1], [0], [0], [1], [0, 0, 1, 1], [], []>} : vector<16x32xbf16>, vector<32x8xbf16>, vector<16x8xf32> -> vector<16x8xf32>
    %29 = arith.addf %23, %28 : vector<16x8xf32>
    %cst_18 = arith.constant 0.000000e+00 : f32
    %30 = vector.broadcast %cst_18 : f32 to vector<16x8xf32>
    %31 = arith.cmpf oge, %29, %30 : vector<16x8xf32>
    %cst_19 = arith.constant 2.000000e-01 : f32
    %32 = vector.broadcast %cst_19 : f32 to vector<16x8xf32>
    %33 = arith.mulf %32, %29 : vector<16x8xf32>
    %34 = arith.select %31, %29, %33 : vector<16x8xi1>, vector<16x8xf32>
    %cst_20 = arith.constant 0.000000e+00 : bf16
    %35 = vector.broadcast %cst_20 : bf16 to vector<6x6x8xbf16>
    %c0_21 = arith.constant 0 : index
    %c0_22 = arith.constant 0 : index
    %c0_23 = arith.constant 0 : index
    %36 = vector.load %arg7[%c0_21, %c0_22, %c0_23] : memref<6x6x8xbf16, #tpu.memory_space<vmem>>, vector<6x6x8xbf16>
    tpu.vector_store %arg7[%c0_21, %c0_22, %c0_23], %35 {strides = array<i32>} : memref<6x6x8xbf16, #tpu.memory_space<vmem>>, vector<6x6x8xbf16>,
    %37 = vector.shape_cast %34 : vector<16x8xf32> to vector<4x4x8xf32>
    %38 = arith.truncf %37 : vector<4x4x8xf32> to vector<4x4x8xbf16>
    %c1_24 = arith.constant 1 : index
    %c1_25 = arith.constant 1 : index
    %c0_26 = arith.constant 0 : index
    %39 = vector.load %arg7[%c1_24, %c1_25, %c0_26] : memref<6x6x8xbf16, #tpu.memory_space<vmem>>, vector<4x4x8xbf16>
    tpu.vector_store %arg7[%c1_24, %c1_25, %c0_26], %38 {strides = array<i32>} : memref<6x6x8xbf16, #tpu.memory_space<vmem>>, vector<4x4x8xbf16>,
    %c0_27 = arith.constant 0 : index
    %c0_28 = arith.constant 0 : index
    %c0_29 = arith.constant 0 : index
    %40 = vector.load %arg7[%c0_27, %c0_28, %c0_29] : memref<6x6x8xbf16, #tpu.memory_space<vmem>>, vector<6x6x8xbf16>
    %c0_30 = arith.constant 0 : index
    %c0_31 = arith.constant 0 : index
    %41 = vector.load %arg5[%c0_30, %c0_31] : memref<1x8xf32, #tpu.memory_space<vmem>>, vector<1x8xf32>
    %cst_32 = arith.constant 0.000000e+00 : f32
    %42 = vector.broadcast %cst_32 : f32 to vector<16x8xf32>
    %43 = vector.broadcast %41 : vector<1x8xf32> to vector<16x8xf32>
    %44 = arith.addf %42, %43 : vector<16x8xf32>
    %45 = vector.extract_strided_slice %40 {offsets = [0, 0, 0], sizes = [4, 4, 8], strides = [1, 1, 1]} : vector<6x6x8xbf16> to vector<4x4x8xbf16>
    %46 = vector.shape_cast %45 : vector<4x4x8xbf16> to vector<16x8xbf16>
    %c0_33 = arith.constant 0 : index
    %c0_34 = arith.constant 0 : index
    %c0_35 = arith.constant 0 : index
    %47 = vector.load %arg4[%c0_33, %c0_34, %c0_35] : memref<9x8x8xbf16, #tpu.memory_space<vmem>>, vector<1x8x8xbf16>
    %48 = vector.shape_cast %47 : vector<1x8x8xbf16> to vector<8x8xbf16>
    %cst_36 = arith.constant dense<0.000000e+00> : vector<16x8xf32>
    %49 = tpu.matmul %46, %48, %cst_36 {dimension_numbers = #tpu.dot_dimension_numbers<[1], [0], [0], [1], [0, 0, 1, 1], [], []>} : vector<16x8xbf16>, vector<8x8xbf16>, vector<16x8xf32> -> vector<16x8xf32>
    %50 = arith.addf %44, %49 : vector<16x8xf32>
    %51 = vector.extract_strided_slice %40 {offsets = [0, 1, 0], sizes = [4, 4, 8], strides = [1, 1, 1]} : vector<6x6x8xbf16> to vector<4x4x8xbf16>
    %52 = vector.shape_cast %51 : vector<4x4x8xbf16> to vector<16x8xbf16>
    %c1_37 = arith.constant 1 : index
    %c0_38 = arith.constant 0 : index
    %c0_39 = arith.constant 0 : index
    %53 = vector.load %arg4[%c1_37, %c0_38, %c0_39] : memref<9x8x8xbf16, #tpu.memory_space<vmem>>, vector<1x8x8xbf16>
    %54 = vector.shape_cast %53 : vector<1x8x8xbf16> to vector<8x8xbf16>
    %cst_40 = arith.constant dense<0.000000e+00> : vector<16x8xf32>
    %55 = tpu.matmul %52, %54, %cst_40 {dimension_numbers = #tpu.dot_dimension_numbers<[1], [0], [0], [1], [0, 0, 1, 1], [], []>} : vector<16x8xbf16>, vector<8x8xbf16>, vector<16x8xf32> -> vector<16x8xf32>
    %56 = arith.addf %50, %55 : vector<16x8xf32>
    %57 = vector.extract_strided_slice %40 {offsets = [0, 2, 0], sizes = [4, 4, 8], strides = [1, 1, 1]} : vector<6x6x8xbf16> to vector<4x4x8xbf16>
    %58 = vector.shape_cast %57 : vector<4x4x8xbf16> to vector<16x8xbf16>
    %c2_41 = arith.constant 2 : index
    %c0_42 = arith.constant 0 : index
    %c0_43 = arith.constant 0 : index
    %59 = vector.load %arg4[%c2_41, %c0_42, %c0_43] : memref<9x8x8xbf16, #tpu.memory_space<vmem>>, vector<1x8x8xbf16>
    %60 = vector.shape_cast %59 : vector<1x8x8xbf16> to vector<8x8xbf16>
    %cst_44 = arith.constant dense<0.000000e+00> : vector<16x8xf32>
    %61 = tpu.matmul %58, %60, %cst_44 {dimension_numbers = #tpu.dot_dimension_numbers<[1], [0], [0], [1], [0, 0, 1, 1], [], []>} : vector<16x8xbf16>, vector<8x8xbf16>, vector<16x8xf32> -> vector<16x8xf32>
    %62 = arith.addf %56, %61 : vector<16x8xf32>
    %63 = vector.extract_strided_slice %40 {offsets = [1, 0, 0], sizes = [4, 4, 8], strides = [1, 1, 1]} : vector<6x6x8xbf16> to vector<4x4x8xbf16>
    %64 = vector.shape_cast %63 : vector<4x4x8xbf16> to vector<16x8xbf16>
    %c3_45 = arith.constant 3 : index
    %c0_46 = arith.constant 0 : index
    %c0_47 = arith.constant 0 : index
    %65 = vector.load %arg4[%c3_45, %c0_46, %c0_47] : memref<9x8x8xbf16, #tpu.memory_space<vmem>>, vector<1x8x8xbf16>
    %66 = vector.shape_cast %65 : vector<1x8x8xbf16> to vector<8x8xbf16>
    %cst_48 = arith.constant dense<0.000000e+00> : vector<16x8xf32>
    %67 = tpu.matmul %64, %66, %cst_48 {dimension_numbers = #tpu.dot_dimension_numbers<[1], [0], [0], [1], [0, 0, 1, 1], [], []>} : vector<16x8xbf16>, vector<8x8xbf16>, vector<16x8xf32> -> vector<16x8xf32>
    %68 = arith.addf %62, %67 : vector<16x8xf32>
    %69 = vector.extract_strided_slice %40 {offsets = [1, 1, 0], sizes = [4, 4, 8], strides = [1, 1, 1]} : vector<6x6x8xbf16> to vector<4x4x8xbf16>
    %70 = vector.shape_cast %69 : vector<4x4x8xbf16> to vector<16x8xbf16>
    %c4 = arith.constant 4 : index
    %c0_49 = arith.constant 0 : index
    %c0_50 = arith.constant 0 : index
    %71 = vector.load %arg4[%c4, %c0_49, %c0_50] : memref<9x8x8xbf16, #tpu.memory_space<vmem>>, vector<1x8x8xbf16>
    %72 = vector.shape_cast %71 : vector<1x8x8xbf16> to vector<8x8xbf16>
    %cst_51 = arith.constant dense<0.000000e+00> : vector<16x8xf32>
    %73 = tpu.matmul %70, %72, %cst_51 {dimension_numbers = #tpu.dot_dimension_numbers<[1], [0], [0], [1], [0, 0, 1, 1], [], []>} : vector<16x8xbf16>, vector<8x8xbf16>, vector<16x8xf32> -> vector<16x8xf32>
    %74 = arith.addf %68, %73 : vector<16x8xf32>
    %75 = vector.extract_strided_slice %40 {offsets = [1, 2, 0], sizes = [4, 4, 8], strides = [1, 1, 1]} : vector<6x6x8xbf16> to vector<4x4x8xbf16>
    %76 = vector.shape_cast %75 : vector<4x4x8xbf16> to vector<16x8xbf16>
    %c5 = arith.constant 5 : index
    %c0_52 = arith.constant 0 : index
    %c0_53 = arith.constant 0 : index
    %77 = vector.load %arg4[%c5, %c0_52, %c0_53] : memref<9x8x8xbf16, #tpu.memory_space<vmem>>, vector<1x8x8xbf16>
    %78 = vector.shape_cast %77 : vector<1x8x8xbf16> to vector<8x8xbf16>
    %cst_54 = arith.constant dense<0.000000e+00> : vector<16x8xf32>
    %79 = tpu.matmul %76, %78, %cst_54 {dimension_numbers = #tpu.dot_dimension_numbers<[1], [0], [0], [1], [0, 0, 1, 1], [], []>} : vector<16x8xbf16>, vector<8x8xbf16>, vector<16x8xf32> -> vector<16x8xf32>
    %80 = arith.addf %74, %79 : vector<16x8xf32>
    %81 = vector.extract_strided_slice %40 {offsets = [2, 0, 0], sizes = [4, 4, 8], strides = [1, 1, 1]} : vector<6x6x8xbf16> to vector<4x4x8xbf16>
    %82 = vector.shape_cast %81 : vector<4x4x8xbf16> to vector<16x8xbf16>
    %c6 = arith.constant 6 : index
    %c0_55 = arith.constant 0 : index
    %c0_56 = arith.constant 0 : index
    %83 = vector.load %arg4[%c6, %c0_55, %c0_56] : memref<9x8x8xbf16, #tpu.memory_space<vmem>>, vector<1x8x8xbf16>
    %84 = vector.shape_cast %83 : vector<1x8x8xbf16> to vector<8x8xbf16>
    %cst_57 = arith.constant dense<0.000000e+00> : vector<16x8xf32>
    %85 = tpu.matmul %82, %84, %cst_57 {dimension_numbers = #tpu.dot_dimension_numbers<[1], [0], [0], [1], [0, 0, 1, 1], [], []>} : vector<16x8xbf16>, vector<8x8xbf16>, vector<16x8xf32> -> vector<16x8xf32>
    %86 = arith.addf %80, %85 : vector<16x8xf32>
    %87 = vector.extract_strided_slice %40 {offsets = [2, 1, 0], sizes = [4, 4, 8], strides = [1, 1, 1]} : vector<6x6x8xbf16> to vector<4x4x8xbf16>
    %88 = vector.shape_cast %87 : vector<4x4x8xbf16> to vector<16x8xbf16>
    %c7 = arith.constant 7 : index
    %c0_58 = arith.constant 0 : index
    %c0_59 = arith.constant 0 : index
    %89 = vector.load %arg4[%c7, %c0_58, %c0_59] : memref<9x8x8xbf16, #tpu.memory_space<vmem>>, vector<1x8x8xbf16>
    %90 = vector.shape_cast %89 : vector<1x8x8xbf16> to vector<8x8xbf16>
    %cst_60 = arith.constant dense<0.000000e+00> : vector<16x8xf32>
    %91 = tpu.matmul %88, %90, %cst_60 {dimension_numbers = #tpu.dot_dimension_numbers<[1], [0], [0], [1], [0, 0, 1, 1], [], []>} : vector<16x8xbf16>, vector<8x8xbf16>, vector<16x8xf32> -> vector<16x8xf32>
    %92 = arith.addf %86, %91 : vector<16x8xf32>
    %93 = vector.extract_strided_slice %40 {offsets = [2, 2, 0], sizes = [4, 4, 8], strides = [1, 1, 1]} : vector<6x6x8xbf16> to vector<4x4x8xbf16>
    %94 = vector.shape_cast %93 : vector<4x4x8xbf16> to vector<16x8xbf16>
    %c8 = arith.constant 8 : index
    %c0_61 = arith.constant 0 : index
    %c0_62 = arith.constant 0 : index
    %95 = vector.load %arg4[%c8, %c0_61, %c0_62] : memref<9x8x8xbf16, #tpu.memory_space<vmem>>, vector<1x8x8xbf16>
    %96 = vector.shape_cast %95 : vector<1x8x8xbf16> to vector<8x8xbf16>
    %cst_63 = arith.constant dense<0.000000e+00> : vector<16x8xf32>
    %97 = tpu.matmul %94, %96, %cst_63 {dimension_numbers = #tpu.dot_dimension_numbers<[1], [0], [0], [1], [0, 0, 1, 1], [], []>} : vector<16x8xbf16>, vector<8x8xbf16>, vector<16x8xf32> -> vector<16x8xf32>
    %98 = arith.addf %92, %97 : vector<16x8xf32>
    %99 = arith.addf %98, %34 : vector<16x8xf32>
    %cst_64 = arith.constant 0.000000e+00 : f32
    %100 = vector.broadcast %cst_64 : f32 to vector<16x8xf32>
    %101 = arith.cmpf oge, %99, %100 : vector<16x8xf32>
    %cst_65 = arith.constant 2.000000e-01 : f32
    %102 = vector.broadcast %cst_65 : f32 to vector<16x8xf32>
    %103 = arith.mulf %102, %99 : vector<16x8xf32>
    %104 = arith.select %101, %99, %103 : vector<16x8xi1>, vector<16x8xf32>
    %105 = vector.shape_cast %104 : vector<16x8xf32> to vector<1x4x4x8xf32>
    %c0_66 = arith.constant 0 : index
    %c0_67 = arith.constant 0 : index
    %c0_68 = arith.constant 0 : index
    %c0_69 = arith.constant 0 : index
    %106 = vector.load %arg6[%c0_66, %c0_67, %c0_68, %c0_69] : memref<1x4x4x8xf32, #tpu.memory_space<vmem>>, vector<1x4x4x8xf32>
    tpu.vector_store %arg6[%c0_66, %c0_67, %c0_68, %c0_69], %105 {strides = array<i32>} : memref<1x4x4x8xf32, #tpu.memory_space<vmem>>, vector<1x4x4x8xf32>,
    return
  }
  func.func @transform_0(%arg0: i32) -> (i32, i32, i32, i32) {
    %c0_i32 = arith.constant 0 : i32
    %c0_i32_0 = arith.constant 0 : i32
    %c0_i32_1 = arith.constant 0 : i32
    %c0_i32_2 = arith.constant 0 : i32
    return %arg0, %c0_i32, %c0_i32_0, %c0_i32_1 : i32, i32, i32, i32
  }
  func.func @transform_1(%arg0: i32) -> (i32, i32, i32) {
    %c0_i32 = arith.constant 0 : i32
    %c0_i32_0 = arith.constant 0 : i32
    %c0_i32_1 = arith.constant 0 : i32
    %c0_i32_2 = arith.constant 0 : i32
    return %c0_i32, %c0_i32_0, %c0_i32_1 : i32, i32, i32
  }
  func.func @transform_2(%arg0: i32) -> (i32, i32) {
    %c0_i32 = arith.constant 0 : i32
    %c0_i32_0 = arith.constant 0 : i32
    %c0_i32_1 = arith.constant 0 : i32
    return %c0_i32, %c0_i32_0 : i32, i32
  }
  func.func @transform_3(%arg0: i32) -> (i32, i32, i32) {
    %c0_i32 = arith.constant 0 : i32
    %c0_i32_0 = arith.constant 0 : i32
    %c0_i32_1 = arith.constant 0 : i32
    %c0_i32_2 = arith.constant 0 : i32
    return %c0_i32, %c0_i32_0, %c0_i32_1 : i32, i32, i32
  }
  func.func @transform_4(%arg0: i32) -> (i32, i32) {
    %c0_i32 = arith.constant 0 : i32
    %c0_i32_0 = arith.constant 0 : i32
    %c0_i32_1 = arith.constant 0 : i32
    return %c0_i32, %c0_i32_0 : i32, i32
  }
  func.func @transform_5(%arg0: i32) -> (i32, i32, i32, i32) {
    %c0_i32 = arith.constant 0 : i32
    %c0_i32_0 = arith.constant 0 : i32
    %c0_i32_1 = arith.constant 0 : i32
    %c0_i32_2 = arith.constant 0 : i32
    return %arg0, %c0_i32, %c0_i32_0, %c0_i32_1 : i32, i32, i32, i32
  }
}

</mosaic_0001>

<llo_original>
// kernel: conv_downsample_forward.3
$region0: #{conv_downsample_forward.3}
  #allocation0 [shape = 'u32[]', space=smem, size = 0x4, offset = 0x4, fixed_abs, tag = 'smem constant byte address 0x4 - core index']
  #allocation1 [shape = 'u32[144,128]{1,0:T(1,128)}', space=vmem, size = 0x12000, scoped, tag = 'internal scratch']
  #allocation2 [shape = 'bf16[6,6,8]{2,1,0:T(8,128)(2,1)}', space=vmem, size = 0x3000, scoped, tag = 'scratch operand']
  %s0 = inlined_call_operand.vmem [shape: bf16[2,5,5,32], index: 0, kind: input, shape index: {}]
  %s1 = inlined_call_operand.vmem [shape: bf16[4,32,8], index: 1, kind: input, shape index: {}]
  %s2 = inlined_call_operand.vmem [shape: f32[1,8], index: 2, kind: input, shape index: {}]
  %s3 = inlined_call_operand.vmem [shape: bf16[9,8,8], index: 3, kind: input, shape index: {}]
  %s4 = inlined_call_operand.vmem [shape: f32[1,8], index: 4, kind: input, shape index: {}]
  %s5 = inlined_call_operand.hbm [shape: f32[2,4,4,8], index: 5, kind: output, shape index: {}]
  %s6 = sld [smem:[#allocation0]]
  $region53: #{conv_downsample_forward.3} parent=0
    _
  %s8 = ssub.s32 1, %s6
  %s9 = scalar_select 0, %s8, %s6
  $region1: #{conv_downsample_forward.3} parent=0
    #allocation3 [shape = 'u8[16384]{0}', space=vmem, size = 0x4000, scoped, tag = 'output window, operand 0']
    #allocation4 [shape = 's32[2]{0}', space=sflag, size = 0x8, scoped, tag = 'scoped memory for conv_downsample_forward.3']
    %10 = vsyncpa [#allocation4], 0
    %s11 = scalar_lea.sflag [#allocation4], 1
    %12 = vsyncpa %s11, 0
    loop: start=0, step=1, limit=4
    $region2: #{conv_downsample_forward.3} parent=1 // loop_pre_header
      _
    $region3: #{conv_downsample_forward.3} parent=1 // loop_header
      %s14 = sphi 0, %s18
      %p15 = scmp.ge.s32.totalorder %s14, 4
      %s24 = sphi 0, %s26
      %s27 = sphi 0, %s24
      %s28 = sphi 0, %s27
      %s44 = sphi 0, %s28
      %s48 = sphi 0, %s48
      %s50 = sphi 0, %s48
      %s51 = sphi 0, %s50
      %s65 = sphi 0, %s51
      %s69 = sphi 0, %s69
      %s71 = sphi 0, %s69
      %s72 = sphi 0, %s71
      %s86 = sphi 0, %s72
      %s90 = sphi 0, %s90
      %s92 = sphi 0, %s90
      %s93 = sphi 0, %s92
      %s107 = sphi 0, %s93
      %s111 = sphi 0, %s111
      %s113 = sphi 0, %s111
      %s114 = sphi 0, %s113
      %s128 = sphi 0, %s114
      %s134 = sphi 0, %s136
      %s137 = sphi 0, %s134
      %s138 = sphi 0, %s137
      %s154 = sphi 0, %s138
    $region4: #{conv_downsample_forward.3} parent=1 // loop_header_branch
      %17 = sbr.rel (%p15) target = $region8
    $region5: #{conv_downsample_forward.3} parent=1 // loop_body
      %s19 = ssub.s32 %s14, 1
      %s20 = ssub.s32 %s14, 2
      %s21 = sadd.s32 %s14, 1
      %s22 = ssub.s32 %s14, %s21
      %p23 = scmp.eq.s32.totalorder %s22, 0
      %s25 = sadd.s32 %s24, 1
      %s26 = scalar_select %p23, %s24, %s25
      %p29 = pneg %p23
      %p30 = scmp.eq.s32.totalorder %s14, 1
      %p31 = por %p29, %p30
      %p32 = scmp.ne.s32.totalorder %s24, %s27
      %p33 = scmp.eq.s32.totalorder %s14, 0
      %p34 = por %p32, %p33
      %p35 = scmp.ne.s32.totalorder %s24, %s27
      %p36 = scmp.eq.s32.totalorder %s19, 1
      %p37 = por %p35, %p36
      %p38 = scmp.ne.s32.totalorder %s27, %s28
      %p39 = scmp.eq.s32.totalorder %s19, 0
      %p40 = por %p38, %p39
      %p41 = scmp.ne.s32.totalorder %s27, %s28
      %p42 = scmp.eq.s32.totalorder %s20, 1
      %p43 = por %p41, %p42
      %p45 = scmp.ne.s32.totalorder %s28, %s44
      %p46 = scmp.eq.s32.totalorder %s20, 0
      %p47 = por %p45, %p46
      %s49 = sadd.s32 %s48, 1
      %p52 = scmp.eq.s32.totalorder %s14, 1
      %p53 = scmp.ne.s32.totalorder %s48, %s50
      %p54 = scmp.eq.s32.totalorder %s14, 0
      %p55 = por %p53, %p54
      %p56 = scmp.ne.s32.totalorder %s48, %s50
      %p57 = scmp.eq.s32.totalorder %s19, 1
      %p58 = por %p56, %p57
      %p59 = scmp.ne.s32.totalorder %s50, %s51
      %p60 = scmp.eq.s32.totalorder %s19, 0
      %p61 = por %p59, %p60
      %p62 = scmp.ne.s32.totalorder %s50, %s51
      %p63 = scmp.eq.s32.totalorder %s20, 1
      %p64 = por %p62, %p63
      %p66 = scmp.ne.s32.totalorder %s51, %s65
      %p67 = scmp.eq.s32.totalorder %s20, 0
      %p68 = por %p66, %p67
      %s70 = sadd.s32 %s69, 1
      %p73 = scmp.eq.s32.totalorder %s14, 1
      %p74 = scmp.ne.s32.totalorder %s69, %s71
      %p75 = scmp.eq.s32.totalorder %s14, 0
      %p76 = por %p74, %p75
      %p77 = scmp.ne.s32.totalorder %s69, %s71
      %p78 = scmp.eq.s32.totalorder %s19, 1
      %p79 = por %p77, %p78
      %p80 = scmp.ne.s32.totalorder %s71, %s72
      %p81 = scmp.eq.s32.totalorder %s19, 0
      %p82 = por %p80, %p81
      %p83 = scmp.ne.s32.totalorder %s71, %s72
      %p84 = scmp.eq.s32.totalorder %s20, 1
      %p85 = por %p83, %p84
      %p87 = scmp.ne.s32.totalorder %s72, %s86
      %p88 = scmp.eq.s32.totalorder %s20, 0
      %p89 = por %p87, %p88
      %s91 = sadd.s32 %s90, 1
      %p94 = scmp.eq.s32.totalorder %s14, 1
      %p95 = scmp.ne.s32.totalorder %s90, %s92
      %p96 = scmp.eq.s32.totalorder %s14, 0
      %p97 = por %p95, %p96
      %p98 = scmp.ne.s32.totalorder %s90, %s92
      %p99 = scmp.eq.s32.totalorder %s19, 1
      %p100 = por %p98, %p99
      %p101 = scmp.ne.s32.totalorder %s92, %s93
      %p102 = scmp.eq.s32.totalorder %s19, 0
      %p103 = por %p101, %p102
      %p104 = scmp.ne.s32.totalorder %s92, %s93
      %p105 = scmp.eq.s32.totalorder %s20, 1
      %p106 = por %p104, %p105
      %p108 = scmp.ne.s32.totalorder %s93, %s107
      %p109 = scmp.eq.s32.totalorder %s20, 0
      %p110 = por %p108, %p109
      %s112 = sadd.s32 %s111, 1
      %p115 = scmp.eq.s32.totalorder %s14, 1
      %p116 = scmp.ne.s32.totalorder %s111, %s113
      %p117 = scmp.eq.s32.totalorder %s14, 0
      %p118 = por %p116, %p117
      %p119 = scmp.ne.s32.totalorder %s111, %s113
      %p120 = scmp.eq.s32.totalorder %s19, 1
      %p121 = por %p119, %p120
      %p122 = scmp.ne.s32.totalorder %s113, %s114
      %p123 = scmp.eq.s32.totalorder %s19, 0
      %p124 = por %p122, %p123
      %p125 = scmp.ne.s32.totalorder %s113, %s114
      %p126 = scmp.eq.s32.totalorder %s20, 1
      %p127 = por %p125, %p126
      %p129 = scmp.ne.s32.totalorder %s114, %s128
      %p130 = scmp.eq.s32.totalorder %s20, 0
      %p131 = por %p129, %p130
      %s132 = ssub.s32 %s14, %s21
      %p133 = scmp.eq.s32.totalorder %s132, 0
      %s135 = sadd.s32 %s134, 1
      %s136 = scalar_select %p133, %s134, %s135
      %p139 = pneg %p133
      %p140 = scmp.eq.s32.totalorder %s14, 1
      %p141 = por %p139, %p140
      %p142 = scmp.ne.s32.totalorder %s134, %s137
      %p143 = scmp.eq.s32.totalorder %s14, 0
      %p144 = por %p142, %p143
      %p145 = scmp.ne.s32.totalorder %s134, %s137
      %p146 = scmp.eq.s32.totalorder %s19, 1
      %p147 = por %p145, %p146
      %p148 = scmp.ne.s32.totalorder %s137, %s138
      %p149 = scmp.eq.s32.totalorder %s19, 0
      %p150 = por %p148, %p149
      %p151 = scmp.ne.s32.totalorder %s137, %s138
      %p152 = scmp.eq.s32.totalorder %s20, 1
      %p153 = por %p151, %p152
      %p155 = scmp.ne.s32.totalorder %s138, %s154
      %p156 = scmp.eq.s32.totalorder %s20, 0
      %p157 = por %p155, %p156
      %p158 = scmp.le.s32.totalorder 1, %s14
      %p159 = scmp.lt.s32.totalorder %s14, 3
      %p160 = pnand %p158, %p159
      %p161 = pneg %p160
      // Predicated region
      $region9: #{conv_downsample_forward.3} parent=5 // pred_check
        _
      $region10: #{conv_downsample_forward.3} parent=5 // pred_check_branch
        %163 = sbr.rel (%p160) target = $region12
      $region11: #{conv_downsample_forward.3} parent=5 // pred_region
        %s164 = ssub.s32 %s14, 1
        // Predicated region
        $region13: #{conv_downsample_forward.3} parent=11 // pred_check
          %p165 = pneg %p61
        $region14: #{conv_downsample_forward.3} parent=11 // pred_check_branch
          %167 = sbr.rel (%p165) target = $region16
        $region15: #{conv_downsample_forward.3} parent=11 // pred_region
          _
        $region16: #{conv_downsample_forward.3} parent=11 // pred_fallthru
          _
        // Predicated region
        $region17: #{conv_downsample_forward.3} parent=11 // pred_check
          %p168 = pneg %p82
        $region18: #{conv_downsample_forward.3} parent=11 // pred_check_branch
          %170 = sbr.rel (%p168) target = $region20
        $region19: #{conv_downsample_forward.3} parent=11 // pred_region
          _
        $region20: #{conv_downsample_forward.3} parent=11 // pred_fallthru
          _
        // Predicated region
        $region21: #{conv_downsample_forward.3} parent=11 // pred_check
          %p171 = pneg %p103
        $region22: #{conv_downsample_forward.3} parent=11 // pred_check_branch
          %173 = sbr.rel (%p171) target = $region24
        $region23: #{conv_downsample_forward.3} parent=11 // pred_region
          _
        $region24: #{conv_downsample_forward.3} parent=11 // pred_fallthru
          _
        // Predicated region
        $region25: #{conv_downsample_forward.3} parent=11 // pred_check
          %p174 = pneg %p124
        $region26: #{conv_downsample_forward.3} parent=11 // pred_check_branch
          %176 = sbr.rel (%p174) target = $region28
        $region27: #{conv_downsample_forward.3} parent=11 // pred_region
          _
        $region28: #{conv_downsample_forward.3} parent=11 // pred_fallthru
          _
      $region12: #{conv_downsample_forward.3} parent=5 // pred_fallthru
        _
      %p177 = scmp.lt.s32.totalorder %s14, 2
      // Predicated region
      $region29: #{conv_downsample_forward.3} parent=5 // pred_check
        %p178 = pneg %p177
      $region30: #{conv_downsample_forward.3} parent=5 // pred_check_branch
        %180 = sbr.rel (%p178) target = $region32
      $region31: #{conv_downsample_forward.3} parent=5 // pred_region
        // Predicated region
        $region33: #{conv_downsample_forward.3} parent=31 // pred_check
          %p181 = pneg %p34
        $region34: #{conv_downsample_forward.3} parent=31 // pred_check_branch
          %183 = sbr.rel (%p181) target = $region36
        $region35: #{conv_downsample_forward.3} parent=31 // pred_region
          %p184 = scmp.lt.s32.totalorder %s14, 1
          %s185 = scalar_select %p184, %s14, 1
          %s186 = smul.addr %s185, 5
          %s187 = smul.addr %s186, 4
          %s188 = scalar_lea.vmem %s0, %s187
        $region36: #{conv_downsample_forward.3} parent=31 // pred_fallthru
          _
      $region32: #{conv_downsample_forward.3} parent=5 // pred_fallthru
        _
      %p189 = scmp.le.s32.totalorder 1, %s14
      %p190 = scmp.lt.s32.totalorder %s14, 3
      %p191 = pnand %p189, %p190
      %p192 = pneg %p191
      // Predicated region
      $region37: #{conv_downsample_forward.3} parent=5 // pred_check
        _
      $region38: #{conv_downsample_forward.3} parent=5 // pred_check_branch
        %194 = sbr.rel (%p191) target = $region40
      $region39: #{conv_downsample_forward.3} parent=5 // pred_region
        %s195 = ssub.s32 %s14, 1
        %p196 = scmp.lt.s32.totalorder %s19, 1
        %s197 = scalar_select %p196, %s19, 1
        %s198 = smul.addr %s197, 5
        %s199 = smul.addr %s198, 4
        %s200 = scalar_lea.vmem %s0, %s199
        %p201 = pneg %p40
        %p202 = pneg %p37
        %p203 = pneg %p61
        %p204 = pneg %p58
        %p205 = pneg %p82
        %p206 = pneg %p79
        %p207 = pneg %p103
        %p208 = pneg %p100
        %p209 = pneg %p124
        %p210 = pneg %p121
        %p211 = pneg %p150
        %p212 = pneg %p147
        %s213 = sand.u32 %s137, 1
        %s214 = scalar_lea.sflag [#allocation4], %s213
        %s215 = sand.u32 %s137, 1
        %s216 = smul.addr %s215, 16
        %s217 = scalar_lea.vmem [#allocation3], %s216
        %p218 = scmp.lt.s32.totalorder %s19, 1
        %s219 = scalar_select %p218, %s19, 1
        %s220 = smul.addr %s219, 5
        %s221 = smul.addr %s220, 4
        %s222 = scalar_lea.vmem %s0, %s221
        %v224 = vld [vmem:[%s222] sm:$0x7]
        %v225 = vld [vmem:[%s222 + $0x4] sm:$0x7]
        %v226 = vld [vmem:[%s222 + $0x8] sm:$0x7]
        %v227 = vld [vmem:[%s222 + $0xc] sm:$0x7]
        %v228 = vld [vmem:[%s222 + $0x10] sm:$0x7]
        %v229 = vld [vmem:[%s2] sm:$0x1]
        %v231 = vlaneseq
        %v232 = vshrl.u32 %v231, 7
        %v233 = vsub.s32 0, %v232
        %v234 = vrot.slane %v229, %v233
        %v236 = vadd.f32 %v234, 0.0
        %v237 = vld [vmem:[%s1] sm:$0xf]
        %v238 = vld [vmem:[%s1 + $0x4] sm:$0xf]
        %v239 = vld [vmem:[%s1 + $0x8] sm:$0xf]
        %v240 = vld [vmem:[%s1 + $0xc] sm:$0xf]
        %v245 = vcombine.low %v224, %v225
        %v246 = vcombine.low %v226, %v227
        %v248 = vunpack.c.l.s4 1983009808
        %v249 = vunpack.c.0.s8 %v248
        %v250 = vlaneseq
        %v251 = vshrl.u32 %v250, 7
        %v252 = vsub.s32 %v249, %v251
        %v253 = vrot.slane %v245, %v252
        %v255 = vunpack.c.l.s4 1983009808
        %v256 = vunpack.c.0.s8 %v255
        %v257 = vlaneseq
        %v258 = vshrl.u32 %v257, 7
        %v259 = vsub.s32 %v256, %v258
        %v260 = vrot.slane %v246, %v259
        %v261 = vcombine.low %v253, %v260
        %v266 = vunpack.c.l.b16 %v237
        %v267 = vunpack.c.l.b16 %v238
        %v268 = vunpack.c.l.b16 %v239
        %v269 = vunpack.c.l.b16 %v240
        %v270 = vpack.c.b16 %v267, %v266
        %v271 = vpack.c.b16 %v269, %v268
        %vm274 = vcmask 261120
        %v276 = vsel %vm274, %v261, 0
        %278 = vmatprep.subr.bf16.mxu0 0
        %279 = vmatpush1.bf16.msra.mxu0 %v270
        %280 = vmatprep.subr.bf16.mxu0 0
        %281 = vmatpush1.bf16.msra.mxu0 %v271
        %282 = vmatprep.subr.bf16.mxu0 0
        %283 = vmatpush1.bf16.msra.mxu0 0
        %284 = vmatprep.subr.bf16.mxu0 0
        %285 = vmatpush1.bf16.msra.mxu0 0
        %286 = vmatprep.subr.bf16.mxu0 0
        %287 = vmatpush1.bf16.msra.mxu0 0
        %288 = vmatprep.subr.bf16.mxu0 0
        %289 = vmatpush1.bf16.msra.mxu0 0
        %290 = vmatprep.subr.bf16.mxu0 0
        %291 = vmatpush1.bf16.msra.mxu0 0
        %292 = vmatprep.subr.bf16.mxu0 0
        %293 = vmatpush1.bf16.msra.mxu0 0
        %294 = vmatprep.subr.bf16.mxu0 0
        %295 = vmatpush1.bf16.msra.mxu0 0
        %296 = vmatprep.subr.bf16.mxu0 0
        %297 = vmatpush1.bf16.msra.mxu0 0
        %298 = vmatprep.subr.bf16.mxu0 0
        %299 = vmatpush1.bf16.msra.mxu0 0
        %300 = vmatprep.subr.bf16.mxu0 0
        %301 = vmatpush1.bf16.msra.mxu0 0
        %302 = vmatprep.subr.bf16.mxu0 0
        %303 = vmatpush1.bf16.msra.mxu0 0
        %304 = vmatprep.subr.bf16.mxu0 0
        %305 = vmatpush1.bf16.msra.mxu0 0
        %306 = vmatprep.subr.bf16.mxu0 0
        %307 = vmatpush1.bf16.msra.mxu0 0
        %308 = vmatprep.subr.bf16.mxu0 0
        %309 = vmatpush1.bf16.msra.mxu0 0
        %310 = vmatprep.mubr.bf16.mxu0 0
        %311 = vmatmul.mubr.bf16.gmra.mrb[0].mxu0 %v276
        %v312 = vpop.f32.mrb[0].mxu0
        %v313 = vadd.f32 0.0, %v312
        %v314 = vpop.f32.mrb[0].mxu0
        %v315 = vpop.f32.mrb[0].mxu0
        %v316 = vadd.f32 0.0, %v315
        %v317 = vpop.f32.mrb[0].mxu0
        %318 = vdwg.mxu0
        %v319 = vadd.f32 %v236, %v313
        %v320 = vadd.f32 %v236, %v316
        %v322 = vunpack.c.l.s4 1983009808
        %v323 = vunpack.c.0.s8 %v322
        %v324 = vlaneseq
        %v325 = vshrl.u32 %v324, 7
        %v326 = vsub.s32 %v323, %v325
        %v327 = vrot.slane %v224, %v326
        %v328 = vcombine.high %v327, %v327
        %v330 = vunpack.c.l.s4 1983009808
        %v331 = vunpack.c.0.s8 %v330
        %v332 = vlaneseq
        %v333 = vshrl.u32 %v332, 7
        %v334 = vsub.s32 %v331, %v333
        %v335 = vrot.slane %v225, %v334
        %v336 = vcombine.high %v335, %v335
        %v338 = vunpack.c.l.s4 1983009808
        %v339 = vunpack.c.0.s8 %v338
        %v340 = vlaneseq
        %v341 = vshrl.u32 %v340, 7
        %v342 = vsub.s32 %v339, %v341
        %v343 = vrot.slane %v226, %v342
        %v344 = vcombine.high %v343, %v343
        %v346 = vunpack.c.l.s4 1983009808
        %v347 = vunpack.c.0.s8 %v346
        %v348 = vlaneseq
        %v349 = vshrl.u32 %v348, 7
        %v350 = vsub.s32 %v347, %v349
        %v351 = vrot.slane %v227, %v350
        %v352 = vcombine.high %v351, %v351
        %vm353 = vsmask.f32 1280
        %vm354 = vsmask.f32 3336
        %vm355 = vmor %vm353, %vm354
        %vm356 = vsmask.f32 5392
        %vm357 = vmor %vm355, %vm356
        %vm358 = vsmask.f32 7448
        %vm359 = vmor %vm357, %vm358
        %v361 = vshrl.u32 %v327, 16
        %v363 = vrot.slane %v361, 6
        %v364 = vshll.u32 %v327, 16
        %v366 = vrot.slane %v364, 7
        %v367 = vor.u32 %v363, %v366
        %v368 = vrot.slane %v367, 2
        %v370 = vshll.u32 %v328, 16
        %v372 = vrot.slane %v370, 7
        %v373 = vsel %vm359, %v368, %v372
        %v375 = vshrl.u32 %v335, 16
        %v377 = vrot.slane %v375, 6
        %v378 = vshll.u32 %v335, 16
        %v380 = vrot.slane %v378, 7
        %v381 = vor.u32 %v377, %v380
        %v382 = vrot.slane %v381, 2
        %v384 = vshll.u32 %v336, 16
        %v386 = vrot.slane %v384, 7
        %v387 = vsel %vm359, %v382, %v386
        %v389 = vshrl.u32 %v343, 16
        %v391 = vrot.slane %v389, 6
        %v392 = vshll.u32 %v343, 16
        %v394 = vrot.slane %v392, 7
        %v395 = vor.u32 %v391, %v394
        %v396 = vrot.slane %v395, 2
        %v398 = vshll.u32 %v344, 16
        %v400 = vrot.slane %v398, 7
        %v401 = vsel %vm359, %v396, %v400
        %v403 = vshrl.u32 %v351, 16
        %v405 = vrot.slane %v403, 6
        %v406 = vshll.u32 %v351, 16
        %v408 = vrot.slane %v406, 7
        %v409 = vor.u32 %v405, %v408
        %v410 = vrot.slane %v409, 2
        %v412 = vshll.u32 %v352, 16
        %v414 = vrot.slane %v412, 7
        %v415 = vsel %vm359, %v410, %v414
        %s416 = scalar_lea.vmem %s1, 16
        %v417 = vld [vmem:[%s416] sm:$0xf]
        %v418 = vld [vmem:[%s416 + $0x4] sm:$0xf]
        %v419 = vld [vmem:[%s416 + $0x8] sm:$0xf]
        %v420 = vld [vmem:[%s416 + $0xc] sm:$0xf]
        %v421 = vcombine.low %v373, %v387
        %v422 = vcombine.low %v401, %v415
        %v424 = vunpack.c.l.s4 1983009808
        %v425 = vunpack.c.0.s8 %v424
        %v426 = vlaneseq
        %v427 = vshrl.u32 %v426, 7
        %v428 = vsub.s32 %v425, %v427
        %v429 = vrot.slane %v421, %v428
        %v431 = vunpack.c.l.s4 1983009808
        %v432 = vunpack.c.0.s8 %v431
        %v433 = vlaneseq
        %v434 = vshrl.u32 %v433, 7
        %v435 = vsub.s32 %v432, %v434
        %v436 = vrot.slane %v422, %v435
        %v437 = vcombine.low %v429, %v436
        %v442 = vunpack.c.l.b16 %v417
        %v443 = vunpack.c.l.b16 %v418
        %v444 = vunpack.c.l.b16 %v419
        %v445 = vunpack.c.l.b16 %v420
        %v446 = vpack.c.b16 %v443, %v442
        %v447 = vpack.c.b16 %v445, %v444
        %v451 = vsel %vm274, %v437, 0
        %453 = vmatprep.subr.bf16.mxu0 0
        %454 = vmatpush1.bf16.msra.mxu0 %v446
        %455 = vmatprep.subr.bf16.mxu0 0
        %456 = vmatpush1.bf16.msra.mxu0 %v447
        %457 = vmatprep.subr.bf16.mxu0 0
        %458 = vmatpush1.bf16.msra.mxu0 0
        %459 = vmatprep.subr.bf16.mxu0 0
        %460 = vmatpush1.bf16.msra.mxu0 0
        %461 = vmatprep.subr.bf16.mxu0 0
        %462 = vmatpush1.bf16.msra.mxu0 0
        %463 = vmatprep.subr.bf16.mxu0 0
        %464 = vmatpush1.bf16.msra.mxu0 0
        %465 = vmatprep.subr.bf16.mxu0 0
        %466 = vmatpush1.bf16.msra.mxu0 0
        %467 = vmatprep.subr.bf16.mxu0 0
        %468 = vmatpush1.bf16.msra.mxu0 0
        %469 = vmatprep.subr.bf16.mxu0 0
        %470 = vmatpush1.bf16.msra.mxu0 0
        %471 = vmatprep.subr.bf16.mxu0 0
        %472 = vmatpush1.bf16.msra.mxu0 0
        %473 = vmatprep.subr.bf16.mxu0 0
        %474 = vmatpush1.bf16.msra.mxu0 0
        %475 = vmatprep.subr.bf16.mxu0 0
        %476 = vmatpush1.bf16.msra.mxu0 0
        %477 = vmatprep.subr.bf16.mxu0 0
        %478 = vmatpush1.bf16.msra.mxu0 0
        %479 = vmatprep.subr.bf16.mxu0 0
        %480 = vmatpush1.bf16.msra.mxu0 0
        %481 = vmatprep.subr.bf16.mxu0 0
        %482 = vmatpush1.bf16.msra.mxu0 0
        %483 = vmatprep.subr.bf16.mxu0 0
        %484 = vmatpush1.bf16.msra.mxu0 0
        %485 = vmatprep.mubr.bf16.mxu0 0
        %486 = vmatmul.mubr.bf16.gmra.mrb[0].mxu0 %v451
        %v487 = vpop.f32.mrb[0].mxu0
        %v488 = vadd.f32 0.0, %v487
        %v489 = vpop.f32.mrb[0].mxu0
        %v490 = vpop.f32.mrb[0].mxu0
        %v491 = vadd.f32 0.0, %v490
        %v492 = vpop.f32.mrb[0].mxu0
        %493 = vdwg.mxu0
        %v494 = vadd.f32 %v319, %v488
        %v495 = vadd.f32 %v320, %v491
        %s496 = scalar_lea.vmem %s1, 32
        %v497 = vld [vmem:[%s496] sm:$0xf]
        %v498 = vld [vmem:[%s496 + $0x4] sm:$0xf]
        %v499 = vld [vmem:[%s496 + $0x8] sm:$0xf]
        %v500 = vld [vmem:[%s496 + $0xc] sm:$0xf]
        %v502 = vcombine.low %v225, %v226
        %v503 = vcombine.low %v227, %v228
        %v505 = vunpack.c.l.s4 1983009808
        %v506 = vunpack.c.0.s8 %v505
        %v507 = vlaneseq
        %v508 = vshrl.u32 %v507, 7
        %v509 = vsub.s32 %v506, %v508
        %v510 = vrot.slane %v502, %v509
        %v512 = vunpack.c.l.s4 1983009808
        %v513 = vunpack.c.0.s8 %v512
        %v514 = vlaneseq
        %v515 = vshrl.u32 %v514, 7
        %v516 = vsub.s32 %v513, %v515
        %v517 = vrot.slane %v503, %v516
        %v518 = vcombine.low %v510, %v517
        %v523 = vunpack.c.l.b16 %v497
        %v524 = vunpack.c.l.b16 %v498
        %v525 = vunpack.c.l.b16 %v499
        %v526 = vunpack.c.l.b16 %v500
        %v527 = vpack.c.b16 %v524, %v523
        %v528 = vpack.c.b16 %v526, %v525
        %v532 = vsel %vm274, %v518, 0
        %534 = vmatprep.subr.bf16.mxu0 0
        %535 = vmatpush1.bf16.msra.mxu0 %v527
        %536 = vmatprep.subr.bf16.mxu0 0
        %537 = vmatpush1.bf16.msra.mxu0 %v528
        %538 = vmatprep.subr.bf16.mxu0 0
        %539 = vmatpush1.bf16.msra.mxu0 0
        %540 = vmatprep.subr.bf16.mxu0 0
        %541 = vmatpush1.bf16.msra.mxu0 0
        %542 = vmatprep.subr.bf16.mxu0 0
        %543 = vmatpush1.bf16.msra.mxu0 0
        %544 = vmatprep.subr.bf16.mxu0 0
        %545 = vmatpush1.bf16.msra.mxu0 0
        %546 = vmatprep.subr.bf16.mxu0 0
        %547 = vmatpush1.bf16.msra.mxu0 0
        %548 = vmatprep.subr.bf16.mxu0 0
        %549 = vmatpush1.bf16.msra.mxu0 0
        %550 = vmatprep.subr.bf16.mxu0 0
        %551 = vmatpush1.bf16.msra.mxu0 0
        %552 = vmatprep.subr.bf16.mxu0 0
        %553 = vmatpush1.bf16.msra.mxu0 0
        %554 = vmatprep.subr.bf16.mxu0 0
        %555 = vmatpush1.bf16.msra.mxu0 0
        %556 = vmatprep.subr.bf16.mxu0 0
        %557 = vmatpush1.bf16.msra.mxu0 0
        %558 = vmatprep.subr.bf16.mxu0 0
        %559 = vmatpush1.bf16.msra.mxu0 0
        %560 = vmatprep.subr.bf16.mxu0 0
        %561 = vmatpush1.bf16.msra.mxu0 0
        %562 = vmatprep.subr.bf16.mxu0 0
        %563 = vmatpush1.bf16.msra.mxu0 0
        %564 = vmatprep.subr.bf16.mxu0 0
        %565 = vmatpush1.bf16.msra.mxu0 0
        %566 = vmatprep.mubr.bf16.mxu0 0
        %567 = vmatmul.mubr.bf16.gmra.mrb[0].mxu0 %v532
        %v568 = vpop.f32.mrb[0].mxu0
        %v569 = vadd.f32 0.0, %v568
        %v570 = vpop.f32.mrb[0].mxu0
        %v571 = vpop.f32.mrb[0].mxu0
        %v572 = vadd.f32 0.0, %v571
        %v573 = vpop.f32.mrb[0].mxu0
        %574 = vdwg.mxu0
        %v575 = vadd.f32 %v494, %v569
        %v576 = vadd.f32 %v495, %v572
        %v578 = vunpack.c.l.s4 1983009808
        %v579 = vunpack.c.0.s8 %v578
        %v580 = vlaneseq
        %v581 = vshrl.u32 %v580, 7
        %v582 = vsub.s32 %v579, %v581
        %v583 = vrot.slane %v228, %v582
        %v584 = vcombine.high %v583, %v583
        %v586 = vshrl.u32 %v583, 16
        %v588 = vrot.slane %v586, 6
        %v589 = vshll.u32 %v583, 16
        %v591 = vrot.slane %v589, 7
        %v592 = vor.u32 %v588, %v591
        %v593 = vrot.slane %v592, 2
        %v595 = vshll.u32 %v584, 16
        %v597 = vrot.slane %v595, 7
        %v598 = vsel %vm359, %v593, %v597
        %s599 = scalar_lea.vmem %s1, 48
        %v600 = vld [vmem:[%s599] sm:$0xf]
        %v601 = vld [vmem:[%s599 + $0x4] sm:$0xf]
        %v602 = vld [vmem:[%s599 + $0x8] sm:$0xf]
        %v603 = vld [vmem:[%s599 + $0xc] sm:$0xf]
        %v604 = vcombine.low %v387, %v401
        %v605 = vcombine.low %v415, %v598
        %v607 = vunpack.c.l.s4 1983009808
        %v608 = vunpack.c.0.s8 %v607
        %v609 = vlaneseq
        %v610 = vshrl.u32 %v609, 7
        %v611 = vsub.s32 %v608, %v610
        %v612 = vrot.slane %v604, %v611
        %v614 = vunpack.c.l.s4 1983009808
        %v615 = vunpack.c.0.s8 %v614
        %v616 = vlaneseq
        %v617 = vshrl.u32 %v616, 7
        %v618 = vsub.s32 %v615, %v617
        %v619 = vrot.slane %v605, %v618
        %v620 = vcombine.low %v612, %v619
        %v625 = vunpack.c.l.b16 %v600
        %v626 = vunpack.c.l.b16 %v601
        %v627 = vunpack.c.l.b16 %v602
        %v628 = vunpack.c.l.b16 %v603
        %v629 = vpack.c.b16 %v626, %v625
        %v630 = vpack.c.b16 %v628, %v627
        %v634 = vsel %vm274, %v620, 0
        %636 = vmatprep.subr.bf16.mxu0 0
        %637 = vmatpush1.bf16.msra.mxu0 %v629
        %638 = vmatprep.subr.bf16.mxu0 0
        %639 = vmatpush1.bf16.msra.mxu0 %v630
        %640 = vmatprep.subr.bf16.mxu0 0
        %641 = vmatpush1.bf16.msra.mxu0 0
        %642 = vmatprep.subr.bf16.mxu0 0
        %643 = vmatpush1.bf16.msra.mxu0 0
        %644 = vmatprep.subr.bf16.mxu0 0
        %645 = vmatpush1.bf16.msra.mxu0 0
        %646 = vmatprep.subr.bf16.mxu0 0
        %647 = vmatpush1.bf16.msra.mxu0 0
        %648 = vmatprep.subr.bf16.mxu0 0
        %649 = vmatpush1.bf16.msra.mxu0 0
        %650 = vmatprep.subr.bf16.mxu0 0
        %651 = vmatpush1.bf16.msra.mxu0 0
        %652 = vmatprep.subr.bf16.mxu0 0
        %653 = vmatpush1.bf16.msra.mxu0 0
        %654 = vmatprep.subr.bf16.mxu0 0
        %655 = vmatpush1.bf16.msra.mxu0 0
        %656 = vmatprep.subr.bf16.mxu0 0
        %657 = vmatpush1.bf16.msra.mxu0 0
        %658 = vmatprep.subr.bf16.mxu0 0
        %659 = vmatpush1.bf16.msra.mxu0 0
        %660 = vmatprep.subr.bf16.mxu0 0
        %661 = vmatpush1.bf16.msra.mxu0 0
        %662 = vmatprep.subr.bf16.mxu0 0
        %663 = vmatpush1.bf16.msra.mxu0 0
        %664 = vmatprep.subr.bf16.mxu0 0
        %665 = vmatpush1.bf16.msra.mxu0 0
        %666 = vmatprep.subr.bf16.mxu0 0
        %667 = vmatpush1.bf16.msra.mxu0 0
        %668 = vmatprep.mubr.bf16.mxu0 0
        %669 = vmatmul.mubr.bf16.gmra.mrb[0].mxu0 %v634
        %v670 = vpop.f32.mrb[0].mxu0
        %v671 = vadd.f32 0.0, %v670
        %v672 = vpop.f32.mrb[0].mxu0
        %v673 = vpop.f32.mrb[0].mxu0
        %v674 = vadd.f32 0.0, %v673
        %v675 = vpop.f32.mrb[0].mxu0
        %676 = vdwg.mxu0
        %v677 = vadd.f32 %v575, %v671
        %v678 = vadd.f32 %v576, %v674
        %vm679 = vcmp.ge.f32.partialorder %v677, 0.0
        %vm680 = vcmp.ge.f32.partialorder %v678, 0.0
        %v681 = vmul.f32 %v677, 0.2
        %v682 = vmul.f32 %v678, 0.2
        %v683 = vsel %vm679, %v677, %v681
        %v684 = vsel %vm680, %v678, %v682
        %vm685 = vcmask 59392
        %686 = vst.msk [vmem:[#allocation2] sm:$0x7] %vm685, 0
        %687 = vst.msk [vmem:[#allocation2 + $0x4] sm:$0x7] %vm685, 0
        %688 = vst.msk [vmem:[#allocation2 + $0x8] sm:$0x7] %vm685, 0
        %689 = vst.msk [vmem:[#allocation2 + $0xc] sm:$0x7] %vm685, 0
        %690 = vst.msk [vmem:[#allocation2 + $0x10] sm:$0x7] %vm685, 0
        %691 = vst.msk [vmem:[#allocation2 + $0x14] sm:$0x7] %vm685, 0
        %v694 = vcombine.high %v683, %v683
        %v695 = vcombine.high %v684, %v684
        %v698 = vpack.c.bf16 %v683, %v683
        %v699 = vpack.c.bf16 %v694, %v694
        %v700 = vpack.c.bf16 %v684, %v684
        %v701 = vpack.c.bf16 %v695, %v695
        %v706 = vunpack.c.l.b16 %v698
        %v707 = vunpack.c.l.b16 %v699
        %v708 = vunpack.c.l.b16 %v700
        %v709 = vunpack.c.l.b16 %v701
        %v710 = vpack.c.b16 %v706, %v706
        %v711 = vpack.c.b16 %v707, %v707
        %v712 = vpack.c.b16 %v708, %v708
        %v713 = vpack.c.b16 %v709, %v709
        %v715 = vshrl.u32 %v710, 16
        %v717 = vrot.slane %v715, 7
        %v718 = vshll.u32 %v710, 16
        %v720 = vor.u32 %v717, %v718
        %v722 = vshrl.u32 %v711, 16
        %v724 = vrot.slane %v722, 7
        %v725 = vshll.u32 %v711, 16
        %v727 = vor.u32 %v724, %v725
        %v729 = vshrl.u32 %v712, 16
        %v731 = vrot.slane %v729, 7
        %v732 = vshll.u32 %v712, 16
        %v734 = vor.u32 %v731, %v732
        %v736 = vshrl.u32 %v713, 16
        %v738 = vrot.slane %v736, 7
        %v739 = vshll.u32 %v713, 16
        %v741 = vor.u32 %v738, %v739
        %s746 = scalar_lea.vmem [#allocation2], 4
        %vm747 = vcmask 59392
        %vm748 = vsmask.f32 2306
        %vm749 = vmand %vm747, %vm748
        %v750 = vld [vmem:[%s746] sm:$0x7]
        %v751 = vsel %vm749, %v720, %v750
        %752 = vst [vmem:[%s746] sm:$0x7] %v751
        %v753 = vld [vmem:[%s746 + $0x4] sm:$0x7]
        %v754 = vsel %vm749, %v727, %v753
        %755 = vst [vmem:[%s746 + $0x4] sm:$0x7] %v754
        %v756 = vld [vmem:[%s746 + $0x8] sm:$0x7]
        %v757 = vsel %vm749, %v734, %v756
        %758 = vst [vmem:[%s746 + $0x8] sm:$0x7] %v757
        %v759 = vld [vmem:[%s746 + $0xc] sm:$0x7]
        %v760 = vsel %vm749, %v741, %v759
        %761 = vst [vmem:[%s746 + $0xc] sm:$0x7] %v760
        %v762 = vld [vmem:[#allocation2] sm:$0x7]
        %v763 = vld [vmem:[#allocation2 + $0x4] sm:$0x7]
        %v764 = vld [vmem:[#allocation2 + $0x8] sm:$0x7]
        %v765 = vld [vmem:[#allocation2 + $0xc] sm:$0x7]
        %v766 = vld [vmem:[#allocation2 + $0x10] sm:$0x7]
        %v767 = vld [vmem:[#allocation2 + $0x14] sm:$0x7]
        %v768 = vld [vmem:[%s4] sm:$0x1]
        %v770 = vlaneseq
        %v771 = vshrl.u32 %v770, 7
        %v772 = vsub.s32 0, %v771
        %v773 = vrot.slane %v768, %v772
        %v775 = vadd.f32 %v773, 0.0
        %v776 = vld [vmem:[%s3] sm:$0xf]
        %v781 = vcombine.low %v762, %v763
        %v782 = vcombine.low %v764, %v765
        %v784 = vunpack.c.l.s4 1983009808
        %v785 = vunpack.c.0.s8 %v784
        %v786 = vlaneseq
        %v787 = vshrl.u32 %v786, 7
        %v788 = vsub.s32 %v785, %v787
        %v789 = vrot.slane %v781, %v788
        %v791 = vunpack.c.l.s4 1983009808
        %v792 = vunpack.c.0.s8 %v791
        %v793 = vlaneseq
        %v794 = vshrl.u32 %v793, 7
        %v795 = vsub.s32 %v792, %v794
        %v796 = vrot.slane %v782, %v795
        %v797 = vcombine.low %v789, %v796
        %vm798 = vcmask 64512
        %v800 = vsel %vm798, %v797, 0
        %vm802 = vcmask 1043456
        %v804 = vsel %vm802, %v776, 0
        %806 = vmatprep.subr.bf16.mxu0 0
        %807 = vmatpush1.bf16.msra.mxu0 %v804
        %808 = vmatprep.subr.bf16.mxu0 0
        %809 = vmatpush1.bf16.msra.mxu0 0
        %810 = vmatprep.subr.bf16.mxu0 0
        %811 = vmatpush1.bf16.msra.mxu0 0
        %812 = vmatprep.subr.bf16.mxu0 0
        %813 = vmatpush1.bf16.msra.mxu0 0
        %814 = vmatprep.subr.bf16.mxu0 0
        %815 = vmatpush1.bf16.msra.mxu0 0
        %816 = vmatprep.subr.bf16.mxu0 0
        %817 = vmatpush1.bf16.msra.mxu0 0
        %818 = vmatprep.subr.bf16.mxu0 0
        %819 = vmatpush1.bf16.msra.mxu0 0
        %820 = vmatprep.subr.bf16.mxu0 0
        %821 = vmatpush1.bf16.msra.mxu0 0
        %822 = vmatprep.subr.bf16.mxu0 0
        %823 = vmatpush1.bf16.msra.mxu0 0
        %824 = vmatprep.subr.bf16.mxu0 0
        %825 = vmatpush1.bf16.msra.mxu0 0
        %826 = vmatprep.subr.bf16.mxu0 0
        %827 = vmatpush1.bf16.msra.mxu0 0
        %828 = vmatprep.subr.bf16.mxu0 0
        %829 = vmatpush1.bf16.msra.mxu0 0
        %830 = vmatprep.subr.bf16.mxu0 0
        %831 = vmatpush1.bf16.msra.mxu0 0
        %832 = vmatprep.subr.bf16.mxu0 0
        %833 = vmatpush1.bf16.msra.mxu0 0
        %834 = vmatprep.subr.bf16.mxu0 0
        %835 = vmatpush1.bf16.msra.mxu0 0
        %836 = vmatprep.subr.bf16.mxu0 0
        %837 = vmatpush1.bf16.msra.mxu0 0
        %838 = vmatprep.mubr.bf16.mxu0 0
        %839 = vmatmul.mubr.bf16.gmra.mrb[0].mxu0 %v800
        %v840 = vpop.f32.mrb[0].mxu0
        %v841 = vadd.f32 0.0, %v840
        %v842 = vpop.f32.mrb[0].mxu0
        %v843 = vpop.f32.mrb[0].mxu0
        %v844 = vadd.f32 0.0, %v843
        %v845 = vpop.f32.mrb[0].mxu0
        %846 = vdwg.mxu0
        %v847 = vadd.f32 %v775, %v841
        %v848 = vadd.f32 %v775, %v844
        %v850 = vunpack.c.l.s4 1983009808
        %v851 = vunpack.c.0.s8 %v850
        %v852 = vlaneseq
        %v853 = vshrl.u32 %v852, 7
        %v854 = vsub.s32 %v851, %v853
        %v855 = vrot.slane %v762, %v854
        %v856 = vcombine.high %v855, %v855
        %v858 = vunpack.c.l.s4 1983009808
        %v859 = vunpack.c.0.s8 %v858
        %v860 = vlaneseq
        %v861 = vshrl.u32 %v860, 7
        %v862 = vsub.s32 %v859, %v861
        %v863 = vrot.slane %v763, %v862
        %v864 = vcombine.high %v863, %v863
        %v866 = vunpack.c.l.s4 1983009808
        %v867 = vunpack.c.0.s8 %v866
        %v868 = vlaneseq
        %v869 = vshrl.u32 %v868, 7
        %v870 = vsub.s32 %v867, %v869
        %v871 = vrot.slane %v764, %v870
        %v872 = vcombine.high %v871, %v871
        %v874 = vunpack.c.l.s4 1983009808
        %v875 = vunpack.c.0.s8 %v874
        %v876 = vlaneseq
        %v877 = vshrl.u32 %v876, 7
        %v878 = vsub.s32 %v875, %v877
        %v879 = vrot.slane %v765, %v878
        %v880 = vcombine.high %v879, %v879
        %v882 = vshrl.u32 %v855, 16
        %v884 = vrot.slane %v882, 6
        %v885 = vshll.u32 %v855, 16
        %v887 = vrot.slane %v885, 7
        %v888 = vor.u32 %v884, %v887
        %v889 = vrot.slane %v888, 2
        %v891 = vshll.u32 %v856, 16
        %v893 = vrot.slane %v891, 7
        %v894 = vsel %vm359, %v889, %v893
        %v896 = vshrl.u32 %v863, 16
        %v898 = vrot.slane %v896, 6
        %v899 = vshll.u32 %v863, 16
        %v901 = vrot.slane %v899, 7
        %v902 = vor.u32 %v898, %v901
        %v903 = vrot.slane %v902, 2
        %v905 = vshll.u32 %v864, 16
        %v907 = vrot.slane %v905, 7
        %v908 = vsel %vm359, %v903, %v907
        %v910 = vshrl.u32 %v871, 16
        %v912 = vrot.slane %v910, 6
        %v913 = vshll.u32 %v871, 16
        %v915 = vrot.slane %v913, 7
        %v916 = vor.u32 %v912, %v915
        %v917 = vrot.slane %v916, 2
        %v919 = vshll.u32 %v872, 16
        %v921 = vrot.slane %v919, 7
        %v922 = vsel %vm359, %v917, %v921
        %v924 = vshrl.u32 %v879, 16
        %v926 = vrot.slane %v924, 6
        %v927 = vshll.u32 %v879, 16
        %v929 = vrot.slane %v927, 7
        %v930 = vor.u32 %v926, %v929
        %v931 = vrot.slane %v930, 2
        %v933 = vshll.u32 %v880, 16
        %v935 = vrot.slane %v933, 7
        %v936 = vsel %vm359, %v931, %v935
        %s937 = scalar_lea.vmem %s3, 4
        %v938 = vld [vmem:[%s937] sm:$0xf]
        %v939 = vcombine.low %v894, %v908
        %v940 = vcombine.low %v922, %v936
        %v942 = vunpack.c.l.s4 1983009808
        %v943 = vunpack.c.0.s8 %v942
        %v944 = vlaneseq
        %v945 = vshrl.u32 %v944, 7
        %v946 = vsub.s32 %v943, %v945
        %v947 = vrot.slane %v939, %v946
        %v949 = vunpack.c.l.s4 1983009808
        %v950 = vunpack.c.0.s8 %v949
        %v951 = vlaneseq
        %v952 = vshrl.u32 %v951, 7
        %v953 = vsub.s32 %v950, %v952
        %v954 = vrot.slane %v940, %v953
        %v955 = vcombine.low %v947, %v954
        %v957 = vsel %vm798, %v955, 0
        %v960 = vsel %vm802, %v938, 0
        %962 = vmatprep.subr.bf16.mxu0 0
        %963 = vmatpush1.bf16.msra.mxu0 %v960
        %964 = vmatprep.subr.bf16.mxu0 0
        %965 = vmatpush1.bf16.msra.mxu0 0
        %966 = vmatprep.subr.bf16.mxu0 0
        %967 = vmatpush1.bf16.msra.mxu0 0
        %968 = vmatprep.subr.bf16.mxu0 0
        %969 = vmatpush1.bf16.msra.mxu0 0
        %970 = vmatprep.subr.bf16.mxu0 0
        %971 = vmatpush1.bf16.msra.mxu0 0
        %972 = vmatprep.subr.bf16.mxu0 0
        %973 = vmatpush1.bf16.msra.mxu0 0
        %974 = vmatprep.subr.bf16.mxu0 0
        %975 = vmatpush1.bf16.msra.mxu0 0
        %976 = vmatprep.subr.bf16.mxu0 0
        %977 = vmatpush1.bf16.msra.mxu0 0
        %978 = vmatprep.subr.bf16.mxu0 0
        %979 = vmatpush1.bf16.msra.mxu0 0
        %980 = vmatprep.subr.bf16.mxu0 0
        %981 = vmatpush1.bf16.msra.mxu0 0
        %982 = vmatprep.subr.bf16.mxu0 0
        %983 = vmatpush1.bf16.msra.mxu0 0
        %984 = vmatprep.subr.bf16.mxu0 0
        %985 = vmatpush1.bf16.msra.mxu0 0
        %986 = vmatprep.subr.bf16.mxu0 0
        %987 = vmatpush1.bf16.msra.mxu0 0
        %988 = vmatprep.subr.bf16.mxu0 0
        %989 = vmatpush1.bf16.msra.mxu0 0
        %990 = vmatprep.subr.bf16.mxu0 0
        %991 = vmatpush1.bf16.msra.mxu0 0
        %992 = vmatprep.subr.bf16.mxu0 0
        %993 = vmatpush1.bf16.msra.mxu0 0
        %994 = vmatprep.mubr.bf16.mxu0 0
        %995 = vmatmul.mubr.bf16.gmra.mrb[0].mxu0 %v957
        %v996 = vpop.f32.mrb[0].mxu0
        %v997 = vadd.f32 0.0, %v996
        %v998 = vpop.f32.mrb[0].mxu0
        %v999 = vpop.f32.mrb[0].mxu0
        %v1000 = vadd.f32 0.0, %v999
        %v1001 = vpop.f32.mrb[0].mxu0
        %1002 = vdwg.mxu0
        %v1003 = vadd.f32 %v847, %v997
        %v1004 = vadd.f32 %v848, %v1000
        %vm1005 = vcmask 1040384
        %vm1006 = vcmask 1042434
        %vm1007 = vmor %vm1005, %vm1006
        %vm1008 = vcmask 1044484
        %vm1009 = vmor %vm1007, %vm1008
        %vm1010 = vcmask 1046534
        %vm1011 = vmor %vm1009, %vm1010
        %v1012 = vrot.slane %v855, 7
        %v1013 = vrot.slane %v1012, 2
        %v1014 = vrot.slane %v856, 7
        %v1015 = vsel %vm1011, %v1013, %v1014
        %v1016 = vrot.slane %v863, 7
        %v1017 = vrot.slane %v1016, 2
        %v1018 = vrot.slane %v864, 7
        %v1019 = vsel %vm1011, %v1017, %v1018
        %v1020 = vrot.slane %v871, 7
        %v1021 = vrot.slane %v1020, 2
        %v1022 = vrot.slane %v872, 7
        %v1023 = vsel %vm1011, %v1021, %v1022
        %v1024 = vrot.slane %v879, 7
        %v1025 = vrot.slane %v1024, 2
        %v1026 = vrot.slane %v880, 7
        %v1027 = vsel %vm1011, %v1025, %v1026
        %s1028 = scalar_lea.vmem %s3, 8
        %v1029 = vld [vmem:[%s1028] sm:$0xf]
        %v1030 = vcombine.low %v1015, %v1019
        %v1031 = vcombine.low %v1023, %v1027
        %v1033 = vunpack.c.l.s4 1983009808
        %v1034 = vunpack.c.0.s8 %v1033
        %v1035 = vlaneseq
        %v1036 = vshrl.u32 %v1035, 7
        %v1037 = vsub.s32 %v1034, %v1036
        %v1038 = vrot.slane %v1030, %v1037
        %v1040 = vunpack.c.l.s4 1983009808
        %v1041 = vunpack.c.0.s8 %v1040
        %v1042 = vlaneseq
        %v1043 = vshrl.u32 %v1042, 7
        %v1044 = vsub.s32 %v1041, %v1043
        %v1045 = vrot.slane %v1031, %v1044
        %v1046 = vcombine.low %v1038, %v1045
        %v1048 = vsel %vm798, %v1046, 0
        %v1051 = vsel %vm802, %v1029, 0
        %1053 = vmatprep.subr.bf16.mxu0 0
        %1054 = vmatpush1.bf16.msra.mxu0 %v1051
        %1055 = vmatprep.subr.bf16.mxu0 0
        %1056 = vmatpush1.bf16.msra.mxu0 0
        %1057 = vmatprep.subr.bf16.mxu0 0
        %1058 = vmatpush1.bf16.msra.mxu0 0
        %1059 = vmatprep.subr.bf16.mxu0 0
        %1060 = vmatpush1.bf16.msra.mxu0 0
        %1061 = vmatprep.subr.bf16.mxu0 0
        %1062 = vmatpush1.bf16.msra.mxu0 0
        %1063 = vmatprep.subr.bf16.mxu0 0
        %1064 = vmatpush1.bf16.msra.mxu0 0
        %1065 = vmatprep.subr.bf16.mxu0 0
        %1066 = vmatpush1.bf16.msra.mxu0 0
        %1067 = vmatprep.subr.bf16.mxu0 0
        %1068 = vmatpush1.bf16.msra.mxu0 0
        %1069 = vmatprep.subr.bf16.mxu0 0
        %1070 = vmatpush1.bf16.msra.mxu0 0
        %1071 = vmatprep.subr.bf16.mxu0 0
        %1072 = vmatpush1.bf16.msra.mxu0 0
        %1073 = vmatprep.subr.bf16.mxu0 0
        %1074 = vmatpush1.bf16.msra.mxu0 0
        %1075 = vmatprep.subr.bf16.mxu0 0
        %1076 = vmatpush1.bf16.msra.mxu0 0
        %1077 = vmatprep.subr.bf16.mxu0 0
        %1078 = vmatpush1.bf16.msra.mxu0 0
        %1079 = vmatprep.subr.bf16.mxu0 0
        %1080 = vmatpush1.bf16.msra.mxu0 0
        %1081 = vmatprep.subr.bf16.mxu0 0
        %1082 = vmatpush1.bf16.msra.mxu0 0
        %1083 = vmatprep.subr.bf16.mxu0 0
        %1084 = vmatpush1.bf16.msra.mxu0 0
        %1085 = vmatprep.mubr.bf16.mxu0 0
        %1086 = vmatmul.mubr.bf16.gmra.mrb[0].mxu0 %v1048
        %v1087 = vpop.f32.mrb[0].mxu0
        %v1088 = vadd.f32 0.0, %v1087
        %v1089 = vpop.f32.mrb[0].mxu0
        %v1090 = vpop.f32.mrb[0].mxu0
        %v1091 = vadd.f32 0.0, %v1090
        %v1092 = vpop.f32.mrb[0].mxu0
        %1093 = vdwg.mxu0
        %v1094 = vadd.f32 %v1003, %v1088
        %v1095 = vadd.f32 %v1004, %v1091
        %s1096 = scalar_lea.vmem %s3, 12
        %v1097 = vld [vmem:[%s1096] sm:$0xf]
        %v1099 = vcombine.low %v763, %v764
        %v1100 = vcombine.low %v765, %v766
        %v1102 = vunpack.c.l.s4 1983009808
        %v1103 = vunpack.c.0.s8 %v1102
        %v1104 = vlaneseq
        %v1105 = vshrl.u32 %v1104, 7
        %v1106 = vsub.s32 %v1103, %v1105
        %v1107 = vrot.slane %v1099, %v1106
        %v1109 = vunpack.c.l.s4 1983009808
        %v1110 = vunpack.c.0.s8 %v1109
        %v1111 = vlaneseq
        %v1112 = vshrl.u32 %v1111, 7
        %v1113 = vsub.s32 %v1110, %v1112
        %v1114 = vrot.slane %v1100, %v1113
        %v1115 = vcombine.low %v1107, %v1114
        %v1117 = vsel %vm798, %v1115, 0
        %v1120 = vsel %vm802, %v1097, 0
        %1122 = vmatprep.subr.bf16.mxu0 0
        %1123 = vmatpush1.bf16.msra.mxu0 %v1120
        %1124 = vmatprep.subr.bf16.mxu0 0
        %1125 = vmatpush1.bf16.msra.mxu0 0
        %1126 = vmatprep.subr.bf16.mxu0 0
        %1127 = vmatpush1.bf16.msra.mxu0 0
        %1128 = vmatprep.subr.bf16.mxu0 0
        %1129 = vmatpush1.bf16.msra.mxu0 0
        %1130 = vmatprep.subr.bf16.mxu0 0
        %1131 = vmatpush1.bf16.msra.mxu0 0
        %1132 = vmatprep.subr.bf16.mxu0 0
        %1133 = vmatpush1.bf16.msra.mxu0 0
        %1134 = vmatprep.subr.bf16.mxu0 0
        %1135 = vmatpush1.bf16.msra.mxu0 0
        %1136 = vmatprep.subr.bf16.mxu0 0
        %1137 = vmatpush1.bf16.msra.mxu0 0
        %1138 = vmatprep.subr.bf16.mxu0 0
        %1139 = vmatpush1.bf16.msra.mxu0 0
        %1140 = vmatprep.subr.bf16.mxu0 0
        %1141 = vmatpush1.bf16.msra.mxu0 0
        %1142 = vmatprep.subr.bf16.mxu0 0
        %1143 = vmatpush1.bf16.msra.mxu0 0
        %1144 = vmatprep.subr.bf16.mxu0 0
        %1145 = vmatpush1.bf16.msra.mxu0 0
        %1146 = vmatprep.subr.bf16.mxu0 0
        %1147 = vmatpush1.bf16.msra.mxu0 0
        %1148 = vmatprep.subr.bf16.mxu0 0
        %1149 = vmatpush1.bf16.msra.mxu0 0
        %1150 = vmatprep.subr.bf16.mxu0 0
        %1151 = vmatpush1.bf16.msra.mxu0 0
        %1152 = vmatprep.subr.bf16.mxu0 0
        %1153 = vmatpush1.bf16.msra.mxu0 0
        %1154 = vmatprep.mubr.bf16.mxu0 0
        %1155 = vmatmul.mubr.bf16.gmra.mrb[0].mxu0 %v1117
        %v1156 = vpop.f32.mrb[0].mxu0
        %v1157 = vadd.f32 0.0, %v1156
        %v1158 = vpop.f32.mrb[0].mxu0
        %v1159 = vpop.f32.mrb[0].mxu0
        %v1160 = vadd.f32 0.0, %v1159
        %v1161 = vpop.f32.mrb[0].mxu0
        %1162 = vdwg.mxu0
        %v1163 = vadd.f32 %v1094, %v1157
        %v1164 = vadd.f32 %v1095, %v1160
        %v1166 = vunpack.c.l.s4 1983009808
        %v1167 = vunpack.c.0.s8 %v1166
        %v1168 = vlaneseq
        %v1169 = vshrl.u32 %v1168, 7
        %v1170 = vsub.s32 %v1167, %v1169
        %v1171 = vrot.slane %v766, %v1170
        %v1172 = vcombine.high %v1171, %v1171
        %v1174 = vshrl.u32 %v1171, 16
        %v1176 = vrot.slane %v1174, 6
        %v1177 = vshll.u32 %v1171, 16
        %v1179 = vrot.slane %v1177, 7
        %v1180 = vor.u32 %v1176, %v1179
        %v1181 = vrot.slane %v1180, 2
        %v1183 = vshll.u32 %v1172, 16
        %v1185 = vrot.slane %v1183, 7
        %v1186 = vsel %vm359, %v1181, %v1185
        %s1187 = scalar_lea.vmem %s3, 16
        %v1188 = vld [vmem:[%s1187] sm:$0xf]
        %v1189 = vcombine.low %v908, %v922
        %v1190 = vcombine.low %v936, %v1186
        %v1192 = vunpack.c.l.s4 1983009808
        %v1193 = vunpack.c.0.s8 %v1192
        %v1194 = vlaneseq
        %v1195 = vshrl.u32 %v1194, 7
        %v1196 = vsub.s32 %v1193, %v1195
        %v1197 = vrot.slane %v1189, %v1196
        %v1199 = vunpack.c.l.s4 1983009808
        %v1200 = vunpack.c.0.s8 %v1199
        %v1201 = vlaneseq
        %v1202 = vshrl.u32 %v1201, 7
        %v1203 = vsub.s32 %v1200, %v1202
        %v1204 = vrot.slane %v1190, %v1203
        %v1205 = vcombine.low %v1197, %v1204
        %v1207 = vsel %vm798, %v1205, 0
        %v1210 = vsel %vm802, %v1188, 0
        %1212 = vmatprep.subr.bf16.mxu0 0
        %1213 = vmatpush1.bf16.msra.mxu0 %v1210
        %1214 = vmatprep.subr.bf16.mxu0 0
        %1215 = vmatpush1.bf16.msra.mxu0 0
        %1216 = vmatprep.subr.bf16.mxu0 0
        %1217 = vmatpush1.bf16.msra.mxu0 0
        %1218 = vmatprep.subr.bf16.mxu0 0
        %1219 = vmatpush1.bf16.msra.mxu0 0
        %1220 = vmatprep.subr.bf16.mxu0 0
        %1221 = vmatpush1.bf16.msra.mxu0 0
        %1222 = vmatprep.subr.bf16.mxu0 0
        %1223 = vmatpush1.bf16.msra.mxu0 0
        %1224 = vmatprep.subr.bf16.mxu0 0
        %1225 = vmatpush1.bf16.msra.mxu0 0
        %1226 = vmatprep.subr.bf16.mxu0 0
        %1227 = vmatpush1.bf16.msra.mxu0 0
        %1228 = vmatprep.subr.bf16.mxu0 0
        %1229 = vmatpush1.bf16.msra.mxu0 0
        %1230 = vmatprep.subr.bf16.mxu0 0
        %1231 = vmatpush1.bf16.msra.mxu0 0
        %1232 = vmatprep.subr.bf16.mxu0 0
        %1233 = vmatpush1.bf16.msra.mxu0 0
        %1234 = vmatprep.subr.bf16.mxu0 0
        %1235 = vmatpush1.bf16.msra.mxu0 0
        %1236 = vmatprep.subr.bf16.mxu0 0
        %1237 = vmatpush1.bf16.msra.mxu0 0
        %1238 = vmatprep.subr.bf16.mxu0 0
        %1239 = vmatpush1.bf16.msra.mxu0 0
        %1240 = vmatprep.subr.bf16.mxu0 0
        %1241 = vmatpush1.bf16.msra.mxu0 0
        %1242 = vmatprep.subr.bf16.mxu0 0
        %1243 = vmatpush1.bf16.msra.mxu0 0
        %1244 = vmatprep.mubr.bf16.mxu0 0
        %1245 = vmatmul.mubr.bf16.gmra.mrb[0].mxu0 %v1207
        %v1246 = vpop.f32.mrb[0].mxu0
        %v1247 = vadd.f32 0.0, %v1246
        %v1248 = vpop.f32.mrb[0].mxu0
        %v1249 = vpop.f32.mrb[0].mxu0
        %v1250 = vadd.f32 0.0, %v1249
        %v1251 = vpop.f32.mrb[0].mxu0
        %1252 = vdwg.mxu0
        %v1253 = vadd.f32 %v1163, %v1247
        %v1254 = vadd.f32 %v1164, %v1250
        %v1255 = vrot.slane %v1171, 7
        %v1256 = vrot.slane %v1255, 2
        %v1257 = vrot.slane %v1172, 7
        %v1258 = vsel %vm1011, %v1256, %v1257
        %s1259 = scalar_lea.vmem %s3, 20
        %v1260 = vld [vmem:[%s1259] sm:$0xf]
        %v1261 = vcombine.low %v1019, %v1023
        %v1262 = vcombine.low %v1027, %v1258
        %v1264 = vunpack.c.l.s4 1983009808
        %v1265 = vunpack.c.0.s8 %v1264
        %v1266 = vlaneseq
        %v1267 = vshrl.u32 %v1266, 7
        %v1268 = vsub.s32 %v1265, %v1267
        %v1269 = vrot.slane %v1261, %v1268
        %v1271 = vunpack.c.l.s4 1983009808
        %v1272 = vunpack.c.0.s8 %v1271
        %v1273 = vlaneseq
        %v1274 = vshrl.u32 %v1273, 7
        %v1275 = vsub.s32 %v1272, %v1274
        %v1276 = vrot.slane %v1262, %v1275
        %v1277 = vcombine.low %v1269, %v1276
        %v1279 = vsel %vm798, %v1277, 0
        %v1282 = vsel %vm802, %v1260, 0
        %1284 = vmatprep.subr.bf16.mxu0 0
        %1285 = vmatpush1.bf16.msra.mxu0 %v1282
        %1286 = vmatprep.subr.bf16.mxu0 0
        %1287 = vmatpush1.bf16.msra.mxu0 0
        %1288 = vmatprep.subr.bf16.mxu0 0
        %1289 = vmatpush1.bf16.msra.mxu0 0
        %1290 = vmatprep.subr.bf16.mxu0 0
        %1291 = vmatpush1.bf16.msra.mxu0 0
        %1292 = vmatprep.subr.bf16.mxu0 0
        %1293 = vmatpush1.bf16.msra.mxu0 0
        %1294 = vmatprep.subr.bf16.mxu0 0
        %1295 = vmatpush1.bf16.msra.mxu0 0
        %1296 = vmatprep.subr.bf16.mxu0 0
        %1297 = vmatpush1.bf16.msra.mxu0 0
        %1298 = vmatprep.subr.bf16.mxu0 0
        %1299 = vmatpush1.bf16.msra.mxu0 0
        %1300 = vmatprep.subr.bf16.mxu0 0
        %1301 = vmatpush1.bf16.msra.mxu0 0
        %1302 = vmatprep.subr.bf16.mxu0 0
        %1303 = vmatpush1.bf16.msra.mxu0 0
        %1304 = vmatprep.subr.bf16.mxu0 0
        %1305 = vmatpush1.bf16.msra.mxu0 0
        %1306 = vmatprep.subr.bf16.mxu0 0
        %1307 = vmatpush1.bf16.msra.mxu0 0
        %1308 = vmatprep.subr.bf16.mxu0 0
        %1309 = vmatpush1.bf16.msra.mxu0 0
        %1310 = vmatprep.subr.bf16.mxu0 0
        %1311 = vmatpush1.bf16.msra.mxu0 0
        %1312 = vmatprep.subr.bf16.mxu0 0
        %1313 = vmatpush1.bf16.msra.mxu0 0
        %1314 = vmatprep.subr.bf16.mxu0 0
        %1315 = vmatpush1.bf16.msra.mxu0 0
        %1316 = vmatprep.mubr.bf16.mxu0 0
        %1317 = vmatmul.mubr.bf16.gmra.mrb[0].mxu0 %v1279
        %v1318 = vpop.f32.mrb[0].mxu0
        %v1319 = vadd.f32 0.0, %v1318
        %v1320 = vpop.f32.mrb[0].mxu0
        %v1321 = vpop.f32.mrb[0].mxu0
        %v1322 = vadd.f32 0.0, %v1321
        %v1323 = vpop.f32.mrb[0].mxu0
        %1324 = vdwg.mxu0
        %v1325 = vadd.f32 %v1253, %v1319
        %v1326 = vadd.f32 %v1254, %v1322
        %s1327 = scalar_lea.vmem %s3, 24
        %v1328 = vld [vmem:[%s1327] sm:$0xf]
        %v1330 = vcombine.low %v766, %v767
        %v1332 = vunpack.c.l.s4 1983009808
        %v1333 = vunpack.c.0.s8 %v1332
        %v1334 = vlaneseq
        %v1335 = vshrl.u32 %v1334, 7
        %v1336 = vsub.s32 %v1333, %v1335
        %v1337 = vrot.slane %v1330, %v1336
        %v1338 = vcombine.low %v796, %v1337
        %v1340 = vsel %vm798, %v1338, 0
        %v1343 = vsel %vm802, %v1328, 0
        %1345 = vmatprep.subr.bf16.mxu0 0
        %1346 = vmatpush1.bf16.msra.mxu0 %v1343
        %1347 = vmatprep.subr.bf16.mxu0 0
        %1348 = vmatpush1.bf16.msra.mxu0 0
        %1349 = vmatprep.subr.bf16.mxu0 0
        %1350 = vmatpush1.bf16.msra.mxu0 0
        %1351 = vmatprep.subr.bf16.mxu0 0
        %1352 = vmatpush1.bf16.msra.mxu0 0
        %1353 = vmatprep.subr.bf16.mxu0 0
        %1354 = vmatpush1.bf16.msra.mxu0 0
        %1355 = vmatprep.subr.bf16.mxu0 0
        %1356 = vmatpush1.bf16.msra.mxu0 0
        %1357 = vmatprep.subr.bf16.mxu0 0
        %1358 = vmatpush1.bf16.msra.mxu0 0
        %1359 = vmatprep.subr.bf16.mxu0 0
        %1360 = vmatpush1.bf16.msra.mxu0 0
        %1361 = vmatprep.subr.bf16.mxu0 0
        %1362 = vmatpush1.bf16.msra.mxu0 0
        %1363 = vmatprep.subr.bf16.mxu0 0
        %1364 = vmatpush1.bf16.msra.mxu0 0
        %1365 = vmatprep.subr.bf16.mxu0 0
        %1366 = vmatpush1.bf16.msra.mxu0 0
        %1367 = vmatprep.subr.bf16.mxu0 0
        %1368 = vmatpush1.bf16.msra.mxu0 0
        %1369 = vmatprep.subr.bf16.mxu0 0
        %1370 = vmatpush1.bf16.msra.mxu0 0
        %1371 = vmatprep.subr.bf16.mxu0 0
        %1372 = vmatpush1.bf16.msra.mxu0 0
        %1373 = vmatprep.subr.bf16.mxu0 0
        %1374 = vmatpush1.bf16.msra.mxu0 0
        %1375 = vmatprep.subr.bf16.mxu0 0
        %1376 = vmatpush1.bf16.msra.mxu0 0
        %1377 = vmatprep.mubr.bf16.mxu0 0
        %1378 = vmatmul.mubr.bf16.gmra.mrb[0].mxu0 %v1340
        %v1379 = vpop.f32.mrb[0].mxu0
        %v1380 = vadd.f32 0.0, %v1379
        %v1381 = vpop.f32.mrb[0].mxu0
        %v1382 = vpop.f32.mrb[0].mxu0
        %v1383 = vadd.f32 0.0, %v1382
        %v1384 = vpop.f32.mrb[0].mxu0
        %1385 = vdwg.mxu0
        %v1386 = vadd.f32 %v1325, %v1380
        %v1387 = vadd.f32 %v1326, %v1383
        %v1389 = vunpack.c.l.s4 1983009808
        %v1390 = vunpack.c.0.s8 %v1389
        %v1391 = vlaneseq
        %v1392 = vshrl.u32 %v1391, 7
        %v1393 = vsub.s32 %v1390, %v1392
        %v1394 = vrot.slane %v767, %v1393
        %v1395 = vcombine.high %v1394, %v1394
        %v1397 = vshrl.u32 %v1394, 16
        %v1399 = vrot.slane %v1397, 6
        %v1400 = vshll.u32 %v1394, 16
        %v1402 = vrot.slane %v1400, 7
        %v1403 = vor.u32 %v1399, %v1402
        %v1404 = vrot.slane %v1403, 2
        %v1406 = vshll.u32 %v1395, 16
        %v1408 = vrot.slane %v1406, 7
        %v1409 = vsel %vm359, %v1404, %v1408
        %s1410 = scalar_lea.vmem %s3, 28
        %v1411 = vld [vmem:[%s1410] sm:$0xf]
        %v1412 = vcombine.low %v1186, %v1409
        %v1414 = vunpack.c.l.s4 1983009808
        %v1415 = vunpack.c.0.s8 %v1414
        %v1416 = vlaneseq
        %v1417 = vshrl.u32 %v1416, 7
        %v1418 = vsub.s32 %v1415, %v1417
        %v1419 = vrot.slane %v1412, %v1418
        %v1420 = vcombine.low %v954, %v1419
        %v1422 = vsel %vm798, %v1420, 0
        %v1425 = vsel %vm802, %v1411, 0
        %1427 = vmatprep.subr.bf16.mxu0 0
        %1428 = vmatpush1.bf16.msra.mxu0 %v1425
        %1429 = vmatprep.subr.bf16.mxu0 0
        %1430 = vmatpush1.bf16.msra.mxu0 0
        %1431 = vmatprep.subr.bf16.mxu0 0
        %1432 = vmatpush1.bf16.msra.mxu0 0
        %1433 = vmatprep.subr.bf16.mxu0 0
        %1434 = vmatpush1.bf16.msra.mxu0 0
        %1435 = vmatprep.subr.bf16.mxu0 0
        %1436 = vmatpush1.bf16.msra.mxu0 0
        %1437 = vmatprep.subr.bf16.mxu0 0
        %1438 = vmatpush1.bf16.msra.mxu0 0
        %1439 = vmatprep.subr.bf16.mxu0 0
        %1440 = vmatpush1.bf16.msra.mxu0 0
        %1441 = vmatprep.subr.bf16.mxu0 0
        %1442 = vmatpush1.bf16.msra.mxu0 0
        %1443 = vmatprep.subr.bf16.mxu0 0
        %1444 = vmatpush1.bf16.msra.mxu0 0
        %1445 = vmatprep.subr.bf16.mxu0 0
        %1446 = vmatpush1.bf16.msra.mxu0 0
        %1447 = vmatprep.subr.bf16.mxu0 0
        %1448 = vmatpush1.bf16.msra.mxu0 0
        %1449 = vmatprep.subr.bf16.mxu0 0
        %1450 = vmatpush1.bf16.msra.mxu0 0
        %1451 = vmatprep.subr.bf16.mxu0 0
        %1452 = vmatpush1.bf16.msra.mxu0 0
        %1453 = vmatprep.subr.bf16.mxu0 0
        %1454 = vmatpush1.bf16.msra.mxu0 0
        %1455 = vmatprep.subr.bf16.mxu0 0
        %1456 = vmatpush1.bf16.msra.mxu0 0
        %1457 = vmatprep.subr.bf16.mxu0 0
        %1458 = vmatpush1.bf16.msra.mxu0 0
        %1459 = vmatprep.mubr.bf16.mxu0 0
        %1460 = vmatmul.mubr.bf16.gmra.mrb[0].mxu0 %v1422
        %v1461 = vpop.f32.mrb[0].mxu0
        %v1462 = vadd.f32 0.0, %v1461
        %v1463 = vpop.f32.mrb[0].mxu0
        %v1464 = vpop.f32.mrb[0].mxu0
        %v1465 = vadd.f32 0.0, %v1464
        %v1466 = vpop.f32.mrb[0].mxu0
        %1467 = vdwg.mxu0
        %v1468 = vadd.f32 %v1386, %v1462
        %v1469 = vadd.f32 %v1387, %v1465
        %v1470 = vrot.slane %v1394, 7
        %v1471 = vrot.slane %v1470, 2
        %v1472 = vrot.slane %v1395, 7
        %v1473 = vsel %vm1011, %v1471, %v1472
        %s1474 = scalar_lea.vmem %s3, 32
        %v1475 = vld [vmem:[%s1474] sm:$0xf]
        %v1476 = vcombine.low %v1258, %v1473
        %v1478 = vunpack.c.l.s4 1983009808
        %v1479 = vunpack.c.0.s8 %v1478
        %v1480 = vlaneseq
        %v1481 = vshrl.u32 %v1480, 7
        %v1482 = vsub.s32 %v1479, %v1481
        %v1483 = vrot.slane %v1476, %v1482
        %v1484 = vcombine.low %v1045, %v1483
        %v1486 = vsel %vm798, %v1484, 0
        %v1489 = vsel %vm802, %v1475, 0
        %1491 = vmatprep.subr.bf16.mxu0 0
        %1492 = vmatpush1.bf16.msra.mxu0 %v1489
        %1493 = vmatprep.subr.bf16.mxu0 0
        %1494 = vmatpush1.bf16.msra.mxu0 0
        %1495 = vmatprep.subr.bf16.mxu0 0
        %1496 = vmatpush1.bf16.msra.mxu0 0
        %1497 = vmatprep.subr.bf16.mxu0 0
        %1498 = vmatpush1.bf16.msra.mxu0 0
        %1499 = vmatprep.subr.bf16.mxu0 0
        %1500 = vmatpush1.bf16.msra.mxu0 0
        %1501 = vmatprep.subr.bf16.mxu0 0
        %1502 = vmatpush1.bf16.msra.mxu0 0
        %1503 = vmatprep.subr.bf16.mxu0 0
        %1504 = vmatpush1.bf16.msra.mxu0 0
        %1505 = vmatprep.subr.bf16.mxu0 0
        %1506 = vmatpush1.bf16.msra.mxu0 0
        %1507 = vmatprep.subr.bf16.mxu0 0
        %1508 = vmatpush1.bf16.msra.mxu0 0
        %1509 = vmatprep.subr.bf16.mxu0 0
        %1510 = vmatpush1.bf16.msra.mxu0 0
        %1511 = vmatprep.subr.bf16.mxu0 0
        %1512 = vmatpush1.bf16.msra.mxu0 0
        %1513 = vmatprep.subr.bf16.mxu0 0
        %1514 = vmatpush1.bf16.msra.mxu0 0
        %1515 = vmatprep.subr.bf16.mxu0 0
        %1516 = vmatpush1.bf16.msra.mxu0 0
        %1517 = vmatprep.subr.bf16.mxu0 0
        %1518 = vmatpush1.bf16.msra.mxu0 0
        %1519 = vmatprep.subr.bf16.mxu0 0
        %1520 = vmatpush1.bf16.msra.mxu0 0
        %1521 = vmatprep.subr.bf16.mxu0 0
        %1522 = vmatpush1.bf16.msra.mxu0 0
        %1523 = vmatprep.mubr.bf16.mxu0 0
        %1524 = vmatmul.mubr.bf16.gmra.mrb[0].mxu0 %v1486
        %v1525 = vpop.f32.mrb[0].mxu0
        %v1526 = vadd.f32 0.0, %v1525
        %v1527 = vpop.f32.mrb[0].mxu0
        %v1528 = vpop.f32.mrb[0].mxu0
        %v1529 = vadd.f32 0.0, %v1528
        %v1530 = vpop.f32.mrb[0].mxu0
        %1531 = vdwg.mxu0
        %v1532 = vadd.f32 %v1468, %v1526
        %v1533 = vadd.f32 %v1469, %v1529
        %v1534 = vadd.f32 %v1532, %v683
        %v1535 = vadd.f32 %v1533, %v684
        %vm1536 = vcmp.ge.f32.partialorder %v1534, 0.0
        %vm1537 = vcmp.ge.f32.partialorder %v1535, 0.0
        %v1538 = vmul.f32 %v1534, 0.2
        %v1539 = vmul.f32 %v1535, 0.2
        %v1540 = vsel %vm1536, %v1534, %v1538
        %v1541 = vsel %vm1537, %v1535, %v1539
        %v1544 = vcombine.high %v1540, %v1540
        %v1545 = vcombine.high %v1541, %v1541
        %vm1548 = vcmask 60416
        %1549 = vst.msk [vmem:[%s217] sm:$0xf] %vm1548, %v1540
        %1550 = vst.msk [vmem:[%s217 + $0x4] sm:$0xf] %vm1548, %v1544
        %1551 = vst.msk [vmem:[%s217 + $0x8] sm:$0xf] %vm1548, %v1541
        %1552 = vst.msk [vmem:[%s217 + $0xc] sm:$0xf] %vm1548, %v1545
        %s1553 = sand.u32 %s137, 1
        %s1554 = scalar_lea.sflag [#allocation4], %s1553
        %s1555 = sand.u32 %s137, 1
        %s1556 = smul.addr %s1555, 16
        %s1557 = scalar_lea.vmem [#allocation3], %s1556
        // Predicated region
        $region41: #{conv_downsample_forward.3} parent=39 // pred_check
          %p1558 = pneg %p147
        $region42: #{conv_downsample_forward.3} parent=39 // pred_check_branch
          %1560 = sbr.rel (%p1558) target = $region44
        $region43: #{conv_downsample_forward.3} parent=39 // pred_region
          %s1562 = ssub.s32 256, 256
          %1563 = vsyncadd %s1554, %s1562
          %s1564 = smul.addr %s19, 4
          %s1565 = smul.addr %s1564, 64
          %s1566 = scalar_lea.hbm %s5, %s1565
          %s1567 = sshll.u32 %s1557, 4
          %s1568 = int_to_ptr.vmem [resolvable:$true] %s1567
          %1573 = dma.vmem_to_hbm [thread:$0]  %s1568, 256, %s1566, %s1554, 64, 64, 4
        $region44: #{conv_downsample_forward.3} parent=39 // pred_fallthru
          _
      $region40: #{conv_downsample_forward.3} parent=5 // pred_fallthru
        _
      %p1574 = scmp.le.s32.totalorder 2, %s14
      // Predicated region
      $region45: #{conv_downsample_forward.3} parent=5 // pred_check
        %p1575 = pneg %p1574
      $region46: #{conv_downsample_forward.3} parent=5 // pred_check_branch
        %1577 = sbr.rel (%p1575) target = $region48
      $region47: #{conv_downsample_forward.3} parent=5 // pred_region
        %s1578 = ssub.s32 %s14, 2
        // Predicated region
        $region49: #{conv_downsample_forward.3} parent=47 // pred_check
          %p1579 = pneg %p153
        $region50: #{conv_downsample_forward.3} parent=47 // pred_check_branch
          %1581 = sbr.rel (%p1579) target = $region52
        $region51: #{conv_downsample_forward.3} parent=47 // pred_region
          %s1582 = sand.u32 %s138, 1
          %s1583 = scalar_lea.sflag [#allocation4], %s1582
          %s1584 = sand.u32 %s138, 1
          %s1585 = smul.addr %s1584, 16
          %s1586 = scalar_lea.vmem [#allocation3], %s1585
          %1587 = dma.done %s1583, 256
        $region52: #{conv_downsample_forward.3} parent=47 // pred_fallthru
          _
      $region48: #{conv_downsample_forward.3} parent=5 // pred_fallthru
        _
    $region6: #{conv_downsample_forward.3} parent=1 // loop_footer
      %s18 = sadd.s32 1, %s14
    $region7: #{conv_downsample_forward.3} parent=1 // loop_footer_branch
      %13 = sbr.rel target = $region3
    $region8: #{conv_downsample_forward.3} parent=1 // loop_exit
      _
    %1588 = vsyncpa [#allocation4], 1
    %s1589 = scalar_lea.sflag [#allocation4], 1
    %1590 = vsyncpa %s1589, 1

// kernel: conv_downsample_forward.2
$region0: #{conv_downsample_forward.2}
  #allocation0 [shape = 'u32[]', space=smem, size = 0x4, offset = 0x4, fixed_abs, tag = 'smem constant byte address 0x4 - core index']
  #allocation1 [shape = 'u32[144,128]{1,0:T(1,128)}', space=vmem, size = 0x12000, scoped, tag = 'internal scratch']
  #allocation2 [shape = 'bf16[10,10,8]{2,1,0:T(8,128)(2,1)}', space=vmem, size = 0xa000, scoped, tag = 'scratch operand']
  %s0 = inlined_call_operand.vmem [shape: bf16[2,9,9,16], index: 0, kind: input, shape index: {}]
  %s1 = inlined_call_operand.vmem [shape: bf16[4,16,8], index: 1, kind: input, shape index: {}]
  %s2 = inlined_call_operand.vmem [shape: f32[1,8], index: 2, kind: input, shape index: {}]
  %s3 = inlined_call_operand.vmem [shape: bf16[9,8,8], index: 3, kind: input, shape index: {}]
  %s4 = inlined_call_operand.vmem [shape: f32[1,8], index: 4, kind: input, shape index: {}]
  %s5 = inlined_call_operand.vmem [shape: bf16[2,8,8,8], index: 5, kind: output, shape index: {}]
  %s6 = sld [smem:[#allocation0]]
  $region53: #{conv_downsample_forward.2} parent=0
    _
  %s8 = ssub.s32 1, %s6
  %s9 = scalar_select 0, %s8, %s6
  loop: start=0, step=1, limit=4
  $region2: #{conv_downsample_forward.2} parent=0 // loop_pre_header
    _
  $region3: #{conv_downsample_forward.2} parent=0 // loop_header
    %s11 = sphi 0, %s15
    %p12 = scmp.ge.s32.totalorder %s11, 4
    %s21 = sphi 0, %s23
    %s24 = sphi 0, %s21
    %s25 = sphi 0, %s24
    %s41 = sphi 0, %s25
    %s45 = sphi 0, %s45
    %s47 = sphi 0, %s45
    %s48 = sphi 0, %s47
    %s62 = sphi 0, %s48
    %s66 = sphi 0, %s66
    %s68 = sphi 0, %s66
    %s69 = sphi 0, %s68
    %s83 = sphi 0, %s69
    %s87 = sphi 0, %s87
    %s89 = sphi 0, %s87
    %s90 = sphi 0, %s89
    %s104 = sphi 0, %s90
    %s108 = sphi 0, %s108
    %s110 = sphi 0, %s108
    %s111 = sphi 0, %s110
    %s125 = sphi 0, %s111
    %s131 = sphi 0, %s133
    %s134 = sphi 0, %s131
    %s135 = sphi 0, %s134
    %s151 = sphi 0, %s135
  $region4: #{conv_downsample_forward.2} parent=0 // loop_header_branch
    %14 = sbr.rel (%p12) target = $region8
  $region5: #{conv_downsample_forward.2} parent=0 // loop_body
    %s16 = ssub.s32 %s11, 1
    %s17 = ssub.s32 %s11, 2
    %s18 = sadd.s32 %s11, 1
    %s19 = ssub.s32 %s11, %s18
    %p20 = scmp.eq.s32.totalorder %s19, 0
    %s22 = sadd.s32 %s21, 1
    %s23 = scalar_select %p20, %s21, %s22
    %p26 = pneg %p20
    %p27 = scmp.eq.s32.totalorder %s11, 1
    %p28 = por %p26, %p27
    %p29 = scmp.ne.s32.totalorder %s21, %s24
    %p30 = scmp.eq.s32.totalorder %s11, 0
    %p31 = por %p29, %p30
    %p32 = scmp.ne.s32.totalorder %s21, %s24
    %p33 = scmp.eq.s32.totalorder %s16, 1
    %p34 = por %p32, %p33
    %p35 = scmp.ne.s32.totalorder %s24, %s25
    %p36 = scmp.eq.s32.totalorder %s16, 0
    %p37 = por %p35, %p36
    %p38 = scmp.ne.s32.totalorder %s24, %s25
    %p39 = scmp.eq.s32.totalorder %s17, 1
    %p40 = por %p38, %p39
    %p42 = scmp.ne.s32.totalorder %s25, %s41
    %p43 = scmp.eq.s32.totalorder %s17, 0
    %p44 = por %p42, %p43
    %s46 = sadd.s32 %s45, 1
    %p49 = scmp.eq.s32.totalorder %s11, 1
    %p50 = scmp.ne.s32.totalorder %s45, %s47
    %p51 = scmp.eq.s32.totalorder %s11, 0
    %p52 = por %p50, %p51
    %p53 = scmp.ne.s32.totalorder %s45, %s47
    %p54 = scmp.eq.s32.totalorder %s16, 1
    %p55 = por %p53, %p54
    %p56 = scmp.ne.s32.totalorder %s47, %s48
    %p57 = scmp.eq.s32.totalorder %s16, 0
    %p58 = por %p56, %p57
    %p59 = scmp.ne.s32.totalorder %s47, %s48
    %p60 = scmp.eq.s32.totalorder %s17, 1
    %p61 = por %p59, %p60
    %p63 = scmp.ne.s32.totalorder %s48, %s62
    %p64 = scmp.eq.s32.totalorder %s17, 0
    %p65 = por %p63, %p64
    %s67 = sadd.s32 %s66, 1
    %p70 = scmp.eq.s32.totalorder %s11, 1
    %p71 = scmp.ne.s32.totalorder %s66, %s68
    %p72 = scmp.eq.s32.totalorder %s11, 0
    %p73 = por %p71, %p72
    %p74 = scmp.ne.s32.totalorder %s66, %s68
    %p75 = scmp.eq.s32.totalorder %s16, 1
    %p76 = por %p74, %p75
    %p77 = scmp.ne.s32.totalorder %s68, %s69
    %p78 = scmp.eq.s32.totalorder %s16, 0
    %p79 = por %p77, %p78
    %p80 = scmp.ne.s32.totalorder %s68, %s69
    %p81 = scmp.eq.s32.totalorder %s17, 1
    %p82 = por %p80, %p81
    %p84 = scmp.ne.s32.totalorder %s69, %s83
    %p85 = scmp.eq.s32.totalorder %s17, 0
    %p86 = por %p84, %p85
    %s88 = sadd.s32 %s87, 1
    %p91 = scmp.eq.s32.totalorder %s11, 1
    %p92 = scmp.ne.s32.totalorder %s87, %s89
    %p93 = scmp.eq.s32.totalorder %s11, 0
    %p94 = por %p92, %p93
    %p95 = scmp.ne.s32.totalorder %s87, %s89
    %p96 = scmp.eq.s32.totalorder %s16, 1
    %p97 = por %p95, %p96
    %p98 = scmp.ne.s32.totalorder %s89, %s90
    %p99 = scmp.eq.s32.totalorder %s16, 0
    %p100 = por %p98, %p99
    %p101 = scmp.ne.s32.totalorder %s89, %s90
    %p102 = scmp.eq.s32.totalorder %s17, 1
    %p103 = por %p101, %p102
    %p105 = scmp.ne.s32.totalorder %s90, %s104
    %p106 = scmp.eq.s32.totalorder %s17, 0
    %p107 = por %p105, %p106
    %s109 = sadd.s32 %s108, 1
    %p112 = scmp.eq.s32.totalorder %s11, 1
    %p113 = scmp.ne.s32.totalorder %s108, %s110
    %p114 = scmp.eq.s32.totalorder %s11, 0
    %p115 = por %p113, %p114
    %p116 = scmp.ne.s32.totalorder %s108, %s110
    %p117 = scmp.eq.s32.totalorder %s16, 1
    %p118 = por %p116, %p117
    %p119 = scmp.ne.s32.totalorder %s110, %s111
    %p120 = scmp.eq.s32.totalorder %s16, 0
    %p121 = por %p119, %p120
    %p122 = scmp.ne.s32.totalorder %s110, %s111
    %p123 = scmp.eq.s32.totalorder %s17, 1
    %p124 = por %p122, %p123
    %p126 = scmp.ne.s32.totalorder %s111, %s125
    %p127 = scmp.eq.s32.totalorder %s17, 0
    %p128 = por %p126, %p127
    %s129 = ssub.s32 %s11, %s18
    %p130 = scmp.eq.s32.totalorder %s129, 0
    %s132 = sadd.s32 %s131, 1
    %s133 = scalar_select %p130, %s131, %s132
    %p136 = pneg %p130
    %p137 = scmp.eq.s32.totalorder %s11, 1
    %p138 = por %p136, %p137
    %p139 = scmp.ne.s32.totalorder %s131, %s134
    %p140 = scmp.eq.s32.totalorder %s11, 0
    %p141 = por %p139, %p140
    %p142 = scmp.ne.s32.totalorder %s131, %s134
    %p143 = scmp.eq.s32.totalorder %s16, 1
    %p144 = por %p142, %p143
    %p145 = scmp.ne.s32.totalorder %s134, %s135
    %p146 = scmp.eq.s32.totalorder %s16, 0
    %p147 = por %p145, %p146
    %p148 = scmp.ne.s32.totalorder %s134, %s135
    %p149 = scmp.eq.s32.totalorder %s17, 1
    %p150 = por %p148, %p149
    %p152 = scmp.ne.s32.totalorder %s135, %s151
    %p153 = scmp.eq.s32.totalorder %s17, 0
    %p154 = por %p152, %p153
    %p155 = scmp.le.s32.totalorder 1, %s11
    %p156 = scmp.lt.s32.totalorder %s11, 3
    %p157 = pnand %p155, %p156
    %p158 = pneg %p157
    // Predicated region
    $region9: #{conv_downsample_forward.2} parent=5 // pred_check
      _
    $region10: #{conv_downsample_forward.2} parent=5 // pred_check_branch
      %160 = sbr.rel (%p157) target = $region12
    $region11: #{conv_downsample_forward.2} parent=5 // pred_region
      %s161 = ssub.s32 %s11, 1
      // Predicated region
      $region13: #{conv_downsample_forward.2} parent=11 // pred_check
        %p162 = pneg %p58
      $region14: #{conv_downsample_forward.2} parent=11 // pred_check_branch
        %164 = sbr.rel (%p162) target = $region16
      $region15: #{conv_downsample_forward.2} parent=11 // pred_region
        _
      $region16: #{conv_downsample_forward.2} parent=11 // pred_fallthru
        _
      // Predicated region
      $region17: #{conv_downsample_forward.2} parent=11 // pred_check
        %p165 = pneg %p79
      $region18: #{conv_downsample_forward.2} parent=11 // pred_check_branch
        %167 = sbr.rel (%p165) target = $region20
      $region19: #{conv_downsample_forward.2} parent=11 // pred_region
        _
      $region20: #{conv_downsample_forward.2} parent=11 // pred_fallthru
        _
      // Predicated region
      $region21: #{conv_downsample_forward.2} parent=11 // pred_check
        %p168 = pneg %p100
      $region22: #{conv_downsample_forward.2} parent=11 // pred_check_branch
        %170 = sbr.rel (%p168) target = $region24
      $region23: #{conv_downsample_forward.2} parent=11 // pred_region
        _
      $region24: #{conv_downsample_forward.2} parent=11 // pred_fallthru
        _
      // Predicated region
      $region25: #{conv_downsample_forward.2} parent=11 // pred_check
        %p171 = pneg %p121
      $region26: #{conv_downsample_forward.2} parent=11 // pred_check_branch
        %173 = sbr.rel (%p171) target = $region28
      $region27: #{conv_downsample_forward.2} parent=11 // pred_region
        _
      $region28: #{conv_downsample_forward.2} parent=11 // pred_fallthru
        _
    $region12: #{conv_downsample_forward.2} parent=5 // pred_fallthru
      _
    %p174 = scmp.lt.s32.totalorder %s11, 2
    // Predicated region
    $region29: #{conv_downsample_forward.2} parent=5 // pred_check
      %p175 = pneg %p174
    $region30: #{conv_downsample_forward.2} parent=5 // pred_check_branch
      %177 = sbr.rel (%p175) target = $region32
    $region31: #{conv_downsample_forward.2} parent=5 // pred_region
      // Predicated region
      $region33: #{conv_downsample_forward.2} parent=31 // pred_check
        %p178 = pneg %p31
      $region34: #{conv_downsample_forward.2} parent=31 // pred_check_branch
        %180 = sbr.rel (%p178) target = $region36
      $region35: #{conv_downsample_forward.2} parent=31 // pred_region
        %p181 = scmp.lt.s32.totalorder %s11, 1
        %s182 = scalar_select %p181, %s11, 1
        %s183 = smul.addr %s182, 18
        %s184 = smul.addr %s183, 4
        %s185 = scalar_lea.vmem %s0, %s184
      $region36: #{conv_downsample_forward.2} parent=31 // pred_fallthru
        _
    $region32: #{conv_downsample_forward.2} parent=5 // pred_fallthru
      _
    %p186 = scmp.le.s32.totalorder 1, %s11
    %p187 = scmp.lt.s32.totalorder %s11, 3
    %p188 = pnand %p186, %p187
    %p189 = pneg %p188
    // Predicated region
    $region37: #{conv_downsample_forward.2} parent=5 // pred_check
      _
    $region38: #{conv_downsample_forward.2} parent=5 // pred_check_branch
      %191 = sbr.rel (%p188) target = $region40
    $region39: #{conv_downsample_forward.2} parent=5 // pred_region
      %s192 = ssub.s32 %s11, 1
      %p193 = scmp.lt.s32.totalorder %s16, 1
      %s194 = scalar_select %p193, %s16, 1
      %s195 = smul.addr %s194, 18
      %s196 = smul.addr %s195, 4
      %s197 = scalar_lea.vmem %s0, %s196
      %p198 = pneg %p37
      %p199 = pneg %p34
      %p200 = pneg %p58
      %p201 = pneg %p55
      %p202 = pneg %p79
      %p203 = pneg %p76
      %p204 = pneg %p100
      %p205 = pneg %p97
      %p206 = pneg %p121
      %p207 = pneg %p118
      %p208 = pneg %p147
      %p209 = pneg %p144
      %p210 = scmp.lt.s32.totalorder %s16, 1
      %s211 = scalar_select %p210, %s16, 1
      %s212 = smul.addr %s211, 8
      %s213 = smul.addr %s212, 4
      %s214 = scalar_lea.vmem %s5, %s213
      %p215 = scmp.lt.s32.totalorder %s16, 1
      %s216 = scalar_select %p215, %s16, 1
      %s217 = smul.addr %s216, 18
      %s218 = smul.addr %s217, 4
      %s219 = scalar_lea.vmem %s0, %s218
      %p220 = scmp.lt.s32.totalorder %s16, 1
      %s221 = scalar_select %p220, %s16, 1
      %s222 = smul.addr %s221, 8
      %s223 = smul.addr %s222, 4
      %s224 = scalar_lea.vmem %s5, %s223
      %v226 = vld [vmem:[%s219] sm:$0xf]
      %v227 = vld [vmem:[%s219 + $0x4] sm:$0x1]
      %v228 = vld [vmem:[%s219 + $0x8] sm:$0xf]
      %v229 = vld [vmem:[%s219 + $0xc] sm:$0x1]
      %v230 = vld [vmem:[%s219 + $0x10] sm:$0xf]
      %v231 = vld [vmem:[%s219 + $0x14] sm:$0x1]
      %v232 = vld [vmem:[%s219 + $0x18] sm:$0xf]
      %v233 = vld [vmem:[%s219 + $0x1c] sm:$0x1]
      %v234 = vld [vmem:[%s219 + $0x20] sm:$0xf]
      %v235 = vld [vmem:[%s219 + $0x24] sm:$0x1]
      %v236 = vld [vmem:[%s219 + $0x28] sm:$0xf]
      %v237 = vld [vmem:[%s219 + $0x2c] sm:$0x1]
      %v238 = vld [vmem:[%s219 + $0x30] sm:$0xf]
      %v239 = vld [vmem:[%s219 + $0x34] sm:$0x1]
      %v240 = vld [vmem:[%s219 + $0x38] sm:$0xf]
      %v241 = vld [vmem:[%s219 + $0x3c] sm:$0x1]
      %v242 = vld [vmem:[%s219 + $0x40] sm:$0xf]
      %v243 = vld [vmem:[%s219 + $0x44] sm:$0x1]
      %v244 = vld [vmem:[%s2] sm:$0x1]
      %v246 = vlaneseq
      %v247 = vshrl.u32 %v246, 7
      %v248 = vsub.s32 0, %v247
      %v249 = vrot.slane %v244, %v248
      %v251 = vadd.f32 %v249, 0.0
      %v252 = vld [vmem:[%s1] sm:$0xf]
      %v253 = vld [vmem:[%s1 + $0x4] sm:$0xf]
      %v262 = vunpack.c.l.b16 %v226
      %v263 = vunpack.c.l.b16 %v228
      %v264 = vunpack.c.l.b16 %v230
      %v265 = vunpack.c.l.b16 %v232
      %v266 = vunpack.c.l.b16 %v234
      %v267 = vunpack.c.l.b16 %v236
      %v268 = vunpack.c.l.b16 %v238
      %v269 = vunpack.c.l.b16 %v240
      %v270 = vpack.c.b16 %v263, %v262
      %v271 = vpack.c.b16 %v265, %v264
      %v272 = vpack.c.b16 %v267, %v266
      %v273 = vpack.c.b16 %v269, %v268
      %v276 = vunpack.c.l.b16 %v252
      %v277 = vunpack.c.l.b16 %v253
      %v278 = vpack.c.b16 %v277, %v276
      %vm280 = vcmask 130048
      %v282 = vsel %vm280, %v270, 0
      %v285 = vsel %vm280, %v271, 0
      %v288 = vsel %vm280, %v272, 0
      %v291 = vsel %vm280, %v273, 0
      %293 = vmatprep.subr.bf16.mxu0 0
      %294 = vmatpush1.bf16.msra.mxu0 %v278
      %295 = vmatprep.subr.bf16.mxu0 0
      %296 = vmatpush1.bf16.msra.mxu0 0
      %297 = vmatprep.subr.bf16.mxu0 0
      %298 = vmatpush1.bf16.msra.mxu0 0
      %299 = vmatprep.subr.bf16.mxu0 0
      %300 = vmatpush1.bf16.msra.mxu0 0
      %301 = vmatprep.subr.bf16.mxu0 0
      %302 = vmatpush1.bf16.msra.mxu0 0
      %303 = vmatprep.subr.bf16.mxu0 0
      %304 = vmatpush1.bf16.msra.mxu0 0
      %305 = vmatprep.subr.bf16.mxu0 0
      %306 = vmatpush1.bf16.msra.mxu0 0
      %307 = vmatprep.subr.bf16.mxu0 0
      %308 = vmatpush1.bf16.msra.mxu0 0
      %309 = vmatprep.subr.bf16.mxu0 0
      %310 = vmatpush1.bf16.msra.mxu0 0
      %311 = vmatprep.subr.bf16.mxu0 0
      %312 = vmatpush1.bf16.msra.mxu0 0
      %313 = vmatprep.subr.bf16.mxu0 0
      %314 = vmatpush1.bf16.msra.mxu0 0
      %315 = vmatprep.subr.bf16.mxu0 0
      %316 = vmatpush1.bf16.msra.mxu0 0
      %317 = vmatprep.subr.bf16.mxu0 0
      %318 = vmatpush1.bf16.msra.mxu0 0
      %319 = vmatprep.subr.bf16.mxu0 0
      %320 = vmatpush1.bf16.msra.mxu0 0
      %321 = vmatprep.subr.bf16.mxu0 0
      %322 = vmatpush1.bf16.msra.mxu0 0
      %323 = vmatprep.subr.bf16.mxu0 0
      %324 = vmatpush1.bf16.msra.mxu0 0
      %325 = vmatprep.mubr.bf16.mxu0 0
      %326 = vmatmul.mubr.bf16.gmra.mrb[0].mxu0 %v282
      %v327 = vpop.f32.mrb[0].mxu0
      %v328 = vadd.f32 0.0, %v327
      %v329 = vpop.f32.mrb[0].mxu0
      %v330 = vpop.f32.mrb[0].mxu0
      %v331 = vadd.f32 0.0, %v330
      %v332 = vpop.f32.mrb[0].mxu0
      %333 = vmatprep.mubr.bf16.mxu0 0
      %334 = vmatmul.mubr.bf16.gmra.mrb[0].mxu0 %v285
      %v335 = vpop.f32.mrb[0].mxu0
      %v336 = vadd.f32 0.0, %v335
      %v337 = vpop.f32.mrb[0].mxu0
      %v338 = vpop.f32.mrb[0].mxu0
      %v339 = vadd.f32 0.0, %v338
      %v340 = vpop.f32.mrb[0].mxu0
      %341 = vmatprep.mubr.bf16.mxu0 0
      %342 = vmatmul.mubr.bf16.gmra.mrb[0].mxu0 %v288
      %v343 = vpop.f32.mrb[0].mxu0
      %v344 = vadd.f32 0.0, %v343
      %v345 = vpop.f32.mrb[0].mxu0
      %v346 = vpop.f32.mrb[0].mxu0
      %v347 = vadd.f32 0.0, %v346
      %v348 = vpop.f32.mrb[0].mxu0
      %349 = vmatprep.mubr.bf16.mxu0 0
      %350 = vmatmul.mubr.bf16.gmra.mrb[0].mxu0 %v291
      %v351 = vpop.f32.mrb[0].mxu0
      %v352 = vadd.f32 0.0, %v351
      %v353 = vpop.f32.mrb[0].mxu0
      %v354 = vpop.f32.mrb[0].mxu0
      %v355 = vadd.f32 0.0, %v354
      %v356 = vpop.f32.mrb[0].mxu0
      %357 = vdwg.mxu0
      %v358 = vadd.f32 %v251, %v328
      %v359 = vadd.f32 %v251, %v331
      %v360 = vadd.f32 %v251, %v336
      %v361 = vadd.f32 %v251, %v339
      %v362 = vadd.f32 %v251, %v344
      %v363 = vadd.f32 %v251, %v347
      %v364 = vadd.f32 %v251, %v352
      %v365 = vadd.f32 %v251, %v355
      %vm366 = vsmask.f32 3328
      %vm367 = vsmask.f32 7440
      %vm368 = vmor %vm366, %vm367
      %v370 = vshrl.u32 %v226, 16
      %v372 = vrot.slane %v370, 4
      %v373 = vshll.u32 %v226, 16
      %v375 = vrot.slane %v373, 5
      %v376 = vor.u32 %v372, %v375
      %v377 = vrot.slane %v376, 4
      %v379 = vshll.u32 %v227, 16
      %v381 = vrot.slane %v379, 5
      %v382 = vsel %vm368, %v377, %v381
      %v384 = vshrl.u32 %v228, 16
      %v386 = vrot.slane %v384, 4
      %v387 = vshll.u32 %v228, 16
      %v389 = vrot.slane %v387, 5
      %v390 = vor.u32 %v386, %v389
      %v391 = vrot.slane %v390, 4
      %v393 = vshll.u32 %v229, 16
      %v395 = vrot.slane %v393, 5
      %v396 = vsel %vm368, %v391, %v395
      %v398 = vshrl.u32 %v230, 16
      %v400 = vrot.slane %v398, 4
      %v401 = vshll.u32 %v230, 16
      %v403 = vrot.slane %v401, 5
      %v404 = vor.u32 %v400, %v403
      %v405 = vrot.slane %v404, 4
      %v407 = vshll.u32 %v231, 16
      %v409 = vrot.slane %v407, 5
      %v410 = vsel %vm368, %v405, %v409
      %v412 = vshrl.u32 %v232, 16
      %v414 = vrot.slane %v412, 4
      %v415 = vshll.u32 %v232, 16
      %v417 = vrot.slane %v415, 5
      %v418 = vor.u32 %v414, %v417
      %v419 = vrot.slane %v418, 4
      %v421 = vshll.u32 %v233, 16
      %v423 = vrot.slane %v421, 5
      %v424 = vsel %vm368, %v419, %v423
      %v426 = vshrl.u32 %v234, 16
      %v428 = vrot.slane %v426, 4
      %v429 = vshll.u32 %v234, 16
      %v431 = vrot.slane %v429, 5
      %v432 = vor.u32 %v428, %v431
      %v433 = vrot.slane %v432, 4
      %v435 = vshll.u32 %v235, 16
      %v437 = vrot.slane %v435, 5
      %v438 = vsel %vm368, %v433, %v437
      %v440 = vshrl.u32 %v236, 16
      %v442 = vrot.slane %v440, 4
      %v443 = vshll.u32 %v236, 16
      %v445 = vrot.slane %v443, 5
      %v446 = vor.u32 %v442, %v445
      %v447 = vrot.slane %v446, 4
      %v449 = vshll.u32 %v237, 16
      %v451 = vrot.slane %v449, 5
      %v452 = vsel %vm368, %v447, %v451
      %v454 = vshrl.u32 %v238, 16
      %v456 = vrot.slane %v454, 4
      %v457 = vshll.u32 %v238, 16
      %v459 = vrot.slane %v457, 5
      %v460 = vor.u32 %v456, %v459
      %v461 = vrot.slane %v460, 4
      %v463 = vshll.u32 %v239, 16
      %v465 = vrot.slane %v463, 5
      %v466 = vsel %vm368, %v461, %v465
      %v468 = vshrl.u32 %v240, 16
      %v470 = vrot.slane %v468, 4
      %v471 = vshll.u32 %v240, 16
      %v473 = vrot.slane %v471, 5
      %v474 = vor.u32 %v470, %v473
      %v475 = vrot.slane %v474, 4
      %v477 = vshll.u32 %v241, 16
      %v479 = vrot.slane %v477, 5
      %v480 = vsel %vm368, %v475, %v479
      %s481 = scalar_lea.vmem %s1, 8
      %v482 = vld [vmem:[%s481] sm:$0xf]
      %v483 = vld [vmem:[%s481 + $0x4] sm:$0xf]
      %v484 = vunpack.c.l.b16 %v382
      %v485 = vunpack.c.l.b16 %v396
      %v486 = vunpack.c.l.b16 %v410
      %v487 = vunpack.c.l.b16 %v424
      %v488 = vunpack.c.l.b16 %v438
      %v489 = vunpack.c.l.b16 %v452
      %v490 = vunpack.c.l.b16 %v466
      %v491 = vunpack.c.l.b16 %v480
      %v492 = vpack.c.b16 %v485, %v484
      %v493 = vpack.c.b16 %v487, %v486
      %v494 = vpack.c.b16 %v489, %v488
      %v495 = vpack.c.b16 %v491, %v490
      %v498 = vunpack.c.l.b16 %v482
      %v499 = vunpack.c.l.b16 %v483
      %v500 = vpack.c.b16 %v499, %v498
      %v503 = vsel %vm280, %v492, 0
      %v506 = vsel %vm280, %v493, 0
      %v509 = vsel %vm280, %v494, 0
      %v512 = vsel %vm280, %v495, 0
      %514 = vmatprep.subr.bf16.mxu0 0
      %515 = vmatpush1.bf16.msra.mxu0 %v500
      %516 = vmatprep.subr.bf16.mxu0 0
      %517 = vmatpush1.bf16.msra.mxu0 0
      %518 = vmatprep.subr.bf16.mxu0 0
      %519 = vmatpush1.bf16.msra.mxu0 0
      %520 = vmatprep.subr.bf16.mxu0 0
      %521 = vmatpush1.bf16.msra.mxu0 0
      %522 = vmatprep.subr.bf16.mxu0 0
      %523 = vmatpush1.bf16.msra.mxu0 0
      %524 = vmatprep.subr.bf16.mxu0 0
      %525 = vmatpush1.bf16.msra.mxu0 0
      %526 = vmatprep.subr.bf16.mxu0 0
      %527 = vmatpush1.bf16.msra.mxu0 0
      %528 = vmatprep.subr.bf16.mxu0 0
      %529 = vmatpush1.bf16.msra.mxu0 0
      %530 = vmatprep.subr.bf16.mxu0 0
      %531 = vmatpush1.bf16.msra.mxu0 0
      %532 = vmatprep.subr.bf16.mxu0 0
      %533 = vmatpush1.bf16.msra.mxu0 0
      %534 = vmatprep.subr.bf16.mxu0 0
      %535 = vmatpush1.bf16.msra.mxu0 0
      %536 = vmatprep.subr.bf16.mxu0 0
      %537 = vmatpush1.bf16.msra.mxu0 0
      %538 = vmatprep.subr.bf16.mxu0 0
      %539 = vmatpush1.bf16.msra.mxu0 0
      %540 = vmatprep.subr.bf16.mxu0 0
      %541 = vmatpush1.bf16.msra.mxu0 0
      %542 = vmatprep.subr.bf16.mxu0 0
      %543 = vmatpush1.bf16.msra.mxu0 0
      %544 = vmatprep.subr.bf16.mxu0 0
      %545 = vmatpush1.bf16.msra.mxu0 0
      %546 = vmatprep.mubr.bf16.mxu0 0
      %547 = vmatmul.mubr.bf16.gmra.mrb[0].mxu0 %v503
      %v548 = vpop.f32.mrb[0].mxu0
      %v549 = vadd.f32 0.0, %v548
      %v550 = vpop.f32.mrb[0].mxu0
      %v551 = vpop.f32.mrb[0].mxu0
      %v552 = vadd.f32 0.0, %v551
      %v553 = vpop.f32.mrb[0].mxu0
      %554 = vmatprep.mubr.bf16.mxu0 0
      %555 = vmatmul.mubr.bf16.gmra.mrb[0].mxu0 %v506
      %v556 = vpop.f32.mrb[0].mxu0
      %v557 = vadd.f32 0.0, %v556
      %v558 = vpop.f32.mrb[0].mxu0
      %v559 = vpop.f32.mrb[0].mxu0
      %v560 = vadd.f32 0.0, %v559
      %v561 = vpop.f32.mrb[0].mxu0
      %562 = vmatprep.mubr.bf16.mxu0 0
      %563 = vmatmul.mubr.bf16.gmra.mrb[0].mxu0 %v509
      %v564 = vpop.f32.mrb[0].mxu0
      %v565 = vadd.f32 0.0, %v564
      %v566 = vpop.f32.mrb[0].mxu0
      %v567 = vpop.f32.mrb[0].mxu0
      %v568 = vadd.f32 0.0, %v567
      %v569 = vpop.f32.mrb[0].mxu0
      %570 = vmatprep.mubr.bf16.mxu0 0
      %571 = vmatmul.mubr.bf16.gmra.mrb[0].mxu0 %v512
      %v572 = vpop.f32.mrb[0].mxu0
      %v573 = vadd.f32 0.0, %v572
      %v574 = vpop.f32.mrb[0].mxu0
      %v575 = vpop.f32.mrb[0].mxu0
      %v576 = vadd.f32 0.0, %v575
      %v577 = vpop.f32.mrb[0].mxu0
      %578 = vdwg.mxu0
      %v579 = vadd.f32 %v358, %v549
      %v580 = vadd.f32 %v359, %v552
      %v581 = vadd.f32 %v360, %v557
      %v582 = vadd.f32 %v361, %v560
      %v583 = vadd.f32 %v362, %v565
      %v584 = vadd.f32 %v363, %v568
      %v585 = vadd.f32 %v364, %v573
      %v586 = vadd.f32 %v365, %v576
      %s587 = scalar_lea.vmem %s1, 16
      %v588 = vld [vmem:[%s587] sm:$0xf]
      %v589 = vld [vmem:[%s587 + $0x4] sm:$0xf]
      %v591 = vunpack.c.l.b16 %v242
      %v592 = vpack.c.b16 %v264, %v263
      %v593 = vpack.c.b16 %v266, %v265
      %v594 = vpack.c.b16 %v268, %v267
      %v595 = vpack.c.b16 %v591, %v269
      %v598 = vunpack.c.l.b16 %v588
      %v599 = vunpack.c.l.b16 %v589
      %v600 = vpack.c.b16 %v599, %v598
      %v603 = vsel %vm280, %v592, 0
      %v606 = vsel %vm280, %v593, 0
      %v609 = vsel %vm280, %v594, 0
      %v612 = vsel %vm280, %v595, 0
      %614 = vmatprep.subr.bf16.mxu0 0
      %615 = vmatpush1.bf16.msra.mxu0 %v600
      %616 = vmatprep.subr.bf16.mxu0 0
      %617 = vmatpush1.bf16.msra.mxu0 0
      %618 = vmatprep.subr.bf16.mxu0 0
      %619 = vmatpush1.bf16.msra.mxu0 0
      %620 = vmatprep.subr.bf16.mxu0 0
      %621 = vmatpush1.bf16.msra.mxu0 0
      %622 = vmatprep.subr.bf16.mxu0 0
      %623 = vmatpush1.bf16.msra.mxu0 0
      %624 = vmatprep.subr.bf16.mxu0 0
      %625 = vmatpush1.bf16.msra.mxu0 0
      %626 = vmatprep.subr.bf16.mxu0 0
      %627 = vmatpush1.bf16.msra.mxu0 0
      %628 = vmatprep.subr.bf16.mxu0 0
      %629 = vmatpush1.bf16.msra.mxu0 0
      %630 = vmatprep.subr.bf16.mxu0 0
      %631 = vmatpush1.bf16.msra.mxu0 0
      %632 = vmatprep.subr.bf16.mxu0 0
      %633 = vmatpush1.bf16.msra.mxu0 0
      %634 = vmatprep.subr.bf16.mxu0 0
      %635 = vmatpush1.bf16.msra.mxu0 0
      %636 = vmatprep.subr.bf16.mxu0 0
      %637 = vmatpush1.bf16.msra.mxu0 0
      %638 = vmatprep.subr.bf16.mxu0 0
      %639 = vmatpush1.bf16.msra.mxu0 0
      %640 = vmatprep.subr.bf16.mxu0 0
      %641 = vmatpush1.bf16.msra.mxu0 0
      %642 = vmatprep.subr.bf16.mxu0 0
      %643 = vmatpush1.bf16.msra.mxu0 0
      %644 = vmatprep.subr.bf16.mxu0 0
      %645 = vmatpush1.bf16.msra.mxu0 0
      %646 = vmatprep.mubr.bf16.mxu0 0
      %647 = vmatmul.mubr.bf16.gmra.mrb[0].mxu0 %v603
      %v648 = vpop.f32.mrb[0].mxu0
      %v649 = vadd.f32 0.0, %v648
      %v650 = vpop.f32.mrb[0].mxu0
      %v651 = vpop.f32.mrb[0].mxu0
      %v652 = vadd.f32 0.0, %v651
      %v653 = vpop.f32.mrb[0].mxu0
      %654 = vmatprep.mubr.bf16.mxu0 0
      %655 = vmatmul.mubr.bf16.gmra.mrb[0].mxu0 %v606
      %v656 = vpop.f32.mrb[0].mxu0
      %v657 = vadd.f32 0.0, %v656
      %v658 = vpop.f32.mrb[0].mxu0
      %v659 = vpop.f32.mrb[0].mxu0
      %v660 = vadd.f32 0.0, %v659
      %v661 = vpop.f32.mrb[0].mxu0
      %662 = vmatprep.mubr.bf16.mxu0 0
      %663 = vmatmul.mubr.bf16.gmra.mrb[0].mxu0 %v609
      %v664 = vpop.f32.mrb[0].mxu0
      %v665 = vadd.f32 0.0, %v664
      %v666 = vpop.f32.mrb[0].mxu0
      %v667 = vpop.f32.mrb[0].mxu0
      %v668 = vadd.f32 0.0, %v667
      %v669 = vpop.f32.mrb[0].mxu0
      %670 = vmatprep.mubr.bf16.mxu0 0
      %671 = vmatmul.mubr.bf16.gmra.mrb[0].mxu0 %v612
      %v672 = vpop.f32.mrb[0].mxu0
      %v673 = vadd.f32 0.0, %v672
      %v674 = vpop.f32.mrb[0].mxu0
      %v675 = vpop.f32.mrb[0].mxu0
      %v676 = vadd.f32 0.0, %v675
      %v677 = vpop.f32.mrb[0].mxu0
      %678 = vdwg.mxu0
      %v679 = vadd.f32 %v579, %v649
      %v680 = vadd.f32 %v580, %v652
      %v681 = vadd.f32 %v581, %v657
      %v682 = vadd.f32 %v582, %v660
      %v683 = vadd.f32 %v583, %v665
      %v684 = vadd.f32 %v584, %v668
      %v685 = vadd.f32 %v585, %v673
      %v686 = vadd.f32 %v586, %v676
      %v688 = vshrl.u32 %v242, 16
      %v690 = vrot.slane %v688, 4
      %v691 = vshll.u32 %v242, 16
      %v693 = vrot.slane %v691, 5
      %v694 = vor.u32 %v690, %v693
      %v695 = vrot.slane %v694, 4
      %v697 = vshll.u32 %v243, 16
      %v699 = vrot.slane %v697, 5
      %v700 = vsel %vm368, %v695, %v699
      %s701 = scalar_lea.vmem %s1, 24
      %v702 = vld [vmem:[%s701] sm:$0xf]
      %v703 = vld [vmem:[%s701 + $0x4] sm:$0xf]
      %v704 = vunpack.c.l.b16 %v700
      %v705 = vpack.c.b16 %v486, %v485
      %v706 = vpack.c.b16 %v488, %v487
      %v707 = vpack.c.b16 %v490, %v489
      %v708 = vpack.c.b16 %v704, %v491
      %v711 = vunpack.c.l.b16 %v702
      %v712 = vunpack.c.l.b16 %v703
      %v713 = vpack.c.b16 %v712, %v711
      %v716 = vsel %vm280, %v705, 0
      %v719 = vsel %vm280, %v706, 0
      %v722 = vsel %vm280, %v707, 0
      %v725 = vsel %vm280, %v708, 0
      %727 = vmatprep.subr.bf16.mxu0 0
      %728 = vmatpush1.bf16.msra.mxu0 %v713
      %729 = vmatprep.subr.bf16.mxu0 0
      %730 = vmatpush1.bf16.msra.mxu0 0
      %731 = vmatprep.subr.bf16.mxu0 0
      %732 = vmatpush1.bf16.msra.mxu0 0
      %733 = vmatprep.subr.bf16.mxu0 0
      %734 = vmatpush1.bf16.msra.mxu0 0
      %735 = vmatprep.subr.bf16.mxu0 0
      %736 = vmatpush1.bf16.msra.mxu0 0
      %737 = vmatprep.subr.bf16.mxu0 0
      %738 = vmatpush1.bf16.msra.mxu0 0
      %739 = vmatprep.subr.bf16.mxu0 0
      %740 = vmatpush1.bf16.msra.mxu0 0
      %741 = vmatprep.subr.bf16.mxu0 0
      %742 = vmatpush1.bf16.msra.mxu0 0
      %743 = vmatprep.subr.bf16.mxu0 0
      %744 = vmatpush1.bf16.msra.mxu0 0
      %745 = vmatprep.subr.bf16.mxu0 0
      %746 = vmatpush1.bf16.msra.mxu0 0
      %747 = vmatprep.subr.bf16.mxu0 0
      %748 = vmatpush1.bf16.msra.mxu0 0
      %749 = vmatprep.subr.bf16.mxu0 0
      %750 = vmatpush1.bf16.msra.mxu0 0
      %751 = vmatprep.subr.bf16.mxu0 0
      %752 = vmatpush1.bf16.msra.mxu0 0
      %753 = vmatprep.subr.bf16.mxu0 0
      %754 = vmatpush1.bf16.msra.mxu0 0
      %755 = vmatprep.subr.bf16.mxu0 0
      %756 = vmatpush1.bf16.msra.mxu0 0
      %757 = vmatprep.subr.bf16.mxu0 0
      %758 = vmatpush1.bf16.msra.mxu0 0
      %759 = vmatprep.mubr.bf16.mxu0 0
      %760 = vmatmul.mubr.bf16.gmra.mrb[0].mxu0 %v716
      %v761 = vpop.f32.mrb[0].mxu0
      %v762 = vadd.f32 0.0, %v761
      %v763 = vpop.f32.mrb[0].mxu0
      %v764 = vpop.f32.mrb[0].mxu0
      %v765 = vadd.f32 0.0, %v764
      %v766 = vpop.f32.mrb[0].mxu0
      %767 = vmatprep.mubr.bf16.mxu0 0
      %768 = vmatmul.mubr.bf16.gmra.mrb[0].mxu0 %v719
      %v769 = vpop.f32.mrb[0].mxu0
      %v770 = vadd.f32 0.0, %v769
      %v771 = vpop.f32.mrb[0].mxu0
      %v772 = vpop.f32.mrb[0].mxu0
      %v773 = vadd.f32 0.0, %v772
      %v774 = vpop.f32.mrb[0].mxu0
      %775 = vmatprep.mubr.bf16.mxu0 0
      %776 = vmatmul.mubr.bf16.gmra.mrb[0].mxu0 %v722
      %v777 = vpop.f32.mrb[0].mxu0
      %v778 = vadd.f32 0.0, %v777
      %v779 = vpop.f32.mrb[0].mxu0
      %v780 = vpop.f32.mrb[0].mxu0
      %v781 = vadd.f32 0.0, %v780
      %v782 = vpop.f32.mrb[0].mxu0
      %783 = vmatprep.mubr.bf16.mxu0 0
      %784 = vmatmul.mubr.bf16.gmra.mrb[0].mxu0 %v725
      %v785 = vpop.f32.mrb[0].mxu0
      %v786 = vadd.f32 0.0, %v785
      %v787 = vpop.f32.mrb[0].mxu0
      %v788 = vpop.f32.mrb[0].mxu0
      %v789 = vadd.f32 0.0, %v788
      %v790 = vpop.f32.mrb[0].mxu0
      %791 = vdwg.mxu0
      %v792 = vadd.f32 %v679, %v762
      %v793 = vadd.f32 %v680, %v765
      %v794 = vadd.f32 %v681, %v770
      %v795 = vadd.f32 %v682, %v773
      %v796 = vadd.f32 %v683, %v778
      %v797 = vadd.f32 %v684, %v781
      %v798 = vadd.f32 %v685, %v786
      %v799 = vadd.f32 %v686, %v789
      %vm800 = vcmp.ge.f32.partialorder %v792, 0.0
      %vm801 = vcmp.ge.f32.partialorder %v793, 0.0
      %vm802 = vcmp.ge.f32.partialorder %v794, 0.0
      %vm803 = vcmp.ge.f32.partialorder %v795, 0.0
      %vm804 = vcmp.ge.f32.partialorder %v796, 0.0
      %vm805 = vcmp.ge.f32.partialorder %v797, 0.0
      %vm806 = vcmp.ge.f32.partialorder %v798, 0.0
      %vm807 = vcmp.ge.f32.partialorder %v799, 0.0
      %v808 = vmul.f32 %v792, 0.2
      %v809 = vmul.f32 %v793, 0.2
      %v810 = vmul.f32 %v794, 0.2
      %v811 = vmul.f32 %v795, 0.2
      %v812 = vmul.f32 %v796, 0.2
      %v813 = vmul.f32 %v797, 0.2
      %v814 = vmul.f32 %v798, 0.2
      %v815 = vmul.f32 %v799, 0.2
      %v816 = vsel %vm800, %v792, %v808
      %v817 = vsel %vm801, %v793, %v809
      %v818 = vsel %vm802, %v794, %v810
      %v819 = vsel %vm803, %v795, %v811
      %v820 = vsel %vm804, %v796, %v812
      %v821 = vsel %vm805, %v797, %v813
      %v822 = vsel %vm806, %v798, %v814
      %v823 = vsel %vm807, %v799, %v815
      %vm824 = vcmask 60416
      %825 = vst.msk [vmem:[#allocation2] sm:$0xf] %vm824, 0
      %vm826 = vcmask 57344
      %827 = vst.msk [vmem:[#allocation2 + $0x4] sm:$0x1] %vm826, 0
      %828 = vst.msk [vmem:[#allocation2 + $0x8] sm:$0xf] %vm824, 0
      %829 = vst.msk [vmem:[#allocation2 + $0xc] sm:$0x1] %vm826, 0
      %830 = vst.msk [vmem:[#allocation2 + $0x10] sm:$0xf] %vm824, 0
      %831 = vst.msk [vmem:[#allocation2 + $0x14] sm:$0x1] %vm826, 0
      %832 = vst.msk [vmem:[#allocation2 + $0x18] sm:$0xf] %vm824, 0
      %833 = vst.msk [vmem:[#allocation2 + $0x1c] sm:$0x1] %vm826, 0
      %834 = vst.msk [vmem:[#allocation2 + $0x20] sm:$0xf] %vm824, 0
      %835 = vst.msk [vmem:[#allocation2 + $0x24] sm:$0x1] %vm826, 0
      %836 = vst.msk [vmem:[#allocation2 + $0x28] sm:$0xf] %vm824, 0
      %837 = vst.msk [vmem:[#allocation2 + $0x2c] sm:$0x1] %vm826, 0
      %838 = vst.msk [vmem:[#allocation2 + $0x30] sm:$0xf] %vm824, 0
      %839 = vst.msk [vmem:[#allocation2 + $0x34] sm:$0x1] %vm826, 0
      %840 = vst.msk [vmem:[#allocation2 + $0x38] sm:$0xf] %vm824, 0
      %841 = vst.msk [vmem:[#allocation2 + $0x3c] sm:$0x1] %vm826, 0
      %842 = vst.msk [vmem:[#allocation2 + $0x40] sm:$0xf] %vm824, 0
      %843 = vst.msk [vmem:[#allocation2 + $0x44] sm:$0x1] %vm826, 0
      %844 = vst.msk [vmem:[#allocation2 + $0x48] sm:$0xf] %vm824, 0
      %845 = vst.msk [vmem:[#allocation2 + $0x4c] sm:$0x1] %vm826, 0
      %v846 = vpack.c.bf16 %v816, %v816
      %v847 = vpack.c.bf16 %v817, %v817
      %v848 = vpack.c.bf16 %v818, %v818
      %v849 = vpack.c.bf16 %v819, %v819
      %v850 = vpack.c.bf16 %v820, %v820
      %v851 = vpack.c.bf16 %v821, %v821
      %v852 = vpack.c.bf16 %v822, %v822
      %v853 = vpack.c.bf16 %v823, %v823
      %v862 = vunpack.c.l.b16 %v846
      %v863 = vunpack.c.l.b16 %v847
      %v864 = vunpack.c.l.b16 %v848
      %v865 = vunpack.c.l.b16 %v849
      %v866 = vunpack.c.l.b16 %v850
      %v867 = vunpack.c.l.b16 %v851
      %v868 = vunpack.c.l.b16 %v852
      %v869 = vunpack.c.l.b16 %v853
      %v870 = vpack.c.b16 %v862, %v862
      %v871 = vpack.c.b16 %v863, %v863
      %v872 = vpack.c.b16 %v864, %v864
      %v873 = vpack.c.b16 %v865, %v865
      %v874 = vpack.c.b16 %v866, %v866
      %v875 = vpack.c.b16 %v867, %v867
      %v876 = vpack.c.b16 %v868, %v868
      %v877 = vpack.c.b16 %v869, %v869
      %v879 = vshrl.u32 %v870, 16
      %v881 = vrot.slane %v879, 7
      %v882 = vshll.u32 %v870, 16
      %v884 = vor.u32 %v881, %v882
      %v885 = vrot.slane %v881, 4
      %v887 = vshrl.u32 %v871, 16
      %v889 = vrot.slane %v887, 7
      %v890 = vshll.u32 %v871, 16
      %v892 = vor.u32 %v889, %v890
      %v893 = vrot.slane %v889, 4
      %v895 = vshrl.u32 %v872, 16
      %v897 = vrot.slane %v895, 7
      %v898 = vshll.u32 %v872, 16
      %v900 = vor.u32 %v897, %v898
      %v901 = vrot.slane %v897, 4
      %v903 = vshrl.u32 %v873, 16
      %v905 = vrot.slane %v903, 7
      %v906 = vshll.u32 %v873, 16
      %v908 = vor.u32 %v905, %v906
      %v909 = vrot.slane %v905, 4
      %v911 = vshrl.u32 %v874, 16
      %v913 = vrot.slane %v911, 7
      %v914 = vshll.u32 %v874, 16
      %v916 = vor.u32 %v913, %v914
      %v917 = vrot.slane %v913, 4
      %v919 = vshrl.u32 %v875, 16
      %v921 = vrot.slane %v919, 7
      %v922 = vshll.u32 %v875, 16
      %v924 = vor.u32 %v921, %v922
      %v925 = vrot.slane %v921, 4
      %v927 = vshrl.u32 %v876, 16
      %v929 = vrot.slane %v927, 7
      %v930 = vshll.u32 %v876, 16
      %v932 = vor.u32 %v929, %v930
      %v933 = vrot.slane %v929, 4
      %v935 = vshrl.u32 %v877, 16
      %v937 = vrot.slane %v935, 7
      %v938 = vshll.u32 %v877, 16
      %v940 = vor.u32 %v937, %v938
      %v941 = vrot.slane %v937, 4
      %s958 = scalar_lea.vmem [#allocation2], 8
      %vm959 = vcmask 60416
      %vm960 = vsmask.f32 7938
      %vm961 = vmand %vm959, %vm960
      %v962 = vld [vmem:[%s958] sm:$0xf]
      %v963 = vsel %vm961, %v884, %v962
      %964 = vst [vmem:[%s958] sm:$0xf] %v963
      %vm965 = vcmask 57344
      %vm966 = vsmask.f32 256
      %vm967 = vmand %vm965, %vm966
      %v968 = vld [vmem:[%s958 + $0x4] sm:$0x1]
      %v969 = vsel %vm967, %v885, %v968
      %970 = vst [vmem:[%s958 + $0x4] sm:$0x1] %v969
      %v971 = vld [vmem:[%s958 + $0x8] sm:$0xf]
      %v972 = vsel %vm961, %v892, %v971
      %973 = vst [vmem:[%s958 + $0x8] sm:$0xf] %v972
      %v974 = vld [vmem:[%s958 + $0xc] sm:$0x1]
      %v975 = vsel %vm967, %v893, %v974
      %976 = vst [vmem:[%s958 + $0xc] sm:$0x1] %v975
      %v977 = vld [vmem:[%s958 + $0x10] sm:$0xf]
      %v978 = vsel %vm961, %v900, %v977
      %979 = vst [vmem:[%s958 + $0x10] sm:$0xf] %v978
      %v980 = vld [vmem:[%s958 + $0x14] sm:$0x1]
      %v981 = vsel %vm967, %v901, %v980
      %982 = vst [vmem:[%s958 + $0x14] sm:$0x1] %v981
      %v983 = vld [vmem:[%s958 + $0x18] sm:$0xf]
      %v984 = vsel %vm961, %v908, %v983
      %985 = vst [vmem:[%s958 + $0x18] sm:$0xf] %v984
      %v986 = vld [vmem:[%s958 + $0x1c] sm:$0x1]
      %v987 = vsel %vm967, %v909, %v986
      %988 = vst [vmem:[%s958 + $0x1c] sm:$0x1] %v987
      %v989 = vld [vmem:[%s958 + $0x20] sm:$0xf]
      %v990 = vsel %vm961, %v916, %v989
      %991 = vst [vmem:[%s958 + $0x20] sm:$0xf] %v990
      %v992 = vld [vmem:[%s958 + $0x24] sm:$0x1]
      %v993 = vsel %vm967, %v917, %v992
      %994 = vst [vmem:[%s958 + $0x24] sm:$0x1] %v993
      %v995 = vld [vmem:[%s958 + $0x28] sm:$0xf]
      %v996 = vsel %vm961, %v924, %v995
      %997 = vst [vmem:[%s958 + $0x28] sm:$0xf] %v996
      %v998 = vld [vmem:[%s958 + $0x2c] sm:$0x1]
      %v999 = vsel %vm967, %v925, %v998
      %1000 = vst [vmem:[%s958 + $0x2c] sm:$0x1] %v999
      %v1001 = vld [vmem:[%s958 + $0x30] sm:$0xf]
      %v1002 = vsel %vm961, %v932, %v1001
      %1003 = vst [vmem:[%s958 + $0x30] sm:$0xf] %v1002
      %v1004 = vld [vmem:[%s958 + $0x34] sm:$0x1]
      %v1005 = vsel %vm967, %v933, %v1004
      %1006 = vst [vmem:[%s958 + $0x34] sm:$0x1] %v1005
      %v1007 = vld [vmem:[%s958 + $0x38] sm:$0xf]
      %v1008 = vsel %vm961, %v940, %v1007
      %1009 = vst [vmem:[%s958 + $0x38] sm:$0xf] %v1008
      %v1010 = vld [vmem:[%s958 + $0x3c] sm:$0x1]
      %v1011 = vsel %vm967, %v941, %v1010
      %1012 = vst [vmem:[%s958 + $0x3c] sm:$0x1] %v1011
      %v1013 = vld [vmem:[#allocation2] sm:$0xf]
      %v1014 = vld [vmem:[#allocation2 + $0x4] sm:$0x1]
      %v1015 = vld [vmem:[#allocation2 + $0x8] sm:$0xf]
      %v1016 = vld [vmem:[#allocation2 + $0xc] sm:$0x1]
      %v1017 = vld [vmem:[#allocation2 + $0x10] sm:$0xf]
      %v1018 = vld [vmem:[#allocation2 + $0x14] sm:$0x1]
      %v1019 = vld [vmem:[#allocation2 + $0x18] sm:$0xf]
      %v1020 = vld [vmem:[#allocation2 + $0x1c] sm:$0x1]
      %v1021 = vld [vmem:[#allocation2 + $0x20] sm:$0xf]
      %v1022 = vld [vmem:[#allocation2 + $0x24] sm:$0x1]
      %v1023 = vld [vmem:[#allocation2 + $0x28] sm:$0xf]
      %v1024 = vld [vmem:[#allocation2 + $0x2c] sm:$0x1]
      %v1025 = vld [vmem:[#allocation2 + $0x30] sm:$0xf]
      %v1026 = vld [vmem:[#allocation2 + $0x34] sm:$0x1]
      %v1027 = vld [vmem:[#allocation2 + $0x38] sm:$0xf]
      %v1028 = vld [vmem:[#allocation2 + $0x3c] sm:$0x1]
      %v1029 = vld [vmem:[#allocation2 + $0x40] sm:$0xf]
      %v1030 = vld [vmem:[#allocation2 + $0x44] sm:$0x1]
      %v1031 = vld [vmem:[#allocation2 + $0x48] sm:$0xf]
      %v1032 = vld [vmem:[#allocation2 + $0x4c] sm:$0x1]
      %v1033 = vld [vmem:[%s4] sm:$0x1]
      %v1035 = vlaneseq
      %v1036 = vshrl.u32 %v1035, 7
      %v1037 = vsub.s32 0, %v1036
      %v1038 = vrot.slane %v1033, %v1037
      %v1040 = vadd.f32 %v1038, 0.0
      %v1041 = vld [vmem:[%s3] sm:$0xf]
      %v1050 = vunpack.c.l.b16 %v1013
      %v1051 = vunpack.c.l.b16 %v1015
      %v1052 = vunpack.c.l.b16 %v1017
      %v1053 = vunpack.c.l.b16 %v1019
      %v1054 = vunpack.c.l.b16 %v1021
      %v1055 = vunpack.c.l.b16 %v1023
      %v1056 = vunpack.c.l.b16 %v1025
      %v1057 = vunpack.c.l.b16 %v1027
      %v1058 = vpack.c.b16 %v1051, %v1050
      %v1059 = vpack.c.b16 %v1053, %v1052
      %v1060 = vpack.c.b16 %v1055, %v1054
      %v1061 = vpack.c.b16 %v1057, %v1056
      %vm1062 = vcmask 64512
      %v1064 = vsel %vm1062, %v1058, 0
      %v1067 = vsel %vm1062, %v1059, 0
      %v1070 = vsel %vm1062, %v1060, 0
      %v1073 = vsel %vm1062, %v1061, 0
      %vm1075 = vcmask 1043456
      %v1077 = vsel %vm1075, %v1041, 0
      %1079 = vmatprep.subr.bf16.mxu0 0
      %1080 = vmatpush1.bf16.msra.mxu0 %v1077
      %1081 = vmatprep.subr.bf16.mxu0 0
      %1082 = vmatpush1.bf16.msra.mxu0 0
      %1083 = vmatprep.subr.bf16.mxu0 0
      %1084 = vmatpush1.bf16.msra.mxu0 0
      %1085 = vmatprep.subr.bf16.mxu0 0
      %1086 = vmatpush1.bf16.msra.mxu0 0
      %1087 = vmatprep.subr.bf16.mxu0 0
      %1088 = vmatpush1.bf16.msra.mxu0 0
      %1089 = vmatprep.subr.bf16.mxu0 0
      %1090 = vmatpush1.bf16.msra.mxu0 0
      %1091 = vmatprep.subr.bf16.mxu0 0
      %1092 = vmatpush1.bf16.msra.mxu0 0
      %1093 = vmatprep.subr.bf16.mxu0 0
      %1094 = vmatpush1.bf16.msra.mxu0 0
      %1095 = vmatprep.subr.bf16.mxu0 0
      %1096 = vmatpush1.bf16.msra.mxu0 0
      %1097 = vmatprep.subr.bf16.mxu0 0
      %1098 = vmatpush1.bf16.msra.mxu0 0
      %1099 = vmatprep.subr.bf16.mxu0 0
      %1100 = vmatpush1.bf16.msra.mxu0 0
      %1101 = vmatprep.subr.bf16.mxu0 0
      %1102 = vmatpush1.bf16.msra.mxu0 0
      %1103 = vmatprep.subr.bf16.mxu0 0
      %1104 = vmatpush1.bf16.msra.mxu0 0
      %1105 = vmatprep.subr.bf16.mxu0 0
      %1106 = vmatpush1.bf16.msra.mxu0 0
      %1107 = vmatprep.subr.bf16.mxu0 0
      %1108 = vmatpush1.bf16.msra.mxu0 0
      %1109 = vmatprep.subr.bf16.mxu0 0
      %1110 = vmatpush1.bf16.msra.mxu0 0
      %1111 = vmatprep.mubr.bf16.mxu0 0
      %1112 = vmatmul.mubr.bf16.gmra.mrb[0].mxu0 %v1064
      %v1113 = vpop.f32.mrb[0].mxu0
      %v1114 = vadd.f32 0.0, %v1113
      %v1115 = vpop.f32.mrb[0].mxu0
      %v1116 = vpop.f32.mrb[0].mxu0
      %v1117 = vadd.f32 0.0, %v1116
      %v1118 = vpop.f32.mrb[0].mxu0
      %1119 = vmatprep.mubr.bf16.mxu0 0
      %1120 = vmatmul.mubr.bf16.gmra.mrb[0].mxu0 %v1067
      %v1121 = vpop.f32.mrb[0].mxu0
      %v1122 = vadd.f32 0.0, %v1121
      %v1123 = vpop.f32.mrb[0].mxu0
      %v1124 = vpop.f32.mrb[0].mxu0
      %v1125 = vadd.f32 0.0, %v1124
      %v1126 = vpop.f32.mrb[0].mxu0
      %1127 = vmatprep.mubr.bf16.mxu0 0
      %1128 = vmatmul.mubr.bf16.gmra.mrb[0].mxu0 %v1070
      %v1129 = vpop.f32.mrb[0].mxu0
      %v1130 = vadd.f32 0.0, %v1129
      %v1131 = vpop.f32.mrb[0].mxu0
      %v1132 = vpop.f32.mrb[0].mxu0
      %v1133 = vadd.f32 0.0, %v1132
      %v1134 = vpop.f32.mrb[0].mxu0
      %1135 = vmatprep.mubr.bf16.mxu0 0
      %1136 = vmatmul.mubr.bf16.gmra.mrb[0].mxu0 %v1073
      %v1137 = vpop.f32.mrb[0].mxu0
      %v1138 = vadd.f32 0.0, %v1137
      %v1139 = vpop.f32.mrb[0].mxu0
      %v1140 = vpop.f32.mrb[0].mxu0
      %v1141 = vadd.f32 0.0, %v1140
      %v1142 = vpop.f32.mrb[0].mxu0
      %1143 = vdwg.mxu0
      %v1144 = vadd.f32 %v1040, %v1114
      %v1145 = vadd.f32 %v1040, %v1117
      %v1146 = vadd.f32 %v1040, %v1122
      %v1147 = vadd.f32 %v1040, %v1125
      %v1148 = vadd.f32 %v1040, %v1130
      %v1149 = vadd.f32 %v1040, %v1133
      %v1150 = vadd.f32 %v1040, %v1138
      %v1151 = vadd.f32 %v1040, %v1141
      %v1153 = vshrl.u32 %v1013, 16
      %v1155 = vrot.slane %v1153, 4
      %v1156 = vshll.u32 %v1013, 16
      %v1158 = vrot.slane %v1156, 5
      %v1159 = vor.u32 %v1155, %v1158
      %v1160 = vrot.slane %v1159, 4
      %v1162 = vshll.u32 %v1014, 16
      %v1164 = vrot.slane %v1162, 5
      %v1165 = vsel %vm368, %v1160, %v1164
      %v1167 = vshrl.u32 %v1015, 16
      %v1169 = vrot.slane %v1167, 4
      %v1170 = vshll.u32 %v1015, 16
      %v1172 = vrot.slane %v1170, 5
      %v1173 = vor.u32 %v1169, %v1172
      %v1174 = vrot.slane %v1173, 4
      %v1176 = vshll.u32 %v1016, 16
      %v1178 = vrot.slane %v1176, 5
      %v1179 = vsel %vm368, %v1174, %v1178
      %v1181 = vshrl.u32 %v1017, 16
      %v1183 = vrot.slane %v1181, 4
      %v1184 = vshll.u32 %v1017, 16
      %v1186 = vrot.slane %v1184, 5
      %v1187 = vor.u32 %v1183, %v1186
      %v1188 = vrot.slane %v1187, 4
      %v1190 = vshll.u32 %v1018, 16
      %v1192 = vrot.slane %v1190, 5
      %v1193 = vsel %vm368, %v1188, %v1192
      %v1195 = vshrl.u32 %v1019, 16
      %v1197 = vrot.slane %v1195, 4
      %v1198 = vshll.u32 %v1019, 16
      %v1200 = vrot.slane %v1198, 5
      %v1201 = vor.u32 %v1197, %v1200
      %v1202 = vrot.slane %v1201, 4
      %v1204 = vshll.u32 %v1020, 16
      %v1206 = vrot.slane %v1204, 5
      %v1207 = vsel %vm368, %v1202, %v1206
      %v1209 = vshrl.u32 %v1021, 16
      %v1211 = vrot.slane %v1209, 4
      %v1212 = vshll.u32 %v1021, 16
      %v1214 = vrot.slane %v1212, 5
      %v1215 = vor.u32 %v1211, %v1214
      %v1216 = vrot.slane %v1215, 4
      %v1218 = vshll.u32 %v1022, 16
      %v1220 = vrot.slane %v1218, 5
      %v1221 = vsel %vm368, %v1216, %v1220
      %v1223 = vshrl.u32 %v1023, 16
      %v1225 = vrot.slane %v1223, 4
      %v1226 = vshll.u32 %v1023, 16
      %v1228 = vrot.slane %v1226, 5
      %v1229 = vor.u32 %v1225, %v1228
      %v1230 = vrot.slane %v1229, 4
      %v1232 = vshll.u32 %v1024, 16
      %v1234 = vrot.slane %v1232, 5
      %v1235 = vsel %vm368, %v1230, %v1234
      %v1237 = vshrl.u32 %v1025, 16
      %v1239 = vrot.slane %v1237, 4
      %v1240 = vshll.u32 %v1025, 16
      %v1242 = vrot.slane %v1240, 5
      %v1243 = vor.u32 %v1239, %v1242
      %v1244 = vrot.slane %v1243, 4
      %v1246 = vshll.u32 %v1026, 16
      %v1248 = vrot.slane %v1246, 5
      %v1249 = vsel %vm368, %v1244, %v1248
      %v1251 = vshrl.u32 %v1027, 16
      %v1253 = vrot.slane %v1251, 4
      %v1254 = vshll.u32 %v1027, 16
      %v1256 = vrot.slane %v1254, 5
      %v1257 = vor.u32 %v1253, %v1256
      %v1258 = vrot.slane %v1257, 4
      %v1260 = vshll.u32 %v1028, 16
      %v1262 = vrot.slane %v1260, 5
      %v1263 = vsel %vm368, %v1258, %v1262
      %s1264 = scalar_lea.vmem %s3, 4
      %v1265 = vld [vmem:[%s1264] sm:$0xf]
      %v1266 = vunpack.c.l.b16 %v1165
      %v1267 = vunpack.c.l.b16 %v1179
      %v1268 = vunpack.c.l.b16 %v1193
      %v1269 = vunpack.c.l.b16 %v1207
      %v1270 = vunpack.c.l.b16 %v1221
      %v1271 = vunpack.c.l.b16 %v1235
      %v1272 = vunpack.c.l.b16 %v1249
      %v1273 = vunpack.c.l.b16 %v1263
      %v1274 = vpack.c.b16 %v1267, %v1266
      %v1275 = vpack.c.b16 %v1269, %v1268
      %v1276 = vpack.c.b16 %v1271, %v1270
      %v1277 = vpack.c.b16 %v1273, %v1272
      %v1279 = vsel %vm1062, %v1274, 0
      %v1282 = vsel %vm1062, %v1275, 0
      %v1285 = vsel %vm1062, %v1276, 0
      %v1288 = vsel %vm1062, %v1277, 0
      %v1291 = vsel %vm1075, %v1265, 0
      %1293 = vmatprep.subr.bf16.mxu0 0
      %1294 = vmatpush1.bf16.msra.mxu0 %v1291
      %1295 = vmatprep.subr.bf16.mxu0 0
      %1296 = vmatpush1.bf16.msra.mxu0 0
      %1297 = vmatprep.subr.bf16.mxu0 0
      %1298 = vmatpush1.bf16.msra.mxu0 0
      %1299 = vmatprep.subr.bf16.mxu0 0
      %1300 = vmatpush1.bf16.msra.mxu0 0
      %1301 = vmatprep.subr.bf16.mxu0 0
      %1302 = vmatpush1.bf16.msra.mxu0 0
      %1303 = vmatprep.subr.bf16.mxu0 0
      %1304 = vmatpush1.bf16.msra.mxu0 0
      %1305 = vmatprep.subr.bf16.mxu0 0
      %1306 = vmatpush1.bf16.msra.mxu0 0
      %1307 = vmatprep.subr.bf16.mxu0 0
      %1308 = vmatpush1.bf16.msra.mxu0 0
      %1309 = vmatprep.subr.bf16.mxu0 0
      %1310 = vmatpush1.bf16.msra.mxu0 0
      %1311 = vmatprep.subr.bf16.mxu0 0
      %1312 = vmatpush1.bf16.msra.mxu0 0
      %1313 = vmatprep.subr.bf16.mxu0 0
      %1314 = vmatpush1.bf16.msra.mxu0 0
      %1315 = vmatprep.subr.bf16.mxu0 0
      %1316 = vmatpush1.bf16.msra.mxu0 0
      %1317 = vmatprep.subr.bf16.mxu0 0
      %1318 = vmatpush1.bf16.msra.mxu0 0
      %1319 = vmatprep.subr.bf16.mxu0 0
      %1320 = vmatpush1.bf16.msra.mxu0 0
      %1321 = vmatprep.subr.bf16.mxu0 0
      %1322 = vmatpush1.bf16.msra.mxu0 0
      %1323 = vmatprep.subr.bf16.mxu0 0
      %1324 = vmatpush1.bf16.msra.mxu0 0
      %1325 = vmatprep.mubr.bf16.mxu0 0
      %1326 = vmatmul.mubr.bf16.gmra.mrb[0].mxu0 %v1279
      %v1327 = vpop.f32.mrb[0].mxu0
      %v1328 = vadd.f32 0.0, %v1327
      %v1329 = vpop.f32.mrb[0].mxu0
      %v1330 = vpop.f32.mrb[0].mxu0
      %v1331 = vadd.f32 0.0, %v1330
      %v1332 = vpop.f32.mrb[0].mxu0
      %1333 = vmatprep.mubr.bf16.mxu0 0
      %1334 = vmatmul.mubr.bf16.gmra.mrb[0].mxu0 %v1282
      %v1335 = vpop.f32.mrb[0].mxu0
      %v1336 = vadd.f32 0.0, %v1335
      %v1337 = vpop.f32.mrb[0].mxu0
      %v1338 = vpop.f32.mrb[0].mxu0
      %v1339 = vadd.f32 0.0, %v1338
      %v1340 = vpop.f32.mrb[0].mxu0
      %1341 = vmatprep.mubr.bf16.mxu0 0
      %1342 = vmatmul.mubr.bf16.gmra.mrb[0].mxu0 %v1285
      %v1343 = vpop.f32.mrb[0].mxu0
      %v1344 = vadd.f32 0.0, %v1343
      %v1345 = vpop.f32.mrb[0].mxu0
      %v1346 = vpop.f32.mrb[0].mxu0
      %v1347 = vadd.f32 0.0, %v1346
      %v1348 = vpop.f32.mrb[0].mxu0
      %1349 = vmatprep.mubr.bf16.mxu0 0
      %1350 = vmatmul.mubr.bf16.gmra.mrb[0].mxu0 %v1288
      %v1351 = vpop.f32.mrb[0].mxu0
      %v1352 = vadd.f32 0.0, %v1351
      %v1353 = vpop.f32.mrb[0].mxu0
      %v1354 = vpop.f32.mrb[0].mxu0
      %v1355 = vadd.f32 0.0, %v1354
      %v1356 = vpop.f32.mrb[0].mxu0
      %1357 = vdwg.mxu0
      %v1358 = vadd.f32 %v1144, %v1328
      %v1359 = vadd.f32 %v1145, %v1331
      %v1360 = vadd.f32 %v1146, %v1336
      %v1361 = vadd.f32 %v1147, %v1339
      %v1362 = vadd.f32 %v1148, %v1344
      %v1363 = vadd.f32 %v1149, %v1347
      %v1364 = vadd.f32 %v1150, %v1352
      %v1365 = vadd.f32 %v1151, %v1355
      %vm1374 = vcmask 1042432
      %vm1375 = vcmask 1046532
      %vm1376 = vmor %vm1374, %vm1375
      %v1377 = vrot.slane %v1013, 5
      %v1378 = vrot.slane %v1377, 4
      %v1379 = vrot.slane %v1014, 5
      %v1380 = vsel %vm1376, %v1378, %v1379
      %v1381 = vrot.slane %v1015, 5
      %v1382 = vrot.slane %v1381, 4
      %v1383 = vrot.slane %v1016, 5
      %v1384 = vsel %vm1376, %v1382, %v1383
      %v1385 = vrot.slane %v1017, 5
      %v1386 = vrot.slane %v1385, 4
      %v1387 = vrot.slane %v1018, 5
      %v1388 = vsel %vm1376, %v1386, %v1387
      %v1389 = vrot.slane %v1019, 5
      %v1390 = vrot.slane %v1389, 4
      %v1391 = vrot.slane %v1020, 5
      %v1392 = vsel %vm1376, %v1390, %v1391
      %v1393 = vrot.slane %v1021, 5
      %v1394 = vrot.slane %v1393, 4
      %v1395 = vrot.slane %v1022, 5
      %v1396 = vsel %vm1376, %v1394, %v1395
      %v1397 = vrot.slane %v1023, 5
      %v1398 = vrot.slane %v1397, 4
      %v1399 = vrot.slane %v1024, 5
      %v1400 = vsel %vm1376, %v1398, %v1399
      %v1401 = vrot.slane %v1025, 5
      %v1402 = vrot.slane %v1401, 4
      %v1403 = vrot.slane %v1026, 5
      %v1404 = vsel %vm1376, %v1402, %v1403
      %v1405 = vrot.slane %v1027, 5
      %v1406 = vrot.slane %v1405, 4
      %v1407 = vrot.slane %v1028, 5
      %v1408 = vsel %vm1376, %v1406, %v1407
      %s1409 = scalar_lea.vmem %s3, 8
      %v1410 = vld [vmem:[%s1409] sm:$0xf]
      %v1411 = vunpack.c.l.b16 %v1380
      %v1412 = vunpack.c.l.b16 %v1384
      %v1413 = vunpack.c.l.b16 %v1388
      %v1414 = vunpack.c.l.b16 %v1392
      %v1415 = vunpack.c.l.b16 %v1396
      %v1416 = vunpack.c.l.b16 %v1400
      %v1417 = vunpack.c.l.b16 %v1404
      %v1418 = vunpack.c.l.b16 %v1408
      %v1419 = vpack.c.b16 %v1412, %v1411
      %v1420 = vpack.c.b16 %v1414, %v1413
      %v1421 = vpack.c.b16 %v1416, %v1415
      %v1422 = vpack.c.b16 %v1418, %v1417
      %v1424 = vsel %vm1062, %v1419, 0
      %v1427 = vsel %vm1062, %v1420, 0
      %v1430 = vsel %vm1062, %v1421, 0
      %v1433 = vsel %vm1062, %v1422, 0
      %v1436 = vsel %vm1075, %v1410, 0
      %1438 = vmatprep.subr.bf16.mxu0 0
      %1439 = vmatpush1.bf16.msra.mxu0 %v1436
      %1440 = vmatprep.subr.bf16.mxu0 0
      %1441 = vmatpush1.bf16.msra.mxu0 0
      %1442 = vmatprep.subr.bf16.mxu0 0
      %1443 = vmatpush1.bf16.msra.mxu0 0
      %1444 = vmatprep.subr.bf16.mxu0 0
      %1445 = vmatpush1.bf16.msra.mxu0 0
      %1446 = vmatprep.subr.bf16.mxu0 0
      %1447 = vmatpush1.bf16.msra.mxu0 0
      %1448 = vmatprep.subr.bf16.mxu0 0
      %1449 = vmatpush1.bf16.msra.mxu0 0
      %1450 = vmatprep.subr.bf16.mxu0 0
      %1451 = vmatpush1.bf16.msra.mxu0 0
      %1452 = vmatprep.subr.bf16.mxu0 0
      %1453 = vmatpush1.bf16.msra.mxu0 0
      %1454 = vmatprep.subr.bf16.mxu0 0
      %1455 = vmatpush1.bf16.msra.mxu0 0
      %1456 = vmatprep.subr.bf16.mxu0 0
      %1457 = vmatpush1.bf16.msra.mxu0 0
      %1458 = vmatprep.subr.bf16.mxu0 0
      %1459 = vmatpush1.bf16.msra.mxu0 0
      %1460 = vmatprep.subr.bf16.mxu0 0
      %1461 = vmatpush1.bf16.msra.mxu0 0
      %1462 = vmatprep.subr.bf16.mxu0 0
      %1463 = vmatpush1.bf16.msra.mxu0 0
      %1464 = vmatprep.subr.bf16.mxu0 0
      %1465 = vmatpush1.bf16.msra.mxu0 0
      %1466 = vmatprep.subr.bf16.mxu0 0
      %1467 = vmatpush1.bf16.msra.mxu0 0
      %1468 = vmatprep.subr.bf16.mxu0 0
      %1469 = vmatpush1.bf16.msra.mxu0 0
      %1470 = vmatprep.mubr.bf16.mxu0 0
      %1471 = vmatmul.mubr.bf16.gmra.mrb[0].mxu0 %v1424
      %v1472 = vpop.f32.mrb[0].mxu0
      %v1473 = vadd.f32 0.0, %v1472
      %v1474 = vpop.f32.mrb[0].mxu0
      %v1475 = vpop.f32.mrb[0].mxu0
      %v1476 = vadd.f32 0.0, %v1475
      %v1477 = vpop.f32.mrb[0].mxu0
      %1478 = vmatprep.mubr.bf16.mxu0 0
      %1479 = vmatmul.mubr.bf16.gmra.mrb[0].mxu0 %v1427
      %v1480 = vpop.f32.mrb[0].mxu0
      %v1481 = vadd.f32 0.0, %v1480
      %v1482 = vpop.f32.mrb[0].mxu0
      %v1483 = vpop.f32.mrb[0].mxu0
      %v1484 = vadd.f32 0.0, %v1483
      %v1485 = vpop.f32.mrb[0].mxu0
      %1486 = vmatprep.mubr.bf16.mxu0 0
      %1487 = vmatmul.mubr.bf16.gmra.mrb[0].mxu0 %v1430
      %v1488 = vpop.f32.mrb[0].mxu0
      %v1489 = vadd.f32 0.0, %v1488
      %v1490 = vpop.f32.mrb[0].mxu0
      %v1491 = vpop.f32.mrb[0].mxu0
      %v1492 = vadd.f32 0.0, %v1491
      %v1493 = vpop.f32.mrb[0].mxu0
      %1494 = vmatprep.mubr.bf16.mxu0 0
      %1495 = vmatmul.mubr.bf16.gmra.mrb[0].mxu0 %v1433
      %v1496 = vpop.f32.mrb[0].mxu0
      %v1497 = vadd.f32 0.0, %v1496
      %v1498 = vpop.f32.mrb[0].mxu0
      %v1499 = vpop.f32.mrb[0].mxu0
      %v1500 = vadd.f32 0.0, %v1499
      %v1501 = vpop.f32.mrb[0].mxu0
      %1502 = vdwg.mxu0
      %v1503 = vadd.f32 %v1358, %v1473
      %v1504 = vadd.f32 %v1359, %v1476
      %v1505 = vadd.f32 %v1360, %v1481
      %v1506 = vadd.f32 %v1361, %v1484
      %v1507 = vadd.f32 %v1362, %v1489
      %v1508 = vadd.f32 %v1363, %v1492
      %v1509 = vadd.f32 %v1364, %v1497
      %v1510 = vadd.f32 %v1365, %v1500
      %s1511 = scalar_lea.vmem %s3, 12
      %v1512 = vld [vmem:[%s1511] sm:$0xf]
      %v1514 = vunpack.c.l.b16 %v1029
      %v1515 = vpack.c.b16 %v1052, %v1051
      %v1516 = vpack.c.b16 %v1054, %v1053
      %v1517 = vpack.c.b16 %v1056, %v1055
      %v1518 = vpack.c.b16 %v1514, %v1057
      %v1520 = vsel %vm1062, %v1515, 0
      %v1523 = vsel %vm1062, %v1516, 0
      %v1526 = vsel %vm1062, %v1517, 0
      %v1529 = vsel %vm1062, %v1518, 0
      %v1532 = vsel %vm1075, %v1512, 0
      %1534 = vmatprep.subr.bf16.mxu0 0
      %1535 = vmatpush1.bf16.msra.mxu0 %v1532
      %1536 = vmatprep.subr.bf16.mxu0 0
      %1537 = vmatpush1.bf16.msra.mxu0 0
      %1538 = vmatprep.subr.bf16.mxu0 0
      %1539 = vmatpush1.bf16.msra.mxu0 0
      %1540 = vmatprep.subr.bf16.mxu0 0
      %1541 = vmatpush1.bf16.msra.mxu0 0
      %1542 = vmatprep.subr.bf16.mxu0 0
      %1543 = vmatpush1.bf16.msra.mxu0 0
      %1544 = vmatprep.subr.bf16.mxu0 0
      %1545 = vmatpush1.bf16.msra.mxu0 0
      %1546 = vmatprep.subr.bf16.mxu0 0
      %1547 = vmatpush1.bf16.msra.mxu0 0
      %1548 = vmatprep.subr.bf16.mxu0 0
      %1549 = vmatpush1.bf16.msra.mxu0 0
      %1550 = vmatprep.subr.bf16.mxu0 0
      %1551 = vmatpush1.bf16.msra.mxu0 0
      %1552 = vmatprep.subr.bf16.mxu0 0
      %1553 = vmatpush1.bf16.msra.mxu0 0
      %1554 = vmatprep.subr.bf16.mxu0 0
      %1555 = vmatpush1.bf16.msra.mxu0 0
      %1556 = vmatprep.subr.bf16.mxu0 0
      %1557 = vmatpush1.bf16.msra.mxu0 0
      %1558 = vmatprep.subr.bf16.mxu0 0
      %1559 = vmatpush1.bf16.msra.mxu0 0
      %1560 = vmatprep.subr.bf16.mxu0 0
      %1561 = vmatpush1.bf16.msra.mxu0 0
      %1562 = vmatprep.subr.bf16.mxu0 0
      %1563 = vmatpush1.bf16.msra.mxu0 0
      %1564 = vmatprep.subr.bf16.mxu0 0
      %1565 = vmatpush1.bf16.msra.mxu0 0
      %1566 = vmatprep.mubr.bf16.mxu0 0
      %1567 = vmatmul.mubr.bf16.gmra.mrb[0].mxu0 %v1520
      %v1568 = vpop.f32.mrb[0].mxu0
      %v1569 = vadd.f32 0.0, %v1568
      %v1570 = vpop.f32.mrb[0].mxu0
      %v1571 = vpop.f32.mrb[0].mxu0
      %v1572 = vadd.f32 0.0, %v1571
      %v1573 = vpop.f32.mrb[0].mxu0
      %1574 = vmatprep.mubr.bf16.mxu0 0
      %1575 = vmatmul.mubr.bf16.gmra.mrb[0].mxu0 %v1523
      %v1576 = vpop.f32.mrb[0].mxu0
      %v1577 = vadd.f32 0.0, %v1576
      %v1578 = vpop.f32.mrb[0].mxu0
      %v1579 = vpop.f32.mrb[0].mxu0
      %v1580 = vadd.f32 0.0, %v1579
      %v1581 = vpop.f32.mrb[0].mxu0
      %1582 = vmatprep.mubr.bf16.mxu0 0
      %1583 = vmatmul.mubr.bf16.gmra.mrb[0].mxu0 %v1526
      %v1584 = vpop.f32.mrb[0].mxu0
      %v1585 = vadd.f32 0.0, %v1584
      %v1586 = vpop.f32.mrb[0].mxu0
      %v1587 = vpop.f32.mrb[0].mxu0
      %v1588 = vadd.f32 0.0, %v1587
      %v1589 = vpop.f32.mrb[0].mxu0
      %1590 = vmatprep.mubr.bf16.mxu0 0
      %1591 = vmatmul.mubr.bf16.gmra.mrb[0].mxu0 %v1529
      %v1592 = vpop.f32.mrb[0].mxu0
      %v1593 = vadd.f32 0.0, %v1592
      %v1594 = vpop.f32.mrb[0].mxu0
      %v1595 = vpop.f32.mrb[0].mxu0
      %v1596 = vadd.f32 0.0, %v1595
      %v1597 = vpop.f32.mrb[0].mxu0
      %1598 = vdwg.mxu0
      %v1599 = vadd.f32 %v1503, %v1569
      %v1600 = vadd.f32 %v1504, %v1572
      %v1601 = vadd.f32 %v1505, %v1577
      %v1602 = vadd.f32 %v1506, %v1580
      %v1603 = vadd.f32 %v1507, %v1585
      %v1604 = vadd.f32 %v1508, %v1588
      %v1605 = vadd.f32 %v1509, %v1593
      %v1606 = vadd.f32 %v1510, %v1596
      %v1608 = vshrl.u32 %v1029, 16
      %v1610 = vrot.slane %v1608, 4
      %v1611 = vshll.u32 %v1029, 16
      %v1613 = vrot.slane %v1611, 5
      %v1614 = vor.u32 %v1610, %v1613
      %v1615 = vrot.slane %v1614, 4
      %v1617 = vshll.u32 %v1030, 16
      %v1619 = vrot.slane %v1617, 5
      %v1620 = vsel %vm368, %v1615, %v1619
      %s1621 = scalar_lea.vmem %s3, 16
      %v1622 = vld [vmem:[%s1621] sm:$0xf]
      %v1623 = vunpack.c.l.b16 %v1620
      %v1624 = vpack.c.b16 %v1268, %v1267
      %v1625 = vpack.c.b16 %v1270, %v1269
      %v1626 = vpack.c.b16 %v1272, %v1271
      %v1627 = vpack.c.b16 %v1623, %v1273
      %v1629 = vsel %vm1062, %v1624, 0
      %v1632 = vsel %vm1062, %v1625, 0
      %v1635 = vsel %vm1062, %v1626, 0
      %v1638 = vsel %vm1062, %v1627, 0
      %v1641 = vsel %vm1075, %v1622, 0
      %1643 = vmatprep.subr.bf16.mxu0 0
      %1644 = vmatpush1.bf16.msra.mxu0 %v1641
      %1645 = vmatprep.subr.bf16.mxu0 0
      %1646 = vmatpush1.bf16.msra.mxu0 0
      %1647 = vmatprep.subr.bf16.mxu0 0
      %1648 = vmatpush1.bf16.msra.mxu0 0
      %1649 = vmatprep.subr.bf16.mxu0 0
      %1650 = vmatpush1.bf16.msra.mxu0 0
      %1651 = vmatprep.subr.bf16.mxu0 0
      %1652 = vmatpush1.bf16.msra.mxu0 0
      %1653 = vmatprep.subr.bf16.mxu0 0
      %1654 = vmatpush1.bf16.msra.mxu0 0
      %1655 = vmatprep.subr.bf16.mxu0 0
      %1656 = vmatpush1.bf16.msra.mxu0 0
      %1657 = vmatprep.subr.bf16.mxu0 0
      %1658 = vmatpush1.bf16.msra.mxu0 0
      %1659 = vmatprep.subr.bf16.mxu0 0
      %1660 = vmatpush1.bf16.msra.mxu0 0
      %1661 = vmatprep.subr.bf16.mxu0 0
      %1662 = vmatpush1.bf16.msra.mxu0 0
      %1663 = vmatprep.subr.bf16.mxu0 0
      %1664 = vmatpush1.bf16.msra.mxu0 0
      %1665 = vmatprep.subr.bf16.mxu0 0
      %1666 = vmatpush1.bf16.msra.mxu0 0
      %1667 = vmatprep.subr.bf16.mxu0 0
      %1668 = vmatpush1.bf16.msra.mxu0 0
      %1669 = vmatprep.subr.bf16.mxu0 0
      %1670 = vmatpush1.bf16.msra.mxu0 0
      %1671 = vmatprep.subr.bf16.mxu0 0
      %1672 = vmatpush1.bf16.msra.mxu0 0
      %1673 = vmatprep.subr.bf16.mxu0 0
      %1674 = vmatpush1.bf16.msra.mxu0 0
      %1675 = vmatprep.mubr.bf16.mxu0 0
      %1676 = vmatmul.mubr.bf16.gmra.mrb[0].mxu0 %v1629
      %v1677 = vpop.f32.mrb[0].mxu0
      %v1678 = vadd.f32 0.0, %v1677
      %v1679 = vpop.f32.mrb[0].mxu0
      %v1680 = vpop.f32.mrb[0].mxu0
      %v1681 = vadd.f32 0.0, %v1680
      %v1682 = vpop.f32.mrb[0].mxu0
      %1683 = vmatprep.mubr.bf16.mxu0 0
      %1684 = vmatmul.mubr.bf16.gmra.mrb[0].mxu0 %v1632
      %v1685 = vpop.f32.mrb[0].mxu0
      %v1686 = vadd.f32 0.0, %v1685
      %v1687 = vpop.f32.mrb[0].mxu0
      %v1688 = vpop.f32.mrb[0].mxu0
      %v1689 = vadd.f32 0.0, %v1688
      %v1690 = vpop.f32.mrb[0].mxu0
      %1691 = vmatprep.mubr.bf16.mxu0 0
      %1692 = vmatmul.mubr.bf16.gmra.mrb[0].mxu0 %v1635
      %v1693 = vpop.f32.mrb[0].mxu0
      %v1694 = vadd.f32 0.0, %v1693
      %v1695 = vpop.f32.mrb[0].mxu0
      %v1696 = vpop.f32.mrb[0].mxu0
      %v1697 = vadd.f32 0.0, %v1696
      %v1698 = vpop.f32.mrb[0].mxu0
      %1699 = vmatprep.mubr.bf16.mxu0 0
      %1700 = vmatmul.mubr.bf16.gmra.mrb[0].mxu0 %v1638
      %v1701 = vpop.f32.mrb[0].mxu0
      %v1702 = vadd.f32 0.0, %v1701
      %v1703 = vpop.f32.mrb[0].mxu0
      %v1704 = vpop.f32.mrb[0].mxu0
      %v1705 = vadd.f32 0.0, %v1704
      %v1706 = vpop.f32.mrb[0].mxu0
      %1707 = vdwg.mxu0
      %v1708 = vadd.f32 %v1599, %v1678
      %v1709 = vadd.f32 %v1600, %v1681
      %v1710 = vadd.f32 %v1601, %v1686
      %v1711 = vadd.f32 %v1602, %v1689
      %v1712 = vadd.f32 %v1603, %v1694
      %v1713 = vadd.f32 %v1604, %v1697
      %v1714 = vadd.f32 %v1605, %v1702
      %v1715 = vadd.f32 %v1606, %v1705
      %v1717 = vrot.slane %v1029, 5
      %v1718 = vrot.slane %v1717, 4
      %v1719 = vrot.slane %v1030, 5
      %v1720 = vsel %vm1376, %v1718, %v1719
      %s1721 = scalar_lea.vmem %s3, 20
      %v1722 = vld [vmem:[%s1721] sm:$0xf]
      %v1723 = vunpack.c.l.b16 %v1720
      %v1724 = vpack.c.b16 %v1413, %v1412
      %v1725 = vpack.c.b16 %v1415, %v1414
      %v1726 = vpack.c.b16 %v1417, %v1416
      %v1727 = vpack.c.b16 %v1723, %v1418
      %v1729 = vsel %vm1062, %v1724, 0
      %v1732 = vsel %vm1062, %v1725, 0
      %v1735 = vsel %vm1062, %v1726, 0
      %v1738 = vsel %vm1062, %v1727, 0
      %v1741 = vsel %vm1075, %v1722, 0
      %1743 = vmatprep.subr.bf16.mxu0 0
      %1744 = vmatpush1.bf16.msra.mxu0 %v1741
      %1745 = vmatprep.subr.bf16.mxu0 0
      %1746 = vmatpush1.bf16.msra.mxu0 0
      %1747 = vmatprep.subr.bf16.mxu0 0
      %1748 = vmatpush1.bf16.msra.mxu0 0
      %1749 = vmatprep.subr.bf16.mxu0 0
      %1750 = vmatpush1.bf16.msra.mxu0 0
      %1751 = vmatprep.subr.bf16.mxu0 0
      %1752 = vmatpush1.bf16.msra.mxu0 0
      %1753 = vmatprep.subr.bf16.mxu0 0
      %1754 = vmatpush1.bf16.msra.mxu0 0
      %1755 = vmatprep.subr.bf16.mxu0 0
      %1756 = vmatpush1.bf16.msra.mxu0 0
      %1757 = vmatprep.subr.bf16.mxu0 0
      %1758 = vmatpush1.bf16.msra.mxu0 0
      %1759 = vmatprep.subr.bf16.mxu0 0
      %1760 = vmatpush1.bf16.msra.mxu0 0
      %1761 = vmatprep.subr.bf16.mxu0 0
      %1762 = vmatpush1.bf16.msra.mxu0 0
      %1763 = vmatprep.subr.bf16.mxu0 0
      %1764 = vmatpush1.bf16.msra.mxu0 0
      %1765 = vmatprep.subr.bf16.mxu0 0
      %1766 = vmatpush1.bf16.msra.mxu0 0
      %1767 = vmatprep.subr.bf16.mxu0 0
      %1768 = vmatpush1.bf16.msra.mxu0 0
      %1769 = vmatprep.subr.bf16.mxu0 0
      %1770 = vmatpush1.bf16.msra.mxu0 0
      %1771 = vmatprep.subr.bf16.mxu0 0
      %1772 = vmatpush1.bf16.msra.mxu0 0
      %1773 = vmatprep.subr.bf16.mxu0 0
      %1774 = vmatpush1.bf16.msra.mxu0 0
      %1775 = vmatprep.mubr.bf16.mxu0 0
      %1776 = vmatmul.mubr.bf16.gmra.mrb[0].mxu0 %v1729
      %v1777 = vpop.f32.mrb[0].mxu0
      %v1778 = vadd.f32 0.0, %v1777
      %v1779 = vpop.f32.mrb[0].mxu0
      %v1780 = vpop.f32.mrb[0].mxu0
      %v1781 = vadd.f32 0.0, %v1780
      %v1782 = vpop.f32.mrb[0].mxu0
      %1783 = vmatprep.mubr.bf16.mxu0 0
      %1784 = vmatmul.mubr.bf16.gmra.mrb[0].mxu0 %v1732
      %v1785 = vpop.f32.mrb[0].mxu0
      %v1786 = vadd.f32 0.0, %v1785
      %v1787 = vpop.f32.mrb[0].mxu0
      %v1788 = vpop.f32.mrb[0].mxu0
      %v1789 = vadd.f32 0.0, %v1788
      %v1790 = vpop.f32.mrb[0].mxu0
      %1791 = vmatprep.mubr.bf16.mxu0 0
      %1792 = vmatmul.mubr.bf16.gmra.mrb[0].mxu0 %v1735
      %v1793 = vpop.f32.mrb[0].mxu0
      %v1794 = vadd.f32 0.0, %v1793
      %v1795 = vpop.f32.mrb[0].mxu0
      %v1796 = vpop.f32.mrb[0].mxu0
      %v1797 = vadd.f32 0.0, %v1796
      %v1798 = vpop.f32.mrb[0].mxu0
      %1799 = vmatprep.mubr.bf16.mxu0 0
      %1800 = vmatmul.mubr.bf16.gmra.mrb[0].mxu0 %v1738
      %v1801 = vpop.f32.mrb[0].mxu0
      %v1802 = vadd.f32 0.0, %v1801
      %v1803 = vpop.f32.mrb[0].mxu0
      %v1804 = vpop.f32.mrb[0].mxu0
      %v1805 = vadd.f32 0.0, %v1804
      %v1806 = vpop.f32.mrb[0].mxu0
      %1807 = vdwg.mxu0
      %v1808 = vadd.f32 %v1708, %v1778
      %v1809 = vadd.f32 %v1709, %v1781
      %v1810 = vadd.f32 %v1710, %v1786
      %v1811 = vadd.f32 %v1711, %v1789
      %v1812 = vadd.f32 %v1712, %v1794
      %v1813 = vadd.f32 %v1713, %v1797
      %v1814 = vadd.f32 %v1714, %v1802
      %v1815 = vadd.f32 %v1715, %v1805
      %s1816 = scalar_lea.vmem %s3, 24
      %v1817 = vld [vmem:[%s1816] sm:$0xf]
      %v1819 = vunpack.c.l.b16 %v1031
      %v1820 = vpack.c.b16 %v1819, %v1514
      %v1822 = vsel %vm1062, %v1820, 0
      %v1825 = vsel %vm1075, %v1817, 0
      %1827 = vmatprep.subr.bf16.mxu0 0
      %1828 = vmatpush1.bf16.msra.mxu0 %v1825
      %1829 = vmatprep.subr.bf16.mxu0 0
      %1830 = vmatpush1.bf16.msra.mxu0 0
      %1831 = vmatprep.subr.bf16.mxu0 0
      %1832 = vmatpush1.bf16.msra.mxu0 0
      %1833 = vmatprep.subr.bf16.mxu0 0
      %1834 = vmatpush1.bf16.msra.mxu0 0
      %1835 = vmatprep.subr.bf16.mxu0 0
      %1836 = vmatpush1.bf16.msra.mxu0 0
      %1837 = vmatprep.subr.bf16.mxu0 0
      %1838 = vmatpush1.bf16.msra.mxu0 0
      %1839 = vmatprep.subr.bf16.mxu0 0
      %1840 = vmatpush1.bf16.msra.mxu0 0
      %1841 = vmatprep.subr.bf16.mxu0 0
      %1842 = vmatpush1.bf16.msra.mxu0 0
      %1843 = vmatprep.subr.bf16.mxu0 0
      %1844 = vmatpush1.bf16.msra.mxu0 0
      %1845 = vmatprep.subr.bf16.mxu0 0
      %1846 = vmatpush1.bf16.msra.mxu0 0
      %1847 = vmatprep.subr.bf16.mxu0 0
      %1848 = vmatpush1.bf16.msra.mxu0 0
      %1849 = vmatprep.subr.bf16.mxu0 0
      %1850 = vmatpush1.bf16.msra.mxu0 0
      %1851 = vmatprep.subr.bf16.mxu0 0
      %1852 = vmatpush1.bf16.msra.mxu0 0
      %1853 = vmatprep.subr.bf16.mxu0 0
      %1854 = vmatpush1.bf16.msra.mxu0 0
      %1855 = vmatprep.subr.bf16.mxu0 0
      %1856 = vmatpush1.bf16.msra.mxu0 0
      %1857 = vmatprep.subr.bf16.mxu0 0
      %1858 = vmatpush1.bf16.msra.mxu0 0
      %1859 = vmatprep.mubr.bf16.mxu0 0
      %1860 = vmatmul.mubr.bf16.gmra.mrb[0].mxu0 %v1067
      %v1861 = vpop.f32.mrb[0].mxu0
      %v1862 = vadd.f32 0.0, %v1861
      %v1863 = vpop.f32.mrb[0].mxu0
      %v1864 = vpop.f32.mrb[0].mxu0
      %v1865 = vadd.f32 0.0, %v1864
      %v1866 = vpop.f32.mrb[0].mxu0
      %1867 = vmatprep.mubr.bf16.mxu0 0
      %1868 = vmatmul.mubr.bf16.gmra.mrb[0].mxu0 %v1070
      %v1869 = vpop.f32.mrb[0].mxu0
      %v1870 = vadd.f32 0.0, %v1869
      %v1871 = vpop.f32.mrb[0].mxu0
      %v1872 = vpop.f32.mrb[0].mxu0
      %v1873 = vadd.f32 0.0, %v1872
      %v1874 = vpop.f32.mrb[0].mxu0
      %1875 = vmatprep.mubr.bf16.mxu0 0
      %1876 = vmatmul.mubr.bf16.gmra.mrb[0].mxu0 %v1073
      %v1877 = vpop.f32.mrb[0].mxu0
      %v1878 = vadd.f32 0.0, %v1877
      %v1879 = vpop.f32.mrb[0].mxu0
      %v1880 = vpop.f32.mrb[0].mxu0
      %v1881 = vadd.f32 0.0, %v1880
      %v1882 = vpop.f32.mrb[0].mxu0
      %1883 = vmatprep.mubr.bf16.mxu0 0
      %1884 = vmatmul.mubr.bf16.gmra.mrb[0].mxu0 %v1822
      %v1885 = vpop.f32.mrb[0].mxu0
      %v1886 = vadd.f32 0.0, %v1885
      %v1887 = vpop.f32.mrb[0].mxu0
      %v1888 = vpop.f32.mrb[0].mxu0
      %v1889 = vadd.f32 0.0, %v1888
      %v1890 = vpop.f32.mrb[0].mxu0
      %1891 = vdwg.mxu0
      %v1892 = vadd.f32 %v1808, %v1862
      %v1893 = vadd.f32 %v1809, %v1865
      %v1894 = vadd.f32 %v1810, %v1870
      %v1895 = vadd.f32 %v1811, %v1873
      %v1896 = vadd.f32 %v1812, %v1878
      %v1897 = vadd.f32 %v1813, %v1881
      %v1898 = vadd.f32 %v1814, %v1886
      %v1899 = vadd.f32 %v1815, %v1889
      %v1901 = vshrl.u32 %v1031, 16
      %v1903 = vrot.slane %v1901, 4
      %v1904 = vshll.u32 %v1031, 16
      %v1906 = vrot.slane %v1904, 5
      %v1907 = vor.u32 %v1903, %v1906
      %v1908 = vrot.slane %v1907, 4
      %v1910 = vshll.u32 %v1032, 16
      %v1912 = vrot.slane %v1910, 5
      %v1913 = vsel %vm368, %v1908, %v1912
      %s1914 = scalar_lea.vmem %s3, 28
      %v1915 = vld [vmem:[%s1914] sm:$0xf]
      %v1916 = vunpack.c.l.b16 %v1913
      %v1917 = vpack.c.b16 %v1916, %v1623
      %v1919 = vsel %vm1062, %v1917, 0
      %v1922 = vsel %vm1075, %v1915, 0
      %1924 = vmatprep.subr.bf16.mxu0 0
      %1925 = vmatpush1.bf16.msra.mxu0 %v1922
      %1926 = vmatprep.subr.bf16.mxu0 0
      %1927 = vmatpush1.bf16.msra.mxu0 0
      %1928 = vmatprep.subr.bf16.mxu0 0
      %1929 = vmatpush1.bf16.msra.mxu0 0
      %1930 = vmatprep.subr.bf16.mxu0 0
      %1931 = vmatpush1.bf16.msra.mxu0 0
      %1932 = vmatprep.subr.bf16.mxu0 0
      %1933 = vmatpush1.bf16.msra.mxu0 0
      %1934 = vmatprep.subr.bf16.mxu0 0
      %1935 = vmatpush1.bf16.msra.mxu0 0
      %1936 = vmatprep.subr.bf16.mxu0 0
      %1937 = vmatpush1.bf16.msra.mxu0 0
      %1938 = vmatprep.subr.bf16.mxu0 0
      %1939 = vmatpush1.bf16.msra.mxu0 0
      %1940 = vmatprep.subr.bf16.mxu0 0
      %1941 = vmatpush1.bf16.msra.mxu0 0
      %1942 = vmatprep.subr.bf16.mxu0 0
      %1943 = vmatpush1.bf16.msra.mxu0 0
      %1944 = vmatprep.subr.bf16.mxu0 0
      %1945 = vmatpush1.bf16.msra.mxu0 0
      %1946 = vmatprep.subr.bf16.mxu0 0
      %1947 = vmatpush1.bf16.msra.mxu0 0
      %1948 = vmatprep.subr.bf16.mxu0 0
      %1949 = vmatpush1.bf16.msra.mxu0 0
      %1950 = vmatprep.subr.bf16.mxu0 0
      %1951 = vmatpush1.bf16.msra.mxu0 0
      %1952 = vmatprep.subr.bf16.mxu0 0
      %1953 = vmatpush1.bf16.msra.mxu0 0
      %1954 = vmatprep.subr.bf16.mxu0 0
      %1955 = vmatpush1.bf16.msra.mxu0 0
      %1956 = vmatprep.mubr.bf16.mxu0 0
      %1957 = vmatmul.mubr.bf16.gmra.mrb[0].mxu0 %v1282
      %v1958 = vpop.f32.mrb[0].mxu0
      %v1959 = vadd.f32 0.0, %v1958
      %v1960 = vpop.f32.mrb[0].mxu0
      %v1961 = vpop.f32.mrb[0].mxu0
      %v1962 = vadd.f32 0.0, %v1961
      %v1963 = vpop.f32.mrb[0].mxu0
      %1964 = vmatprep.mubr.bf16.mxu0 0
      %1965 = vmatmul.mubr.bf16.gmra.mrb[0].mxu0 %v1285
      %v1966 = vpop.f32.mrb[0].mxu0
      %v1967 = vadd.f32 0.0, %v1966
      %v1968 = vpop.f32.mrb[0].mxu0
      %v1969 = vpop.f32.mrb[0].mxu0
      %v1970 = vadd.f32 0.0, %v1969
      %v1971 = vpop.f32.mrb[0].mxu0
      %1972 = vmatprep.mubr.bf16.mxu0 0
      %1973 = vmatmul.mubr.bf16.gmra.mrb[0].mxu0 %v1288
      %v1974 = vpop.f32.mrb[0].mxu0
      %v1975 = vadd.f32 0.0, %v1974
      %v1976 = vpop.f32.mrb[0].mxu0
      %v1977 = vpop.f32.mrb[0].mxu0
      %v1978 = vadd.f32 0.0, %v1977
      %v1979 = vpop.f32.mrb[0].mxu0
      %1980 = vmatprep.mubr.bf16.mxu0 0
      %1981 = vmatmul.mubr.bf16.gmra.mrb[0].mxu0 %v1919
      %v1982 = vpop.f32.mrb[0].mxu0
      %v1983 = vadd.f32 0.0, %v1982
      %v1984 = vpop.f32.mrb[0].mxu0
      %v1985 = vpop.f32.mrb[0].mxu0
      %v1986 = vadd.f32 0.0, %v1985
      %v1987 = vpop.f32.mrb[0].mxu0
      %1988 = vdwg.mxu0
      %v1989 = vadd.f32 %v1892, %v1959
      %v1990 = vadd.f32 %v1893, %v1962
      %v1991 = vadd.f32 %v1894, %v1967
      %v1992 = vadd.f32 %v1895, %v1970
      %v1993 = vadd.f32 %v1896, %v1975
      %v1994 = vadd.f32 %v1897, %v1978
      %v1995 = vadd.f32 %v1898, %v1983
      %v1996 = vadd.f32 %v1899, %v1986
      %v1998 = vrot.slane %v1031, 5
      %v1999 = vrot.slane %v1998, 4
      %v2000 = vrot.slane %v1032, 5
      %v2001 = vsel %vm1376, %v1999, %v2000
      %s2002 = scalar_lea.vmem %s3, 32
      %v2003 = vld [vmem:[%s2002] sm:$0xf]
      %v2004 = vunpack.c.l.b16 %v2001
      %v2005 = vpack.c.b16 %v2004, %v1723
      %v2007 = vsel %vm1062, %v2005, 0
      %v2010 = vsel %vm1075, %v2003, 0
      %2012 = vmatprep.subr.bf16.mxu0 0
      %2013 = vmatpush1.bf16.msra.mxu0 %v2010
      %2014 = vmatprep.subr.bf16.mxu0 0
      %2015 = vmatpush1.bf16.msra.mxu0 0
      %2016 = vmatprep.subr.bf16.mxu0 0
      %2017 = vmatpush1.bf16.msra.mxu0 0
      %2018 = vmatprep.subr.bf16.mxu0 0
      %2019 = vmatpush1.bf16.msra.mxu0 0
      %2020 = vmatprep.subr.bf16.mxu0 0
      %2021 = vmatpush1.bf16.msra.mxu0 0
      %2022 = vmatprep.subr.bf16.mxu0 0
      %2023 = vmatpush1.bf16.msra.mxu0 0
      %2024 = vmatprep.subr.bf16.mxu0 0
      %2025 = vmatpush1.bf16.msra.mxu0 0
      %2026 = vmatprep.subr.bf16.mxu0 0
      %2027 = vmatpush1.bf16.msra.mxu0 0
      %2028 = vmatprep.subr.bf16.mxu0 0
      %2029 = vmatpush1.bf16.msra.mxu0 0
      %2030 = vmatprep.subr.bf16.mxu0 0
      %2031 = vmatpush1.bf16.msra.mxu0 0
      %2032 = vmatprep.subr.bf16.mxu0 0
      %2033 = vmatpush1.bf16.msra.mxu0 0
      %2034 = vmatprep.subr.bf16.mxu0 0
      %2035 = vmatpush1.bf16.msra.mxu0 0
      %2036 = vmatprep.subr.bf16.mxu0 0
      %2037 = vmatpush1.bf16.msra.mxu0 0
      %2038 = vmatprep.subr.bf16.mxu0 0
      %2039 = vmatpush1.bf16.msra.mxu0 0
      %2040 = vmatprep.subr.bf16.mxu0 0
      %2041 = vmatpush1.bf16.msra.mxu0 0
      %2042 = vmatprep.subr.bf16.mxu0 0
      %2043 = vmatpush1.bf16.msra.mxu0 0
      %2044 = vmatprep.mubr.bf16.mxu0 0
      %2045 = vmatmul.mubr.bf16.gmra.mrb[0].mxu0 %v1427
      %v2046 = vpop.f32.mrb[0].mxu0
      %v2047 = vadd.f32 0.0, %v2046
      %v2048 = vpop.f32.mrb[0].mxu0
      %v2049 = vpop.f32.mrb[0].mxu0
      %v2050 = vadd.f32 0.0, %v2049
      %v2051 = vpop.f32.mrb[0].mxu0
      %2052 = vmatprep.mubr.bf16.mxu0 0
      %2053 = vmatmul.mubr.bf16.gmra.mrb[0].mxu0 %v1430
      %v2054 = vpop.f32.mrb[0].mxu0
      %v2055 = vadd.f32 0.0, %v2054
      %v2056 = vpop.f32.mrb[0].mxu0
      %v2057 = vpop.f32.mrb[0].mxu0
      %v2058 = vadd.f32 0.0, %v2057
      %v2059 = vpop.f32.mrb[0].mxu0
      %2060 = vmatprep.mubr.bf16.mxu0 0
      %2061 = vmatmul.mubr.bf16.gmra.mrb[0].mxu0 %v1433
      %v2062 = vpop.f32.mrb[0].mxu0
      %v2063 = vadd.f32 0.0, %v2062
      %v2064 = vpop.f32.mrb[0].mxu0
      %v2065 = vpop.f32.mrb[0].mxu0
      %v2066 = vadd.f32 0.0, %v2065
      %v2067 = vpop.f32.mrb[0].mxu0
      %2068 = vmatprep.mubr.bf16.mxu0 0
      %2069 = vmatmul.mubr.bf16.gmra.mrb[0].mxu0 %v2007
      %v2070 = vpop.f32.mrb[0].mxu0
      %v2071 = vadd.f32 0.0, %v2070
      %v2072 = vpop.f32.mrb[0].mxu0
      %v2073 = vpop.f32.mrb[0].mxu0
      %v2074 = vadd.f32 0.0, %v2073
      %v2075 = vpop.f32.mrb[0].mxu0
      %2076 = vdwg.mxu0
      %v2077 = vadd.f32 %v1989, %v2047
      %v2078 = vadd.f32 %v1990, %v2050
      %v2079 = vadd.f32 %v1991, %v2055
      %v2080 = vadd.f32 %v1992, %v2058
      %v2081 = vadd.f32 %v1993, %v2063
      %v2082 = vadd.f32 %v1994, %v2066
      %v2083 = vadd.f32 %v1995, %v2071
      %v2084 = vadd.f32 %v1996, %v2074
      %v2085 = vadd.f32 %v2077, %v816
      %v2086 = vadd.f32 %v2078, %v817
      %v2087 = vadd.f32 %v2079, %v818
      %v2088 = vadd.f32 %v2080, %v819
      %v2089 = vadd.f32 %v2081, %v820
      %v2090 = vadd.f32 %v2082, %v821
      %v2091 = vadd.f32 %v2083, %v822
      %v2092 = vadd.f32 %v2084, %v823
      %vm2093 = vcmp.ge.f32.partialorder %v2085, 0.0
      %vm2094 = vcmp.ge.f32.partialorder %v2086, 0.0
      %vm2095 = vcmp.ge.f32.partialorder %v2087, 0.0
      %vm2096 = vcmp.ge.f32.partialorder %v2088, 0.0
      %vm2097 = vcmp.ge.f32.partialorder %v2089, 0.0
      %vm2098 = vcmp.ge.f32.partialorder %v2090, 0.0
      %vm2099 = vcmp.ge.f32.partialorder %v2091, 0.0
      %vm2100 = vcmp.ge.f32.partialorder %v2092, 0.0
      %v2101 = vmul.f32 %v2085, 0.2
      %v2102 = vmul.f32 %v2086, 0.2
      %v2103 = vmul.f32 %v2087, 0.2
      %v2104 = vmul.f32 %v2088, 0.2
      %v2105 = vmul.f32 %v2089, 0.2
      %v2106 = vmul.f32 %v2090, 0.2
      %v2107 = vmul.f32 %v2091, 0.2
      %v2108 = vmul.f32 %v2092, 0.2
      %v2109 = vsel %vm2093, %v2085, %v2101
      %v2110 = vsel %vm2094, %v2086, %v2102
      %v2111 = vsel %vm2095, %v2087, %v2103
      %v2112 = vsel %vm2096, %v2088, %v2104
      %v2113 = vsel %vm2097, %v2089, %v2105
      %v2114 = vsel %vm2098, %v2090, %v2106
      %v2115 = vsel %vm2099, %v2091, %v2107
      %v2116 = vsel %vm2100, %v2092, %v2108
      %v2117 = vpack.c.bf16 %v2109, %v2109
      %v2118 = vpack.c.bf16 %v2110, %v2110
      %v2119 = vpack.c.bf16 %v2111, %v2111
      %v2120 = vpack.c.bf16 %v2112, %v2112
      %v2121 = vpack.c.bf16 %v2113, %v2113
      %v2122 = vpack.c.bf16 %v2114, %v2114
      %v2123 = vpack.c.bf16 %v2115, %v2115
      %v2124 = vpack.c.bf16 %v2116, %v2116
      %2125 = vst.msk [vmem:[%s224] sm:$0xf] %vm824, %v2117
      %2126 = vst.msk [vmem:[%s224 + $0x4] sm:$0xf] %vm824, %v2118
      %2127 = vst.msk [vmem:[%s224 + $0x8] sm:$0xf] %vm824, %v2119
      %2128 = vst.msk [vmem:[%s224 + $0xc] sm:$0xf] %vm824, %v2120
      %2129 = vst.msk [vmem:[%s224 + $0x10] sm:$0xf] %vm824, %v2121
      %2130 = vst.msk [vmem:[%s224 + $0x14] sm:$0xf] %vm824, %v2122
      %2131 = vst.msk [vmem:[%s224 + $0x18] sm:$0xf] %vm824, %v2123
      %2132 = vst.msk [vmem:[%s224 + $0x1c] sm:$0xf] %vm824, %v2124
      %p2133 = scmp.lt.s32.totalorder %s16, 1
      %s2134 = scalar_select %p2133, %s16, 1
      %s2135 = smul.addr %s2134, 8
      %s2136 = smul.addr %s2135, 4
      %s2137 = scalar_lea.vmem %s5, %s2136
      // Predicated region
      $region41: #{conv_downsample_forward.2} parent=39 // pred_check
        %p2138 = pneg %p144
      $region42: #{conv_downsample_forward.2} parent=39 // pred_check_branch
        %2140 = sbr.rel (%p2138) target = $region44
      $region43: #{conv_downsample_forward.2} parent=39 // pred_region
        _
      $region44: #{conv_downsample_forward.2} parent=39 // pred_fallthru
        _
    $region40: #{conv_downsample_forward.2} parent=5 // pred_fallthru
      _
    %p2141 = scmp.le.s32.totalorder 2, %s11
    // Predicated region
    $region45: #{conv_downsample_forward.2} parent=5 // pred_check
      %p2142 = pneg %p2141
    $region46: #{conv_downsample_forward.2} parent=5 // pred_check_branch
      %2144 = sbr.rel (%p2142) target = $region48
    $region47: #{conv_downsample_forward.2} parent=5 // pred_region
      %s2145 = ssub.s32 %s11, 2
      // Predicated region
      $region49: #{conv_downsample_forward.2} parent=47 // pred_check
        %p2146 = pneg %p150
      $region50: #{conv_downsample_forward.2} parent=47 // pred_check_branch
        %2148 = sbr.rel (%p2146) target = $region52
      $region51: #{conv_downsample_forward.2} parent=47 // pred_region
        %p2149 = scmp.lt.s32.totalorder %s17, 1
        %s2150 = scalar_select %p2149, %s17, 1
        %s2151 = smul.addr %s2150, 8
        %s2152 = smul.addr %s2151, 4
        %s2153 = scalar_lea.vmem %s5, %s2152
      $region52: #{conv_downsample_forward.2} parent=47 // pred_fallthru
        _
    $region48: #{conv_downsample_forward.2} parent=5 // pred_fallthru
      _
  $region6: #{conv_downsample_forward.2} parent=0 // loop_footer
    %s15 = sadd.s32 1, %s11
  $region7: #{conv_downsample_forward.2} parent=0 // loop_footer_branch
    %10 = sbr.rel target = $region3
  $region8: #{conv_downsample_forward.2} parent=0 // loop_exit
    _

</llo_original>
